<compile_context>
chip_gen: v5e
topology: v5e:2x2
jax: 0.10.0
libtpu: 0.0.40
codegen_flags: <defaults>
</compile_context>

<pallas_src>
import functools

import jax
import jax.numpy as jnp
from jax import lax
from jax.experimental import pallas as pl
from jax.experimental.pallas import tpu as pltpu


def _gru_step_kernel(h_ref, x_ref, whzr_ref, wxzrq_ref, whq_ref,
                     bzr_ref, bq_ref, out_ref, *, minor_conv):
    """One GRU update with a 5-tap conv along one spatial axis.

    Block shapes:
      h_ref  : (1, S0, S1, Ch)      x_ref : (1, S0, S1, Cx)
      whzr   : (5, Ch, 2*Ch)        wxzrq : (5, Cx, 3*Ch)      whq : (5, Ch, Ch)
      bzr    : (1, 2*Ch)            bq    : (1, Ch)
      out    : (1, S0, S1, Ch)

    minor_conv=True  -> conv along S1 (the (1,5) conv; needs boundary mask)
    minor_conv=False -> conv along S0 (the (5,1) conv; whole-row shifts)
    """
    _, S0, S1, Ch = h_ref.shape
    Cx = x_ref.shape[-1]
    P = S0 * S1
    stride = 1 if minor_conv else S1      # flat-index shift per conv tap
    pad = 2 * stride                      # 2 taps of zero padding each side
    cdt = whzr_ref.dtype                  # MXU compute dtype (bf16 by default)

    # Flatten spatial dims once: big-M matmuls, no per-tap rank-3 contractions.
    h_f32 = h_ref[0].reshape(P, Ch).astype(jnp.float32)
    h_c = h_f32.astype(cdt)
    x_c = x_ref[0].reshape(P, Cx).astype(cdt)

    # Boundary masks (only needed when shifting along the minor spatial axis,
    # where a flat shift can leak across row boundaries).  Computed once.
    if minor_conv:
        col = lax.broadcasted_iota(jnp.int32, (S0, S1, 1), 1).reshape(P, 1)
        masks = []
        for k in range(5):
            d = k - 2
            if d == 0:
                masks.append(None)
            else:
                valid = jnp.logical_and(col + d >= 0, col + d < S1)
                masks.append(valid.astype(cdt))
    else:
        masks = [None] * 5

    def conv5(flat, w_ref):
        # flat: (P, Cin) in compute dtype;  w_ref: (5, Cin, Cout)
        Cin = flat.shape[-1]
        zeros = jnp.zeros((pad, Cin), flat.dtype)
        padded = jnp.concatenate([zeros, flat, zeros], axis=0)   # (P + 2*pad, Cin)
        acc = None
        for k in range(5):                                       # static unroll
            slab = padded[k * stride:k * stride + P, :]          # (P, Cin)
            if masks[k] is not None:
                slab = slab * masks[k]                           # zero row-crossings
            part = jnp.dot(slab, w_ref[k], preferred_element_type=jnp.float32)
            acc = part if acc is None else acc + part
        return acc                                               # (P, Cout) f32

    # Fused gate matmuls.
    x_zrq = conv5(x_c, wxzrq_ref)                                # (P, 3*Ch)
    zr = jax.nn.sigmoid(conv5(h_c, whzr_ref)
                        + x_zrq[:, :2 * Ch] + bzr_ref[...])      # (P, 2*Ch)
    z = zr[:, :Ch]
    r = zr[:, Ch:]
    rh_c = (r * h_f32).astype(cdt)
    q = jnp.tanh(conv5(rh_c, whq_ref) + x_zrq[:, 2 * Ch:] + bq_ref[...])

    h_new = h_f32 + z * (q - h_f32)        # == (1-z)*h + z*q, one fewer multiply
    out_ref[0] = h_new.reshape(S0, S1, Ch).astype(out_ref.dtype)


def _choose_tile(dim, other_dim, ch, cx, budget_bytes=24 * 1024 * 1024):
    """Largest tile (multiple of 8 dividing `dim`, else the full dim) whose
    rough per-block working set fits the VMEM budget (conservative so blocks
    also fit v7x's 64 MiB physical VMEM with double-buffering headroom)."""
    per_row = 4 * other_dim * (14 * ch + 6 * cx)   # ~bytes of live VMEM per row
    cands = [t for t in range(8, dim + 1, 8) if dim % t == 0] or [dim]
    fitting = [t for t in cands if t * per_row <= budget_bytes]
    return max(fitting) if fitting else cands[0]


def _sep_gru_step(h, x, whzr, wxzrq, whq, bzr, bq, *, conv_axis, tile):
    """h: (N,H,W,Ch)  x: (N,H,W,Cx).  conv_axis: 'minor' (1x5) or 'major' (5x1)."""
    N, H, W, Ch = h.shape
    Cx = x.shape[-1]
    minor = (conv_axis == 'minor')

    if minor:
        if H % tile:
            raise ValueError(f"tile {tile} must divide H={H}")
        grid = (N, H // tile)

        def act_spec(c):
            return pl.BlockSpec((1, tile, W, c), lambda n, t: (n, t, 0, 0))
    else:
        if W % tile:
            raise ValueError(f"tile {tile} must divide W={W}")
        grid = (N, W // tile)

        def act_spec(c):
            return pl.BlockSpec((1, H, tile, c), lambda n, t: (n, 0, t, 0))

    def full_spec(arr):
        nd = arr.ndim
        return pl.BlockSpec(arr.shape, lambda n, t, _nd=nd: (0,) * _nd)

    kernel = functools.partial(_gru_step_kernel, minor_conv=minor)

    return pl.pallas_call(
        kernel,
        out_shape=jax.ShapeDtypeStruct((N, H, W, Ch), h.dtype),
        grid_spec=pltpu.PrefetchScalarGridSpec(
            num_scalar_prefetch=0,
            grid=grid,
            in_specs=[act_spec(Ch), act_spec(Cx),
                      full_spec(whzr), full_spec(wxzrq), full_spec(whq),
                      full_spec(bzr), full_spec(bq)],
            out_specs=act_spec(Ch),
        ),
        compiler_params=pltpu.CompilerParams(
            dimension_semantics=("parallel", "parallel"),
            vmem_limit_bytes=48 * 1024 * 1024),
    )(h, x, whzr, wxzrq, whq, bzr, bq)


def sepconv_gru_forward(h_nchw, x_nchw, p, *, compute_dtype=jnp.bfloat16,
                        tile1=None, tile2=None):
    """Full SepConvGRU forward.  h_nchw: (N,Ch,H,W), x_nchw: (N,Cx,H,W)."""
    h = jnp.transpose(h_nchw, (0, 2, 3, 1))   # -> NHWC (C on lanes)
    x = jnp.transpose(x_nchw, (0, 2, 3, 1))
    N, H, W, Ch = h.shape
    Cx = x.shape[-1]

    def prep(wz, wr, wq, bz, br, bq, tap_axis):
        # Torch OIHW weights -> per-tap (5, Cin, Cout), split h/x, fuse gates.
        def taps(w):
            t = w[:, :, 0, :] if tap_axis == 3 else w[:, :, :, 0]   # (Co, Ci, 5)
            return jnp.transpose(t, (2, 1, 0))                      # (5, Ci, Co)
        tz, tr, tq = taps(wz), taps(wr), taps(wq)
        whzr = jnp.concatenate([tz[:, :Ch, :], tr[:, :Ch, :]],
                               axis=-1).astype(compute_dtype)       # (5, Ch, 2Ch)
        wxzrq = jnp.concatenate([tz[:, Ch:, :], tr[:, Ch:, :], tq[:, Ch:, :]],
                                axis=-1).astype(compute_dtype)      # (5, Cx, 3Ch)
        whq = tq[:, :Ch, :].astype(compute_dtype)                   # (5, Ch, Ch)
        bzr = jnp.concatenate([bz, br]).reshape(1, 2 * Ch).astype(jnp.float32)
        bq2 = bq.reshape(1, Ch).astype(jnp.float32)
        return whzr, wxzrq, whq, bzr, bq2

    w1 = prep(p['convz1_w'], p['convr1_w'], p['convq1_w'],
              p['convz1_b'], p['convr1_b'], p['convq1_b'], tap_axis=3)
    w2 = prep(p['convz2_w'], p['convr2_w'], p['convq2_w'],
              p['convz2_b'], p['convr2_b'], p['convq2_b'], tap_axis=2)

    t1 = tile1 if tile1 is not None else _choose_tile(H, W, Ch, Cx)
    t2 = tile2 if tile2 is not None else _choose_tile(W, H, Ch, Cx)

    # Stage 1: (1,5) conv along W (minor axis), tiled over H.
    h = _sep_gru_step(h, x, *w1, conv_axis='minor', tile=t1)
    # Stage 2: (5,1) conv along H (major axis), tiled over W.  No transposes.
    h = _sep_gru_step(h, x, *w2, conv_axis='major', tile=t2)

    return jnp.transpose(h, (0, 3, 1, 2))     # back to NCHW


# ---------------- pure-JAX reference (mirrors the PyTorch module) ------------
def reference_forward(h, x, p, compute_dtype=jnp.float32):
    def conv(inp, w, b, padding):
        out = lax.conv_general_dilated(
            inp.astype(compute_dtype), w.astype(compute_dtype), (1, 1), padding,
            dimension_numbers=('NCHW', 'OIHW', 'NCHW'),
            preferred_element_type=jnp.float32,
            precision=lax.Precision.HIGHEST)
        return out + b[None, :, None, None]

    pad_h = [(0, 0), (2, 2)]   # (1,5) conv: pad W
    pad_v = [(2, 2), (0, 0)]   # (5,1) conv: pad H
    hx = jnp.concatenate([h, x], axis=1)
    z = jax.nn.sigmoid(conv(hx, p['convz1_w'], p['convz1_b'], pad_h))
    r = jax.nn.sigmoid(conv(hx, p['convr1_w'], p['convr1_b'], pad_h))
    q = jnp.tanh(conv(jnp.concatenate([r * h, x], axis=1),
                      p['convq1_w'], p['convq1_b'], pad_h))
    h = (1 - z) * h + z * q
    hx = jnp.concatenate([h, x], axis=1)
    z = jax.nn.sigmoid(conv(hx, p['convz2_w'], p['convz2_b'], pad_v))
    r = jax.nn.sigmoid(conv(hx, p['convr2_w'], p['convr2_b'], pad_v))
    q = jnp.tanh(conv(jnp.concatenate([r * h, x], axis=1),
                      p['convq2_w'], p['convq2_b'], pad_v))
    h = (1 - z) * h + z * q
    return h


if __name__ == "__main__":
    # Small shapes consistent with the module (hidden/input dims scaled down).
    N, H, W = 2, 16, 16
    hidden_dim, input_dim = 32, 48
    C = hidden_dim + input_dim

    key = jax.random.PRNGKey(0)
    keys = jax.random.split(key, 14)

    def init(k, shape, scale=0.1):
        return scale * jax.random.normal(k, shape, jnp.float32)

    params = {
        'convz1_w': init(keys[0], (hidden_dim, C, 1, 5)),
        'convz1_b': init(keys[1], (hidden_dim,)),
        'convr1_w': init(keys[2], (hidden_dim, C, 1, 5)),
        'convr1_b': init(keys[3], (hidden_dim,)),
        'convq1_w': init(keys[4], (hidden_dim, C, 1, 5)),
        'convq1_b': init(keys[5], (hidden_dim,)),
        'convz2_w': init(keys[6], (hidden_dim, C, 5, 1)),
        'convz2_b': init(keys[7], (hidden_dim,)),
        'convr2_w': init(keys[8], (hidden_dim, C, 5, 1)),
        'convr2_b': init(keys[9], (hidden_dim,)),
        'convq2_w': init(keys[10], (hidden_dim, C, 5, 1)),
        'convq2_b': init(keys[11], (hidden_dim,)),
    }

    h0 = jax.random.normal(keys[12], (N, hidden_dim, H, W), jnp.float32)
    x0 = jax.random.normal(keys[13], (N, input_dim, H, W), jnp.float32)

    # 1) f32 compute path (exact module semantics), multi-tile grid exercised.
    out_f32 = jax.block_until_ready(
        sepconv_gru_forward(h0, x0, params, compute_dtype=jnp.float32,
                            tile1=8, tile2=8))
    ref_f32 = jax.block_until_ready(
        reference_forward(h0, x0, params, jnp.float32))
    assert out_f32.shape == (N, hidden_dim, H, W), out_f32.shape
    if not jnp.allclose(out_f32, ref_f32, atol=1e-3, rtol=1e-3):
        err = float(jnp.max(jnp.abs(out_f32 - ref_f32)))
        raise AssertionError(f"f32 Pallas SepConvGRU mismatch, max err {err}")

    # 2) bf16-fed MXU path (perf default); reference casts conv operands the
    #    same way, so this checks indexing/padding/gating, not bf16 rounding.
    out_bf = jax.block_until_ready(sepconv_gru_forward(h0, x0, params))
    ref_bf = jax.block_until_ready(
        reference_forward(h0, x0, params, jnp.bfloat16))
    if not jnp.allclose(out_bf, ref_bf, atol=2e-2, rtol=2e-2):
        err = float(jnp.max(jnp.abs(out_bf - ref_bf)))
        raise AssertionError(f"bf16 Pallas SepConvGRU mismatch, max err {err}")

    print("KERNEL_OK")
</pallas_src>

<mosaic_0001>
module attributes {stable_mosaic.version = 11 : i64} {
  func.func @_gru_step_kernel(%arg0: i32, %arg1: i32, %arg2: memref<1x8x16x32xf32, #tpu.memory_space<vmem>>, %arg3: memref<1x8x16x48xf32, #tpu.memory_space<vmem>>, %arg4: memref<5x32x64xf32, #tpu.memory_space<vmem>>, %arg5: memref<5x48x96xf32, #tpu.memory_space<vmem>>, %arg6: memref<5x32x32xf32, #tpu.memory_space<vmem>>, %arg7: memref<1x64xf32, #tpu.memory_space<vmem>>, %arg8: memref<1x32xf32, #tpu.memory_space<vmem>>, %arg9: memref<1x8x16x32xf32, #tpu.memory_space<vmem>>) attributes {dimension_semantics = [#tpu.dimension_semantics<parallel>, #tpu.dimension_semantics<parallel>], iteration_bounds = array<i64: 2, 2>, scalar_prefetch = 0 : i64, scratch_operands = 0 : i64, tpu.core_type = #tpu.core_type<tc>, window_params = [{transform_indices = @transform_0, window_bounds = array<i64: 1, 8, 16, 32>}, {transform_indices = @transform_1, window_bounds = array<i64: 1, 8, 16, 48>}, {pipeline_mode = #tpu.pipeline_mode<synchronous>, transform_indices = @transform_2, window_bounds = array<i64: 5, 32, 64>}, {pipeline_mode = #tpu.pipeline_mode<synchronous>, transform_indices = @transform_3, window_bounds = array<i64: 5, 48, 96>}, {pipeline_mode = #tpu.pipeline_mode<synchronous>, transform_indices = @transform_4, window_bounds = array<i64: 5, 32, 32>}, {pipeline_mode = #tpu.pipeline_mode<synchronous>, transform_indices = @transform_5, window_bounds = array<i64: 1, 64>}, {pipeline_mode = #tpu.pipeline_mode<synchronous>, transform_indices = @transform_6, window_bounds = array<i64: 1, 32>}, {transform_indices = @transform_7, window_bounds = array<i64: 1, 8, 16, 32>}]} {
    %c0 = arith.constant 0 : index
    %c0_0 = arith.constant 0 : index
    %c0_1 = arith.constant 0 : index
    %c0_2 = arith.constant 0 : index
    %0 = vector.load %arg2[%c0, %c0_0, %c0_1, %c0_2] : memref<1x8x16x32xf32, #tpu.memory_space<vmem>>, vector<1x8x16x32xf32>
    %1 = vector.shape_cast %0 : vector<1x8x16x32xf32> to vector<8x16x32xf32>
    %2 = vector.shape_cast %1 : vector<8x16x32xf32> to vector<128x32xf32>
    %c0_3 = arith.constant 0 : index
    %c0_4 = arith.constant 0 : index
    %c0_5 = arith.constant 0 : index
    %c0_6 = arith.constant 0 : index
    %3 = vector.load %arg3[%c0_3, %c0_4, %c0_5, %c0_6] : memref<1x8x16x48xf32, #tpu.memory_space<vmem>>, vector<1x8x16x48xf32>
    %4 = vector.shape_cast %3 : vector<1x8x16x48xf32> to vector<8x16x48xf32>
    %5 = vector.shape_cast %4 : vector<8x16x48xf32> to vector<128x48xf32>
    %6 = tpu.iota {dimensions = array<i32: 1>} : vector<8x16x1xi32>
    %7 = vector.shape_cast %6 : vector<8x16x1xi32> to vector<128x1xi32>
    %c-2_i32 = arith.constant -2 : i32
    %8 = vector.broadcast %c-2_i32 : i32 to vector<128x1xi32>
    %9 = arith.addi %7, %8 : vector<128x1xi32>
    %c0_i32 = arith.constant 0 : i32
    %10 = vector.broadcast %c0_i32 : i32 to vector<128x1xi32>
    %11 = arith.cmpi sge, %9, %10 : vector<128x1xi32>
    %c-2_i32_7 = arith.constant -2 : i32
    %12 = vector.broadcast %c-2_i32_7 : i32 to vector<128x1xi32>
    %13 = arith.addi %7, %12 : vector<128x1xi32>
    %c16_i32 = arith.constant 16 : i32
    %14 = vector.broadcast %c16_i32 : i32 to vector<128x1xi32>
    %15 = arith.cmpi slt, %13, %14 : vector<128x1xi32>
    %16 = arith.andi %11, %15 : vector<128x1xi1>
    %17 = arith.extui %16 : vector<128x1xi1> to vector<128x1xi32>
    %18 = arith.sitofp %17 : vector<128x1xi32> to vector<128x1xf32>
    %c-1_i32 = arith.constant -1 : i32
    %19 = vector.broadcast %c-1_i32 : i32 to vector<128x1xi32>
    %20 = arith.addi %7, %19 : vector<128x1xi32>
    %c0_i32_8 = arith.constant 0 : i32
    %21 = vector.broadcast %c0_i32_8 : i32 to vector<128x1xi32>
    %22 = arith.cmpi sge, %20, %21 : vector<128x1xi32>
    %c-1_i32_9 = arith.constant -1 : i32
    %23 = vector.broadcast %c-1_i32_9 : i32 to vector<128x1xi32>
    %24 = arith.addi %7, %23 : vector<128x1xi32>
    %c16_i32_10 = arith.constant 16 : i32
    %25 = vector.broadcast %c16_i32_10 : i32 to vector<128x1xi32>
    %26 = arith.cmpi slt, %24, %25 : vector<128x1xi32>
    %27 = arith.andi %22, %26 : vector<128x1xi1>
    %28 = arith.extui %27 : vector<128x1xi1> to vector<128x1xi32>
    %29 = arith.sitofp %28 : vector<128x1xi32> to vector<128x1xf32>
    %c1_i32 = arith.constant 1 : i32
    %30 = vector.broadcast %c1_i32 : i32 to vector<128x1xi32>
    %31 = arith.addi %7, %30 : vector<128x1xi32>
    %c0_i32_11 = arith.constant 0 : i32
    %32 = vector.broadcast %c0_i32_11 : i32 to vector<128x1xi32>
    %33 = arith.cmpi sge, %31, %32 : vector<128x1xi32>
    %c1_i32_12 = arith.constant 1 : i32
    %34 = vector.broadcast %c1_i32_12 : i32 to vector<128x1xi32>
    %35 = arith.addi %7, %34 : vector<128x1xi32>
    %c16_i32_13 = arith.constant 16 : i32
    %36 = vector.broadcast %c16_i32_13 : i32 to vector<128x1xi32>
    %37 = arith.cmpi slt, %35, %36 : vector<128x1xi32>
    %38 = arith.andi %33, %37 : vector<128x1xi1>
    %39 = arith.extui %38 : vector<128x1xi1> to vector<128x1xi32>
    %40 = arith.sitofp %39 : vector<128x1xi32> to vector<128x1xf32>
    %c2_i32 = arith.constant 2 : i32
    %41 = vector.broadcast %c2_i32 : i32 to vector<128x1xi32>
    %42 = arith.addi %7, %41 : vector<128x1xi32>
    %c0_i32_14 = arith.constant 0 : i32
    %43 = vector.broadcast %c0_i32_14 : i32 to vector<128x1xi32>
    %44 = arith.cmpi sge, %42, %43 : vector<128x1xi32>
    %c2_i32_15 = arith.constant 2 : i32
    %45 = vector.broadcast %c2_i32_15 : i32 to vector<128x1xi32>
    %46 = arith.addi %7, %45 : vector<128x1xi32>
    %c16_i32_16 = arith.constant 16 : i32
    %47 = vector.broadcast %c16_i32_16 : i32 to vector<128x1xi32>
    %48 = arith.cmpi slt, %46, %47 : vector<128x1xi32>
    %49 = arith.andi %44, %48 : vector<128x1xi1>
    %50 = arith.extui %49 : vector<128x1xi1> to vector<128x1xi32>
    %51 = arith.sitofp %50 : vector<128x1xi32> to vector<128x1xf32>
    %cst = arith.constant 0.000000e+00 : f32
    %52 = vector.broadcast %cst : f32 to vector<2x48xf32>
    %53 = tpu.concatenate %52, %5, %52 in 0 : vector<2x48xf32>, vector<128x48xf32>, vector<2x48xf32> -> vector<132x48xf32>
    %54 = vector.extract_strided_slice %53 {offsets = [0, 0], sizes = [128, 48], strides = [1, 1]} : vector<132x48xf32> to vector<128x48xf32>
    %55 = vector.broadcast %18 : vector<128x1xf32> to vector<128x48xf32>
    %56 = arith.mulf %54, %55 : vector<128x48xf32>
    %c0_17 = arith.constant 0 : index
    %c0_18 = arith.constant 0 : index
    %c0_19 = arith.constant 0 : index
    %57 = vector.load %arg5[%c0_17, %c0_18, %c0_19] : memref<5x48x96xf32, #tpu.memory_space<vmem>>, vector<1x48x96xf32>
    %58 = vector.shape_cast %57 : vector<1x48x96xf32> to vector<48x96xf32>
    %cst_20 = arith.constant dense<0.000000e+00> : vector<128x96xf32>
    %59 = tpu.matmul %56, %58, %cst_20 {dimension_numbers = #tpu.dot_dimension_numbers<[1], [0], [0], [1], [0, 0, 1, 1], [], []>} : vector<128x48xf32>, vector<48x96xf32>, vector<128x96xf32> -> vector<128x96xf32>
    %60 = vector.extract_strided_slice %53 {offsets = [1, 0], sizes = [128, 48], strides = [1, 1]} : vector<132x48xf32> to vector<128x48xf32>
    %61 = vector.broadcast %29 : vector<128x1xf32> to vector<128x48xf32>
    %62 = arith.mulf %60, %61 : vector<128x48xf32>
    %c1 = arith.constant 1 : index
    %c0_21 = arith.constant 0 : index
    %c0_22 = arith.constant 0 : index
    %63 = vector.load %arg5[%c1, %c0_21, %c0_22] : memref<5x48x96xf32, #tpu.memory_space<vmem>>, vector<1x48x96xf32>
    %64 = vector.shape_cast %63 : vector<1x48x96xf32> to vector<48x96xf32>
    %cst_23 = arith.constant dense<0.000000e+00> : vector<128x96xf32>
    %65 = tpu.matmul %62, %64, %cst_23 {dimension_numbers = #tpu.dot_dimension_numbers<[1], [0], [0], [1], [0, 0, 1, 1], [], []>} : vector<128x48xf32>, vector<48x96xf32>, vector<128x96xf32> -> vector<128x96xf32>
    %66 = arith.addf %59, %65 : vector<128x96xf32>
    %67 = vector.extract_strided_slice %53 {offsets = [2, 0], sizes = [128, 48], strides = [1, 1]} : vector<132x48xf32> to vector<128x48xf32>
    %c2 = arith.constant 2 : index
    %c0_24 = arith.constant 0 : index
    %c0_25 = arith.constant 0 : index
    %68 = vector.load %arg5[%c2, %c0_24, %c0_25] : memref<5x48x96xf32, #tpu.memory_space<vmem>>, vector<1x48x96xf32>
    %69 = vector.shape_cast %68 : vector<1x48x96xf32> to vector<48x96xf32>
    %cst_26 = arith.constant dense<0.000000e+00> : vector<128x96xf32>
    %70 = tpu.matmul %67, %69, %cst_26 {dimension_numbers = #tpu.dot_dimension_numbers<[1], [0], [0], [1], [0, 0, 1, 1], [], []>} : vector<128x48xf32>, vector<48x96xf32>, vector<128x96xf32> -> vector<128x96xf32>
    %71 = arith.addf %66, %70 : vector<128x96xf32>
    %72 = vector.extract_strided_slice %53 {offsets = [3, 0], sizes = [128, 48], strides = [1, 1]} : vector<132x48xf32> to vector<128x48xf32>
    %73 = vector.broadcast %40 : vector<128x1xf32> to vector<128x48xf32>
    %74 = arith.mulf %72, %73 : vector<128x48xf32>
    %c3 = arith.constant 3 : index
    %c0_27 = arith.constant 0 : index
    %c0_28 = arith.constant 0 : index
    %75 = vector.load %arg5[%c3, %c0_27, %c0_28] : memref<5x48x96xf32, #tpu.memory_space<vmem>>, vector<1x48x96xf32>
    %76 = vector.shape_cast %75 : vector<1x48x96xf32> to vector<48x96xf32>
    %cst_29 = arith.constant dense<0.000000e+00> : vector<128x96xf32>
    %77 = tpu.matmul %74, %76, %cst_29 {dimension_numbers = #tpu.dot_dimension_numbers<[1], [0], [0], [1], [0, 0, 1, 1], [], []>} : vector<128x48xf32>, vector<48x96xf32>, vector<128x96xf32> -> vector<128x96xf32>
    %78 = arith.addf %71, %77 : vector<128x96xf32>
    %79 = vector.extract_strided_slice %53 {offsets = [4, 0], sizes = [128, 48], strides = [1, 1]} : vector<132x48xf32> to vector<128x48xf32>
    %80 = vector.broadcast %51 : vector<128x1xf32> to vector<128x48xf32>
    %81 = arith.mulf %79, %80 : vector<128x48xf32>
    %c4 = arith.constant 4 : index
    %c0_30 = arith.constant 0 : index
    %c0_31 = arith.constant 0 : index
    %82 = vector.load %arg5[%c4, %c0_30, %c0_31] : memref<5x48x96xf32, #tpu.memory_space<vmem>>, vector<1x48x96xf32>
    %83 = vector.shape_cast %82 : vector<1x48x96xf32> to vector<48x96xf32>
    %cst_32 = arith.constant dense<0.000000e+00> : vector<128x96xf32>
    %84 = tpu.matmul %81, %83, %cst_32 {dimension_numbers = #tpu.dot_dimension_numbers<[1], [0], [0], [1], [0, 0, 1, 1], [], []>} : vector<128x48xf32>, vector<48x96xf32>, vector<128x96xf32> -> vector<128x96xf32>
    %85 = arith.addf %78, %84 : vector<128x96xf32>
    %cst_33 = arith.constant 0.000000e+00 : f32
    %86 = vector.broadcast %cst_33 : f32 to vector<2x32xf32>
    %87 = tpu.concatenate %86, %2, %86 in 0 : vector<2x32xf32>, vector<128x32xf32>, vector<2x32xf32> -> vector<132x32xf32>
    %88 = vector.extract_strided_slice %87 {offsets = [0, 0], sizes = [128, 32], strides = [1, 1]} : vector<132x32xf32> to vector<128x32xf32>
    %89 = vector.broadcast %18 : vector<128x1xf32> to vector<128x32xf32>
    %90 = arith.mulf %88, %89 : vector<128x32xf32>
    %c0_34 = arith.constant 0 : index
    %c0_35 = arith.constant 0 : index
    %c0_36 = arith.constant 0 : index
    %91 = vector.load %arg4[%c0_34, %c0_35, %c0_36] : memref<5x32x64xf32, #tpu.memory_space<vmem>>, vector<1x32x64xf32>
    %92 = vector.shape_cast %91 : vector<1x32x64xf32> to vector<32x64xf32>
    %cst_37 = arith.constant dense<0.000000e+00> : vector<128x64xf32>
    %93 = tpu.matmul %90, %92, %cst_37 {dimension_numbers = #tpu.dot_dimension_numbers<[1], [0], [0], [1], [0, 0, 1, 1], [], []>} : vector<128x32xf32>, vector<32x64xf32>, vector<128x64xf32> -> vector<128x64xf32>
    %94 = vector.extract_strided_slice %87 {offsets = [1, 0], sizes = [128, 32], strides = [1, 1]} : vector<132x32xf32> to vector<128x32xf32>
    %95 = vector.broadcast %29 : vector<128x1xf32> to vector<128x32xf32>
    %96 = arith.mulf %94, %95 : vector<128x32xf32>
    %c1_38 = arith.constant 1 : index
    %c0_39 = arith.constant 0 : index
    %c0_40 = arith.constant 0 : index
    %97 = vector.load %arg4[%c1_38, %c0_39, %c0_40] : memref<5x32x64xf32, #tpu.memory_space<vmem>>, vector<1x32x64xf32>
    %98 = vector.shape_cast %97 : vector<1x32x64xf32> to vector<32x64xf32>
    %cst_41 = arith.constant dense<0.000000e+00> : vector<128x64xf32>
    %99 = tpu.matmul %96, %98, %cst_41 {dimension_numbers = #tpu.dot_dimension_numbers<[1], [0], [0], [1], [0, 0, 1, 1], [], []>} : vector<128x32xf32>, vector<32x64xf32>, vector<128x64xf32> -> vector<128x64xf32>
    %100 = arith.addf %93, %99 : vector<128x64xf32>
    %101 = vector.extract_strided_slice %87 {offsets = [2, 0], sizes = [128, 32], strides = [1, 1]} : vector<132x32xf32> to vector<128x32xf32>
    %c2_42 = arith.constant 2 : index
    %c0_43 = arith.constant 0 : index
    %c0_44 = arith.constant 0 : index
    %102 = vector.load %arg4[%c2_42, %c0_43, %c0_44] : memref<5x32x64xf32, #tpu.memory_space<vmem>>, vector<1x32x64xf32>
    %103 = vector.shape_cast %102 : vector<1x32x64xf32> to vector<32x64xf32>
    %cst_45 = arith.constant dense<0.000000e+00> : vector<128x64xf32>
    %104 = tpu.matmul %101, %103, %cst_45 {dimension_numbers = #tpu.dot_dimension_numbers<[1], [0], [0], [1], [0, 0, 1, 1], [], []>} : vector<128x32xf32>, vector<32x64xf32>, vector<128x64xf32> -> vector<128x64xf32>
    %105 = arith.addf %100, %104 : vector<128x64xf32>
    %106 = vector.extract_strided_slice %87 {offsets = [3, 0], sizes = [128, 32], strides = [1, 1]} : vector<132x32xf32> to vector<128x32xf32>
    %107 = vector.broadcast %40 : vector<128x1xf32> to vector<128x32xf32>
    %108 = arith.mulf %106, %107 : vector<128x32xf32>
    %c3_46 = arith.constant 3 : index
    %c0_47 = arith.constant 0 : index
    %c0_48 = arith.constant 0 : index
    %109 = vector.load %arg4[%c3_46, %c0_47, %c0_48] : memref<5x32x64xf32, #tpu.memory_space<vmem>>, vector<1x32x64xf32>
    %110 = vector.shape_cast %109 : vector<1x32x64xf32> to vector<32x64xf32>
    %cst_49 = arith.constant dense<0.000000e+00> : vector<128x64xf32>
    %111 = tpu.matmul %108, %110, %cst_49 {dimension_numbers = #tpu.dot_dimension_numbers<[1], [0], [0], [1], [0, 0, 1, 1], [], []>} : vector<128x32xf32>, vector<32x64xf32>, vector<128x64xf32> -> vector<128x64xf32>
    %112 = arith.addf %105, %111 : vector<128x64xf32>
    %113 = vector.extract_strided_slice %87 {offsets = [4, 0], sizes = [128, 32], strides = [1, 1]} : vector<132x32xf32> to vector<128x32xf32>
    %114 = vector.broadcast %51 : vector<128x1xf32> to vector<128x32xf32>
    %115 = arith.mulf %113, %114 : vector<128x32xf32>
    %c4_50 = arith.constant 4 : index
    %c0_51 = arith.constant 0 : index
    %c0_52 = arith.constant 0 : index
    %116 = vector.load %arg4[%c4_50, %c0_51, %c0_52] : memref<5x32x64xf32, #tpu.memory_space<vmem>>, vector<1x32x64xf32>
    %117 = vector.shape_cast %116 : vector<1x32x64xf32> to vector<32x64xf32>
    %cst_53 = arith.constant dense<0.000000e+00> : vector<128x64xf32>
    %118 = tpu.matmul %115, %117, %cst_53 {dimension_numbers = #tpu.dot_dimension_numbers<[1], [0], [0], [1], [0, 0, 1, 1], [], []>} : vector<128x32xf32>, vector<32x64xf32>, vector<128x64xf32> -> vector<128x64xf32>
    %119 = arith.addf %112, %118 : vector<128x64xf32>
    %120 = vector.extract_strided_slice %85 {offsets = [0, 0], sizes = [128, 64], strides = [1, 1]} : vector<128x96xf32> to vector<128x64xf32>
    %121 = arith.addf %119, %120 : vector<128x64xf32>
    %c0_54 = arith.constant 0 : index
    %c0_55 = arith.constant 0 : index
    %122 = vector.load %arg7[%c0_54, %c0_55] : memref<1x64xf32, #tpu.memory_space<vmem>>, vector<1x64xf32>
    %123 = vector.broadcast %122 : vector<1x64xf32> to vector<128x64xf32>
    %124 = arith.addf %121, %123 : vector<128x64xf32>
    %125 = arith.negf %124 : vector<128x64xf32>
    %126 = math.exp %125 : vector<128x64xf32>
    %cst_56 = arith.constant 1.000000e+00 : f32
    %127 = vector.broadcast %cst_56 : f32 to vector<128x64xf32>
    %128 = arith.addf %127, %126 : vector<128x64xf32>
    %129 = arith.divf %127, %128 : vector<128x64xf32>
    %130 = vector.extract_strided_slice %129 {offsets = [0, 0], sizes = [128, 32], strides = [1, 1]} : vector<128x64xf32> to vector<128x32xf32>
    %131 = vector.extract_strided_slice %129 {offsets = [0, 32], sizes = [128, 32], strides = [1, 1]} : vector<128x64xf32> to vector<128x32xf32>
    %132 = arith.mulf %131, %2 : vector<128x32xf32>
    %cst_57 = arith.constant 0.000000e+00 : f32
    %133 = vector.broadcast %cst_57 : f32 to vector<2x32xf32>
    %134 = tpu.concatenate %133, %132, %133 in 0 : vector<2x32xf32>, vector<128x32xf32>, vector<2x32xf32> -> vector<132x32xf32>
    %135 = vector.extract_strided_slice %134 {offsets = [0, 0], sizes = [128, 32], strides = [1, 1]} : vector<132x32xf32> to vector<128x32xf32>
    %136 = vector.broadcast %18 : vector<128x1xf32> to vector<128x32xf32>
    %137 = arith.mulf %135, %136 : vector<128x32xf32>
    %c0_58 = arith.constant 0 : index
    %c0_59 = arith.constant 0 : index
    %c0_60 = arith.constant 0 : index
    %138 = vector.load %arg6[%c0_58, %c0_59, %c0_60] : memref<5x32x32xf32, #tpu.memory_space<vmem>>, vector<1x32x32xf32>
    %139 = vector.shape_cast %138 : vector<1x32x32xf32> to vector<32x32xf32>
    %cst_61 = arith.constant dense<0.000000e+00> : vector<128x32xf32>
    %140 = tpu.matmul %137, %139, %cst_61 {dimension_numbers = #tpu.dot_dimension_numbers<[1], [0], [0], [1], [0, 0, 1, 1], [], []>} : vector<128x32xf32>, vector<32x32xf32>, vector<128x32xf32> -> vector<128x32xf32>
    %141 = vector.extract_strided_slice %134 {offsets = [1, 0], sizes = [128, 32], strides = [1, 1]} : vector<132x32xf32> to vector<128x32xf32>
    %142 = vector.broadcast %29 : vector<128x1xf32> to vector<128x32xf32>
    %143 = arith.mulf %141, %142 : vector<128x32xf32>
    %c1_62 = arith.constant 1 : index
    %c0_63 = arith.constant 0 : index
    %c0_64 = arith.constant 0 : index
    %144 = vector.load %arg6[%c1_62, %c0_63, %c0_64] : memref<5x32x32xf32, #tpu.memory_space<vmem>>, vector<1x32x32xf32>
    %145 = vector.shape_cast %144 : vector<1x32x32xf32> to vector<32x32xf32>
    %cst_65 = arith.constant dense<0.000000e+00> : vector<128x32xf32>
    %146 = tpu.matmul %143, %145, %cst_65 {dimension_numbers = #tpu.dot_dimension_numbers<[1], [0], [0], [1], [0, 0, 1, 1], [], []>} : vector<128x32xf32>, vector<32x32xf32>, vector<128x32xf32> -> vector<128x32xf32>
    %147 = arith.addf %140, %146 : vector<128x32xf32>
    %148 = vector.extract_strided_slice %134 {offsets = [2, 0], sizes = [128, 32], strides = [1, 1]} : vector<132x32xf32> to vector<128x32xf32>
    %c2_66 = arith.constant 2 : index
    %c0_67 = arith.constant 0 : index
    %c0_68 = arith.constant 0 : index
    %149 = vector.load %arg6[%c2_66, %c0_67, %c0_68] : memref<5x32x32xf32, #tpu.memory_space<vmem>>, vector<1x32x32xf32>
    %150 = vector.shape_cast %149 : vector<1x32x32xf32> to vector<32x32xf32>
    %cst_69 = arith.constant dense<0.000000e+00> : vector<128x32xf32>
    %151 = tpu.matmul %148, %150, %cst_69 {dimension_numbers = #tpu.dot_dimension_numbers<[1], [0], [0], [1], [0, 0, 1, 1], [], []>} : vector<128x32xf32>, vector<32x32xf32>, vector<128x32xf32> -> vector<128x32xf32>
    %152 = arith.addf %147, %151 : vector<128x32xf32>
    %153 = vector.extract_strided_slice %134 {offsets = [3, 0], sizes = [128, 32], strides = [1, 1]} : vector<132x32xf32> to vector<128x32xf32>
    %154 = vector.broadcast %40 : vector<128x1xf32> to vector<128x32xf32>
    %155 = arith.mulf %153, %154 : vector<128x32xf32>
    %c3_70 = arith.constant 3 : index
    %c0_71 = arith.constant 0 : index
    %c0_72 = arith.constant 0 : index
    %156 = vector.load %arg6[%c3_70, %c0_71, %c0_72] : memref<5x32x32xf32, #tpu.memory_space<vmem>>, vector<1x32x32xf32>
    %157 = vector.shape_cast %156 : vector<1x32x32xf32> to vector<32x32xf32>
    %cst_73 = arith.constant dense<0.000000e+00> : vector<128x32xf32>
    %158 = tpu.matmul %155, %157, %cst_73 {dimension_numbers = #tpu.dot_dimension_numbers<[1], [0], [0], [1], [0, 0, 1, 1], [], []>} : vector<128x32xf32>, vector<32x32xf32>, vector<128x32xf32> -> vector<128x32xf32>
    %159 = arith.addf %152, %158 : vector<128x32xf32>
    %160 = vector.extract_strided_slice %134 {offsets = [4, 0], sizes = [128, 32], strides = [1, 1]} : vector<132x32xf32> to vector<128x32xf32>
    %161 = vector.broadcast %51 : vector<128x1xf32> to vector<128x32xf32>
    %162 = arith.mulf %160, %161 : vector<128x32xf32>
    %c4_74 = arith.constant 4 : index
    %c0_75 = arith.constant 0 : index
    %c0_76 = arith.constant 0 : index
    %163 = vector.load %arg6[%c4_74, %c0_75, %c0_76] : memref<5x32x32xf32, #tpu.memory_space<vmem>>, vector<1x32x32xf32>
    %164 = vector.shape_cast %163 : vector<1x32x32xf32> to vector<32x32xf32>
    %cst_77 = arith.constant dense<0.000000e+00> : vector<128x32xf32>
    %165 = tpu.matmul %162, %164, %cst_77 {dimension_numbers = #tpu.dot_dimension_numbers<[1], [0], [0], [1], [0, 0, 1, 1], [], []>} : vector<128x32xf32>, vector<32x32xf32>, vector<128x32xf32> -> vector<128x32xf32>
    %166 = arith.addf %159, %165 : vector<128x32xf32>
    %167 = vector.extract_strided_slice %85 {offsets = [0, 64], sizes = [128, 32], strides = [1, 1]} : vector<128x96xf32> to vector<128x32xf32>
    %168 = arith.addf %166, %167 : vector<128x32xf32>
    %c0_78 = arith.constant 0 : index
    %c0_79 = arith.constant 0 : index
    %169 = vector.load %arg8[%c0_78, %c0_79] : memref<1x32xf32, #tpu.memory_space<vmem>>, vector<1x32xf32>
    %170 = vector.broadcast %169 : vector<1x32xf32> to vector<128x32xf32>
    %171 = arith.addf %168, %170 : vector<128x32xf32>
    %172 = math.tanh %171 : vector<128x32xf32>
    %173 = arith.subf %172, %2 : vector<128x32xf32>
    %174 = arith.mulf %130, %173 : vector<128x32xf32>
    %175 = arith.addf %2, %174 : vector<128x32xf32>
    %176 = vector.shape_cast %175 : vector<128x32xf32> to vector<8x16x32xf32>
    %c0_80 = arith.constant 0 : index
    %c0_81 = arith.constant 0 : index
    %c0_82 = arith.constant 0 : index
    %c0_83 = arith.constant 0 : index
    %177 = vector.load %arg9[%c0_80, %c0_81, %c0_82, %c0_83] : memref<1x8x16x32xf32, #tpu.memory_space<vmem>>, vector<1x8x16x32xf32>
    %178 = vector.shape_cast %177 : vector<1x8x16x32xf32> to vector<8x16x32xf32>
    %179 = vector.shape_cast %176 : vector<8x16x32xf32> to vector<1x8x16x32xf32>
    tpu.vector_store %arg9[%c0_80, %c0_81, %c0_82, %c0_83], %179 {strides = array<i32>} : memref<1x8x16x32xf32, #tpu.memory_space<vmem>>, vector<1x8x16x32xf32>,
    return
  }
  func.func @transform_0(%arg0: i32, %arg1: i32) -> (i32, i32, i32, i32) {
    %c0_i32 = arith.constant 0 : i32
    %c0_i32_0 = arith.constant 0 : i32
    %c0_i32_1 = arith.constant 0 : i32
    return %arg0, %arg1, %c0_i32, %c0_i32_0 : i32, i32, i32, i32
  }
  func.func @transform_1(%arg0: i32, %arg1: i32) -> (i32, i32, i32, i32) {
    %c0_i32 = arith.constant 0 : i32
    %c0_i32_0 = arith.constant 0 : i32
    %c0_i32_1 = arith.constant 0 : i32
    return %arg0, %arg1, %c0_i32, %c0_i32_0 : i32, i32, i32, i32
  }
  func.func @transform_2(%arg0: i32, %arg1: i32) -> (i32, i32, i32) {
    %c0_i32 = arith.constant 0 : i32
    %c0_i32_0 = arith.constant 0 : i32
    %c0_i32_1 = arith.constant 0 : i32
    %c0_i32_2 = arith.constant 0 : i32
    return %c0_i32, %c0_i32_0, %c0_i32_1 : i32, i32, i32
  }
  func.func @transform_3(%arg0: i32, %arg1: i32) -> (i32, i32, i32) {
    %c0_i32 = arith.constant 0 : i32
    %c0_i32_0 = arith.constant 0 : i32
    %c0_i32_1 = arith.constant 0 : i32
    %c0_i32_2 = arith.constant 0 : i32
    return %c0_i32, %c0_i32_0, %c0_i32_1 : i32, i32, i32
  }
  func.func @transform_4(%arg0: i32, %arg1: i32) -> (i32, i32, i32) {
    %c0_i32 = arith.constant 0 : i32
    %c0_i32_0 = arith.constant 0 : i32
    %c0_i32_1 = arith.constant 0 : i32
    %c0_i32_2 = arith.constant 0 : i32
    return %c0_i32, %c0_i32_0, %c0_i32_1 : i32, i32, i32
  }
  func.func @transform_5(%arg0: i32, %arg1: i32) -> (i32, i32) {
    %c0_i32 = arith.constant 0 : i32
    %c0_i32_0 = arith.constant 0 : i32
    %c0_i32_1 = arith.constant 0 : i32
    return %c0_i32, %c0_i32_0 : i32, i32
  }
  func.func @transform_6(%arg0: i32, %arg1: i32) -> (i32, i32) {
    %c0_i32 = arith.constant 0 : i32
    %c0_i32_0 = arith.constant 0 : i32
    %c0_i32_1 = arith.constant 0 : i32
    return %c0_i32, %c0_i32_0 : i32, i32
  }
  func.func @transform_7(%arg0: i32, %arg1: i32) -> (i32, i32, i32, i32) {
    %c0_i32 = arith.constant 0 : i32
    %c0_i32_0 = arith.constant 0 : i32
    %c0_i32_1 = arith.constant 0 : i32
    return %arg0, %arg1, %c0_i32, %c0_i32_0 : i32, i32, i32, i32
  }
}

</mosaic_0001>

<llo_original>
// kernel: tpu_custom_call.1
$region0: #{tpu_custom_call.1}
  #allocation0 [shape = 'u32[]', space=smem, size = 0x4, offset = 0x4, fixed_abs, tag = 'smem constant byte address 0x4 - core index']
  #allocation1 [shape = 'u32[72,128]{1,0:T(1,128)}', space=vmem, size = 0x9000, scoped, tag = 'internal scratch']
  %s0 = inlined_call_operand.hbm [shape: f32[2,16,16,32], index: 0, kind: input, shape index: {}]
  %s1 = inlined_call_operand.hbm [shape: f32[2,16,16,48], index: 1, kind: input, shape index: {}]
  %s2 = inlined_call_operand.hbm [shape: f32[5,32,64], index: 2, kind: input, shape index: {}]
  %s3 = inlined_call_operand.hbm [shape: f32[5,48,96], index: 3, kind: input, shape index: {}]
  %s4 = inlined_call_operand.hbm [shape: f32[5,32,32], index: 4, kind: input, shape index: {}]
  %s5 = inlined_call_operand.vmem [shape: f32[1,64], index: 5, kind: input, shape index: {}]
  %s6 = inlined_call_operand.vmem [shape: f32[1,32], index: 6, kind: input, shape index: {}]
  %s7 = inlined_call_operand.hbm [shape: f32[2,16,16,32], index: 7, kind: output, shape index: {}]
  %s8 = sld [smem:[#allocation0]]
  $region81: #{tpu_custom_call.1} parent=0
    _
  %s10 = ssub.s32 1, %s8
  %s11 = scalar_select 0, %s10, %s8
  $region1: #{tpu_custom_call.1} parent=0
    #allocation2 [shape = 'u8[131072]{0}', space=vmem, size = 0x20000, scoped, tag = 'input window, operand 0']
    #allocation3 [shape = 's32[2]{0}', space=sflag, size = 0x8, scoped, tag = 'scoped memory for tpu_custom_call.1']
    #allocation4 [shape = 's32[2]{0}', space=sflag, size = 0x8, scoped, tag = 'scoped memory for tpu_custom_call.1']
    #allocation5 [shape = 'u8[131072]{0}', space=vmem, size = 0x20000, scoped, tag = 'input window, operand 1']
    #allocation6 [shape = 's32[2]{0}', space=sflag, size = 0x8, scoped, tag = 'scoped memory for tpu_custom_call.1']
    #allocation7 [shape = 'u8[81920]{0}', space=vmem, size = 0x14000, scoped, tag = 'input window, operand 2, single buffered']
    #allocation8 [shape = 'u8[122880]{0}', space=vmem, size = 0x1e000, scoped, tag = 'input window, operand 3, single buffered']
    #allocation9 [shape = 's32[1]{0}', space=sflag, size = 0x4, scoped, tag = 'scoped memory for tpu_custom_call.1']
    #allocation10 [shape = 'u8[81920]{0}', space=vmem, size = 0x14000, scoped, tag = 'input window, operand 4, single buffered']
    #allocation11 [shape = 'u8[131072]{0}', space=vmem, size = 0x20000, scoped, tag = 'output window, operand 0']
    %12 = vsyncpa [#allocation3], 0
    %s13 = scalar_lea.sflag [#allocation3], 1
    %14 = vsyncpa %s13, 0
    %15 = vsyncpa [#allocation6], 0
    %s16 = scalar_lea.sflag [#allocation6], 1
    %17 = vsyncpa %s16, 0
    %18 = vsyncpa [#allocation9], 0
    %19 = vsyncpa [#allocation4], 0
    %s20 = scalar_lea.sflag [#allocation4], 1
    %21 = vsyncpa %s20, 0
    loop: start=0, step=1, limit=6
    $region2: #{tpu_custom_call.1} parent=1 // loop_pre_header
      _
    $region3: #{tpu_custom_call.1} parent=1 // loop_header
      %s23 = sphi 0, %s27
      %p24 = scmp.ge.s32.totalorder %s23, 6
      %s30 = sphi 0, %s42
      %s31 = sphi 0, %s38
      %s32 = sphi 0, %s30
      %s33 = sphi 0, %s31
      %s34 = sphi 0, %s32
      %s35 = sphi 0, %s33
      %s47 = sphi 0, %s49
      %s50 = sphi 0, %s47
      %s51 = sphi 0, %s50
      %s67 = sphi 0, %s51
      %s75 = sphi 0, %s77
      %s78 = sphi 0, %s75
      %s79 = sphi 0, %s78
      %s95 = sphi 0, %s79
      %s99 = sphi 0, %s99
      %s101 = sphi 0, %s99
      %s102 = sphi 0, %s101
      %s116 = sphi 0, %s102
      %s120 = sphi 0, %s120
      %s122 = sphi 0, %s120
      %s123 = sphi 0, %s122
      %s137 = sphi 0, %s123
      %s141 = sphi 0, %s141
      %s143 = sphi 0, %s141
      %s144 = sphi 0, %s143
      %s158 = sphi 0, %s144
      %s162 = sphi 0, %s162
      %s164 = sphi 0, %s162
      %s165 = sphi 0, %s164
      %s179 = sphi 0, %s165
      %s183 = sphi 0, %s183
      %s185 = sphi 0, %s183
      %s186 = sphi 0, %s185
      %s200 = sphi 0, %s186
      %s208 = sphi 0, %s210
      %s211 = sphi 0, %s208
      %s212 = sphi 0, %s211
      %s228 = sphi 0, %s212
    $region4: #{tpu_custom_call.1} parent=1 // loop_header_branch
      %26 = sbr.rel (%p24) target = $region8
    $region5: #{tpu_custom_call.1} parent=1 // loop_body
      %s28 = ssub.s32 %s23, 1
      %s29 = ssub.s32 %s23, 2
      %s36 = sadd.s32 1, %s31
      %p37 = scmp.ge.s32.totalorder %s36, 2
      %s38 = scalar_select %p37, 0, %s36
      %s39 = sadd.s32 1, %s30
      %s40 = scalar_select %p37, %s39, %s30
      %p41 = scmp.ge.s32.totalorder %s40, 2
      %s42 = scalar_select %p41, 0, %s40
      %s43 = ssub.s32 %s30, %s42
      %s44 = ssub.s32 %s31, %s38
      %s45 = sor.u32 %s43, %s44
      %p46 = scmp.eq.s32.totalorder %s45, 0
      %s48 = sadd.s32 %s47, 1
      %s49 = scalar_select %p46, %s47, %s48
      %p52 = pneg %p46
      %p53 = scmp.eq.s32.totalorder %s23, 3
      %p54 = por %p52, %p53
      %p55 = scmp.ne.s32.totalorder %s47, %s50
      %p56 = scmp.eq.s32.totalorder %s23, 0
      %p57 = por %p55, %p56
      %p58 = scmp.ne.s32.totalorder %s47, %s50
      %p59 = scmp.eq.s32.totalorder %s28, 3
      %p60 = por %p58, %p59
      %p61 = scmp.ne.s32.totalorder %s50, %s51
      %p62 = scmp.eq.s32.totalorder %s28, 0
      %p63 = por %p61, %p62
      %p64 = scmp.ne.s32.totalorder %s50, %s51
      %p65 = scmp.eq.s32.totalorder %s29, 3
      %p66 = por %p64, %p65
      %p68 = scmp.ne.s32.totalorder %s51, %s67
      %p69 = scmp.eq.s32.totalorder %s29, 0
      %p70 = por %p68, %p69
      %s71 = ssub.s32 %s30, %s42
      %s72 = ssub.s32 %s31, %s38
      %s73 = sor.u32 %s71, %s72
      %p74 = scmp.eq.s32.totalorder %s73, 0
      %s76 = sadd.s32 %s75, 1
      %s77 = scalar_select %p74, %s75, %s76
      %p80 = pneg %p74
      %p81 = scmp.eq.s32.totalorder %s23, 3
      %p82 = por %p80, %p81
      %p83 = scmp.ne.s32.totalorder %s75, %s78
      %p84 = scmp.eq.s32.totalorder %s23, 0
      %p85 = por %p83, %p84
      %p86 = scmp.ne.s32.totalorder %s75, %s78
      %p87 = scmp.eq.s32.totalorder %s28, 3
      %p88 = por %p86, %p87
      %p89 = scmp.ne.s32.totalorder %s78, %s79
      %p90 = scmp.eq.s32.totalorder %s28, 0
      %p91 = por %p89, %p90
      %p92 = scmp.ne.s32.totalorder %s78, %s79
      %p93 = scmp.eq.s32.totalorder %s29, 3
      %p94 = por %p92, %p93
      %p96 = scmp.ne.s32.totalorder %s79, %s95
      %p97 = scmp.eq.s32.totalorder %s29, 0
      %p98 = por %p96, %p97
      %s100 = sadd.s32 %s99, 1
      %p103 = scmp.eq.s32.totalorder %s23, 3
      %p104 = scmp.ne.s32.totalorder %s99, %s101
      %p105 = scmp.eq.s32.totalorder %s23, 0
      %p106 = por %p104, %p105
      %p107 = scmp.ne.s32.totalorder %s99, %s101
      %p108 = scmp.eq.s32.totalorder %s28, 3
      %p109 = por %p107, %p108
      %p110 = scmp.ne.s32.totalorder %s101, %s102
      %p111 = scmp.eq.s32.totalorder %s28, 0
      %p112 = por %p110, %p111
      %p113 = scmp.ne.s32.totalorder %s101, %s102
      %p114 = scmp.eq.s32.totalorder %s29, 3
      %p115 = por %p113, %p114
      %p117 = scmp.ne.s32.totalorder %s102, %s116
      %p118 = scmp.eq.s32.totalorder %s29, 0
      %p119 = por %p117, %p118
      %s121 = sadd.s32 %s120, 1
      %p124 = scmp.eq.s32.totalorder %s23, 3
      %p125 = scmp.ne.s32.totalorder %s120, %s122
      %p126 = scmp.eq.s32.totalorder %s23, 0
      %p127 = por %p125, %p126
      %p128 = scmp.ne.s32.totalorder %s120, %s122
      %p129 = scmp.eq.s32.totalorder %s28, 3
      %p130 = por %p128, %p129
      %p131 = scmp.ne.s32.totalorder %s122, %s123
      %p132 = scmp.eq.s32.totalorder %s28, 0
      %p133 = por %p131, %p132
      %p134 = scmp.ne.s32.totalorder %s122, %s123
      %p135 = scmp.eq.s32.totalorder %s29, 3
      %p136 = por %p134, %p135
      %p138 = scmp.ne.s32.totalorder %s123, %s137
      %p139 = scmp.eq.s32.totalorder %s29, 0
      %p140 = por %p138, %p139
      %s142 = sadd.s32 %s141, 1
      %p145 = scmp.eq.s32.totalorder %s23, 3
      %p146 = scmp.ne.s32.totalorder %s141, %s143
      %p147 = scmp.eq.s32.totalorder %s23, 0
      %p148 = por %p146, %p147
      %p149 = scmp.ne.s32.totalorder %s141, %s143
      %p150 = scmp.eq.s32.totalorder %s28, 3
      %p151 = por %p149, %p150
      %p152 = scmp.ne.s32.totalorder %s143, %s144
      %p153 = scmp.eq.s32.totalorder %s28, 0
      %p154 = por %p152, %p153
      %p155 = scmp.ne.s32.totalorder %s143, %s144
      %p156 = scmp.eq.s32.totalorder %s29, 3
      %p157 = por %p155, %p156
      %p159 = scmp.ne.s32.totalorder %s144, %s158
      %p160 = scmp.eq.s32.totalorder %s29, 0
      %p161 = por %p159, %p160
      %s163 = sadd.s32 %s162, 1
      %p166 = scmp.eq.s32.totalorder %s23, 3
      %p167 = scmp.ne.s32.totalorder %s162, %s164
      %p168 = scmp.eq.s32.totalorder %s23, 0
      %p169 = por %p167, %p168
      %p170 = scmp.ne.s32.totalorder %s162, %s164
      %p171 = scmp.eq.s32.totalorder %s28, 3
      %p172 = por %p170, %p171
      %p173 = scmp.ne.s32.totalorder %s164, %s165
      %p174 = scmp.eq.s32.totalorder %s28, 0
      %p175 = por %p173, %p174
      %p176 = scmp.ne.s32.totalorder %s164, %s165
      %p177 = scmp.eq.s32.totalorder %s29, 3
      %p178 = por %p176, %p177
      %p180 = scmp.ne.s32.totalorder %s165, %s179
      %p181 = scmp.eq.s32.totalorder %s29, 0
      %p182 = por %p180, %p181
      %s184 = sadd.s32 %s183, 1
      %p187 = scmp.eq.s32.totalorder %s23, 3
      %p188 = scmp.ne.s32.totalorder %s183, %s185
      %p189 = scmp.eq.s32.totalorder %s23, 0
      %p190 = por %p188, %p189
      %p191 = scmp.ne.s32.totalorder %s183, %s185
      %p192 = scmp.eq.s32.totalorder %s28, 3
      %p193 = por %p191, %p192
      %p194 = scmp.ne.s32.totalorder %s185, %s186
      %p195 = scmp.eq.s32.totalorder %s28, 0
      %p196 = por %p194, %p195
      %p197 = scmp.ne.s32.totalorder %s185, %s186
      %p198 = scmp.eq.s32.totalorder %s29, 3
      %p199 = por %p197, %p198
      %p201 = scmp.ne.s32.totalorder %s186, %s200
      %p202 = scmp.eq.s32.totalorder %s29, 0
      %p203 = por %p201, %p202
      %s204 = ssub.s32 %s30, %s42
      %s205 = ssub.s32 %s31, %s38
      %s206 = sor.u32 %s204, %s205
      %p207 = scmp.eq.s32.totalorder %s206, 0
      %s209 = sadd.s32 %s208, 1
      %s210 = scalar_select %p207, %s208, %s209
      %p213 = pneg %p207
      %p214 = scmp.eq.s32.totalorder %s23, 3
      %p215 = por %p213, %p214
      %p216 = scmp.ne.s32.totalorder %s208, %s211
      %p217 = scmp.eq.s32.totalorder %s23, 0
      %p218 = por %p216, %p217
      %p219 = scmp.ne.s32.totalorder %s208, %s211
      %p220 = scmp.eq.s32.totalorder %s28, 3
      %p221 = por %p219, %p220
      %p222 = scmp.ne.s32.totalorder %s211, %s212
      %p223 = scmp.eq.s32.totalorder %s28, 0
      %p224 = por %p222, %p223
      %p225 = scmp.ne.s32.totalorder %s211, %s212
      %p226 = scmp.eq.s32.totalorder %s29, 3
      %p227 = por %p225, %p226
      %p229 = scmp.ne.s32.totalorder %s212, %s228
      %p230 = scmp.eq.s32.totalorder %s29, 0
      %p231 = por %p229, %p230
      %p232 = scmp.le.s32.totalorder 1, %s23
      %p233 = scmp.lt.s32.totalorder %s23, 5
      %p234 = pnand %p232, %p233
      %p235 = pneg %p234
      // Predicated region
      $region9: #{tpu_custom_call.1} parent=5 // pred_check
        _
      $region10: #{tpu_custom_call.1} parent=5 // pred_check_branch
        %237 = sbr.rel (%p234) target = $region12
      $region11: #{tpu_custom_call.1} parent=5 // pred_region
        %s238 = ssub.s32 %s23, 1
        // Predicated region
        $region13: #{tpu_custom_call.1} parent=11 // pred_check
          %p239 = pneg %p112
        $region14: #{tpu_custom_call.1} parent=11 // pred_check_branch
          %241 = sbr.rel (%p239) target = $region16
        $region15: #{tpu_custom_call.1} parent=11 // pred_region
          %243 = vsyncadd [#allocation6], 0
          %s244 = sshll.u32 %s2, 4
          %s245 = int_to_ptr.hbm [resolvable:$true] %s244
          %s246 = sshll.u32 [#allocation7], 4
          %s247 = int_to_ptr.vmem [resolvable:$true] %s246
          %252 = dma.hbm_to_vmem [thread:$0]  %s245, 2560, %s247, [#allocation6], 128, 128, 8
        $region16: #{tpu_custom_call.1} parent=11 // pred_fallthru
          _
        // Predicated region
        $region17: #{tpu_custom_call.1} parent=11 // pred_check
          %p253 = pneg %p133
        $region18: #{tpu_custom_call.1} parent=11 // pred_check_branch
          %255 = sbr.rel (%p253) target = $region20
        $region19: #{tpu_custom_call.1} parent=11 // pred_region
          %257 = vsyncadd [#allocation9], 0
          %s258 = sshll.u32 %s3, 4
          %s259 = int_to_ptr.hbm [resolvable:$true] %s258
          %s260 = sshll.u32 [#allocation8], 4
          %s261 = int_to_ptr.vmem [resolvable:$true] %s260
          %266 = dma.hbm_to_vmem [thread:$0]  %s259, 3840, %s261, [#allocation9], 128, 128, 8
        $region20: #{tpu_custom_call.1} parent=11 // pred_fallthru
          _
        // Predicated region
        $region21: #{tpu_custom_call.1} parent=11 // pred_check
          %p267 = pneg %p154
        $region22: #{tpu_custom_call.1} parent=11 // pred_check_branch
          %269 = sbr.rel (%p267) target = $region24
        $region23: #{tpu_custom_call.1} parent=11 // pred_region
          %271 = vsyncadd [#allocation9], 0
          %s272 = sshll.u32 %s4, 4
          %s273 = int_to_ptr.hbm [resolvable:$true] %s272
          %s274 = sshll.u32 [#allocation10], 4
          %s275 = int_to_ptr.vmem [resolvable:$true] %s274
          %280 = dma.hbm_to_vmem [thread:$0]  %s273, 2560, %s275, [#allocation9], 128, 128, 8
        $region24: #{tpu_custom_call.1} parent=11 // pred_fallthru
          _
        // Predicated region
        $region25: #{tpu_custom_call.1} parent=11 // pred_check
          %p281 = pneg %p175
        $region26: #{tpu_custom_call.1} parent=11 // pred_check_branch
          %283 = sbr.rel (%p281) target = $region28
        $region27: #{tpu_custom_call.1} parent=11 // pred_region
          _
        $region28: #{tpu_custom_call.1} parent=11 // pred_fallthru
          _
        // Predicated region
        $region29: #{tpu_custom_call.1} parent=11 // pred_check
          %p284 = pneg %p196
        $region30: #{tpu_custom_call.1} parent=11 // pred_check_branch
          %286 = sbr.rel (%p284) target = $region32
        $region31: #{tpu_custom_call.1} parent=11 // pred_region
          _
        $region32: #{tpu_custom_call.1} parent=11 // pred_fallthru
          _
      $region12: #{tpu_custom_call.1} parent=5 // pred_fallthru
        _
      %p287 = scmp.lt.s32.totalorder %s23, 4
      // Predicated region
      $region33: #{tpu_custom_call.1} parent=5 // pred_check
        %p288 = pneg %p287
      $region34: #{tpu_custom_call.1} parent=5 // pred_check_branch
        %290 = sbr.rel (%p288) target = $region36
      $region35: #{tpu_custom_call.1} parent=5 // pred_region
        // Predicated region
        $region37: #{tpu_custom_call.1} parent=35 // pred_check
          %p291 = pneg %p57
        $region38: #{tpu_custom_call.1} parent=35 // pred_check_branch
          %293 = sbr.rel (%p291) target = $region40
        $region39: #{tpu_custom_call.1} parent=35 // pred_region
          %s294 = sand.u32 %s47, 1
          %s295 = scalar_lea.sflag [#allocation3], %s294
          %s296 = sand.u32 %s47, 1
          %s297 = smul.addr %s296, 128
          %s298 = scalar_lea.vmem [#allocation2], %s297
          %s299 = smul.u32 8, %s31
          %301 = vsyncadd %s295, 0
          %s302 = smul.addr %s299, 2
          %s303 = smul.addr %s30, 32
          %s304 = sadd.s32 %s302, %s303
          %s305 = smul.addr %s304, 8
          %s306 = scalar_lea.hbm %s0, %s305
          %s307 = sshll.u32 %s306, 4
          %s308 = int_to_ptr.hbm [resolvable:$true] %s307
          %s309 = sshll.u32 %s298, 4
          %s310 = int_to_ptr.vmem [resolvable:$true] %s309
          %315 = dma.hbm_to_vmem [thread:$0]  %s308, 2048, %s310, %s295, 128, 128, 8
        $region40: #{tpu_custom_call.1} parent=35 // pred_fallthru
          _
        // Predicated region
        $region41: #{tpu_custom_call.1} parent=35 // pred_check
          %p316 = pneg %p85
        $region42: #{tpu_custom_call.1} parent=35 // pred_check_branch
          %318 = sbr.rel (%p316) target = $region44
        $region43: #{tpu_custom_call.1} parent=35 // pred_region
          %s319 = sand.u32 %s23, 1
          %s320 = scalar_lea.sflag [#allocation6], %s319
          %s321 = sand.u32 %s75, 1
          %s322 = smul.addr %s321, 128
          %s323 = scalar_lea.vmem [#allocation5], %s322
          %s324 = smul.u32 8, %s31
          %326 = vsyncadd %s320, 0
          %s327 = smul.addr %s324, 2
          %s328 = smul.addr %s30, 32
          %s329 = sadd.s32 %s327, %s328
          %s330 = smul.addr %s329, 8
          %s331 = scalar_lea.hbm %s1, %s330
          %s332 = sshll.u32 %s331, 4
          %s333 = int_to_ptr.hbm [resolvable:$true] %s332
          %s334 = sshll.u32 %s323, 4
          %s335 = int_to_ptr.vmem [resolvable:$true] %s334
          %340 = dma.hbm_to_vmem [thread:$0]  %s333, 2048, %s335, %s320, 128, 128, 8
        $region44: #{tpu_custom_call.1} parent=35 // pred_fallthru
          _
      $region36: #{tpu_custom_call.1} parent=5 // pred_fallthru
        _
      %p341 = scmp.le.s32.totalorder 1, %s23
      %p342 = scmp.lt.s32.totalorder %s23, 5
      %p343 = pnand %p341, %p342
      %p344 = pneg %p343
      // Predicated region
      $region45: #{tpu_custom_call.1} parent=5 // pred_check
        _
      $region46: #{tpu_custom_call.1} parent=5 // pred_check_branch
        %346 = sbr.rel (%p343) target = $region48
      $region47: #{tpu_custom_call.1} parent=5 // pred_region
        %s347 = ssub.s32 %s23, 1
        %s348 = sand.u32 %s50, 1
        %s349 = scalar_lea.sflag [#allocation3], %s348
        %s350 = sand.u32 %s50, 1
        %s351 = smul.addr %s350, 128
        %s352 = scalar_lea.vmem [#allocation2], %s351
        // Predicated region
        $region49: #{tpu_custom_call.1} parent=47 // pred_check
          %p353 = pneg %p63
        $region50: #{tpu_custom_call.1} parent=47 // pred_check_branch
          %355 = sbr.rel (%p353) target = $region52
        $region51: #{tpu_custom_call.1} parent=47 // pred_region
          %357 = dma.done %s349, 2048
        $region52: #{tpu_custom_call.1} parent=47 // pred_fallthru
          _
        %s358 = sand.u32 %s28, 1
        %s359 = scalar_lea.sflag [#allocation6], %s358
        %s360 = sand.u32 %s78, 1
        %s361 = smul.addr %s360, 128
        %s362 = scalar_lea.vmem [#allocation5], %s361
        // Predicated region
        $region53: #{tpu_custom_call.1} parent=47 // pred_check
          %p363 = pneg %p91
        $region54: #{tpu_custom_call.1} parent=47 // pred_check_branch
          %365 = sbr.rel (%p363) target = $region56
        $region55: #{tpu_custom_call.1} parent=47 // pred_region
          %367 = dma.done %s359, 2048
        $region56: #{tpu_custom_call.1} parent=47 // pred_fallthru
          _
        // Predicated region
        $region57: #{tpu_custom_call.1} parent=47 // pred_check
          %p368 = pneg %p112
        $region58: #{tpu_custom_call.1} parent=47 // pred_check_branch
          %370 = sbr.rel (%p368) target = $region60
        $region59: #{tpu_custom_call.1} parent=47 // pred_region
          %372 = dma.done [#allocation6], 2560
        $region60: #{tpu_custom_call.1} parent=47 // pred_fallthru
          _
        // Predicated region
        $region61: #{tpu_custom_call.1} parent=47 // pred_check
          %p373 = pneg %p133
        $region62: #{tpu_custom_call.1} parent=47 // pred_check_branch
          %375 = sbr.rel (%p373) target = $region64
        $region63: #{tpu_custom_call.1} parent=47 // pred_region
          %377 = dma.done [#allocation9], 3840
        $region64: #{tpu_custom_call.1} parent=47 // pred_fallthru
          _
        // Predicated region
        $region65: #{tpu_custom_call.1} parent=47 // pred_check
          %p378 = pneg %p154
        $region66: #{tpu_custom_call.1} parent=47 // pred_check_branch
          %380 = sbr.rel (%p378) target = $region68
        $region67: #{tpu_custom_call.1} parent=47 // pred_region
          %382 = dma.done [#allocation9], 2560
        $region68: #{tpu_custom_call.1} parent=47 // pred_fallthru
          _
        %s383 = sand.u32 %s50, 1
        %s384 = scalar_lea.sflag [#allocation3], %s383
        %s385 = sand.u32 %s50, 1
        %s386 = smul.addr %s385, 128
        %s387 = scalar_lea.vmem [#allocation2], %s386
        %p388 = pneg %p63
        %p389 = pneg %p60
        %s390 = sand.u32 %s28, 1
        %s391 = scalar_lea.sflag [#allocation6], %s390
        %s392 = sand.u32 %s78, 1
        %s393 = smul.addr %s392, 128
        %s394 = scalar_lea.vmem [#allocation5], %s393
        %p395 = pneg %p91
        %p396 = pneg %p88
        %p397 = pneg %p112
        %p398 = pneg %p109
        %p399 = pneg %p133
        %p400 = pneg %p130
        %p401 = pneg %p154
        %p402 = pneg %p151
        %p403 = pneg %p175
        %p404 = pneg %p172
        %p405 = pneg %p196
        %p406 = pneg %p193
        %p407 = pneg %p224
        %p408 = pneg %p221
        %s409 = sand.u32 %s211, 1
        %s410 = scalar_lea.sflag [#allocation4], %s409
        %s411 = sand.u32 %s211, 1
        %s412 = smul.addr %s411, 128
        %s413 = scalar_lea.vmem [#allocation11], %s412
        %s414 = smul.u32 8, %s33
        %s415 = smul.u32 8, %s33
        %s416 = smul.u32 8, %s33
        %v417 = vld [vmem:[%s352] sm:$0xff]
        %v418 = vld [vmem:[%s352 + $0x8] sm:$0xff]
        %v419 = vld [vmem:[%s352 + $0x10] sm:$0xff]
        %v420 = vld [vmem:[%s352 + $0x18] sm:$0xff]
        %v421 = vld [vmem:[%s352 + $0x20] sm:$0xff]
        %v422 = vld [vmem:[%s352 + $0x28] sm:$0xff]
        %v423 = vld [vmem:[%s352 + $0x30] sm:$0xff]
        %v424 = vld [vmem:[%s352 + $0x38] sm:$0xff]
        %v425 = vld [vmem:[%s352 + $0x40] sm:$0xff]
        %v426 = vld [vmem:[%s352 + $0x48] sm:$0xff]
        %v427 = vld [vmem:[%s352 + $0x50] sm:$0xff]
        %v428 = vld [vmem:[%s352 + $0x58] sm:$0xff]
        %v429 = vld [vmem:[%s352 + $0x60] sm:$0xff]
        %v430 = vld [vmem:[%s352 + $0x68] sm:$0xff]
        %v431 = vld [vmem:[%s352 + $0x70] sm:$0xff]
        %v432 = vld [vmem:[%s352 + $0x78] sm:$0xff]
        %v433 = vld [vmem:[%s362] sm:$0xff]
        %v434 = vld [vmem:[%s362 + $0x8] sm:$0xff]
        %v435 = vld [vmem:[%s362 + $0x10] sm:$0xff]
        %v436 = vld [vmem:[%s362 + $0x18] sm:$0xff]
        %v437 = vld [vmem:[%s362 + $0x20] sm:$0xff]
        %v438 = vld [vmem:[%s362 + $0x28] sm:$0xff]
        %v439 = vld [vmem:[%s362 + $0x30] sm:$0xff]
        %v440 = vld [vmem:[%s362 + $0x38] sm:$0xff]
        %v441 = vld [vmem:[%s362 + $0x40] sm:$0xff]
        %v442 = vld [vmem:[%s362 + $0x48] sm:$0xff]
        %v443 = vld [vmem:[%s362 + $0x50] sm:$0xff]
        %v444 = vld [vmem:[%s362 + $0x58] sm:$0xff]
        %v445 = vld [vmem:[%s362 + $0x60] sm:$0xff]
        %v446 = vld [vmem:[%s362 + $0x68] sm:$0xff]
        %v447 = vld [vmem:[%s362 + $0x70] sm:$0xff]
        %v448 = vld [vmem:[%s362 + $0x78] sm:$0xff]
        %v449 = vlaneseq
        %v450 = vshrl.u32 %v449, 7
        %v451 = vadd.s32 %v450, 8
        %v452 = vadd.s32 %v450, 4294967294
        %v453 = vadd.s32 %v451, 4294967294
        %vm454 = vcmp.ge.s32.totalorder %v452, 0
        %vm455 = vcmp.ge.s32.totalorder %v453, 0
        %vm456 = vcmp.lt.s32.totalorder %v452, 16
        %vm457 = vcmp.lt.s32.totalorder %v453, 16
        %vm458 = vmand %vm454, %vm456
        %vm459 = vmand %vm455, %vm457
        %v460 = vsel %vm458, 1, 0
        %v461 = vsel %vm459, 1, 0
        %v462 = vcvt.s32.f32 %v460
        %v463 = vcvt.s32.f32 %v461
        %v464 = vadd.s32 %v450, 4294967295
        %v465 = vadd.s32 %v451, 4294967295
        %vm466 = vcmp.ge.s32.totalorder %v464, 0
        %vm467 = vcmp.ge.s32.totalorder %v465, 0
        %vm468 = vcmp.lt.s32.totalorder %v464, 16
        %vm469 = vcmp.lt.s32.totalorder %v465, 16
        %vm470 = vmand %vm466, %vm468
        %vm471 = vmand %vm467, %vm469
        %v472 = vsel %vm470, 1, 0
        %v473 = vsel %vm471, 1, 0
        %v474 = vcvt.s32.f32 %v472
        %v475 = vcvt.s32.f32 %v473
        %v476 = vadd.s32 %v450, 1
        %v477 = vadd.s32 %v451, 1
        %vm478 = vcmp.ge.s32.totalorder %v476, 0
        %vm479 = vcmp.ge.s32.totalorder %v477, 0
        %vm480 = vcmp.lt.s32.totalorder %v476, 16
        %vm481 = vcmp.lt.s32.totalorder %v477, 16
        %vm482 = vmand %vm478, %vm480
        %vm483 = vmand %vm479, %vm481
        %v484 = vsel %vm482, 1, 0
        %v485 = vsel %vm483, 1, 0
        %v486 = vcvt.s32.f32 %v484
        %v487 = vcvt.s32.f32 %v485
        %v488 = vadd.s32 %v450, 2
        %v489 = vadd.s32 %v451, 2
        %vm490 = vcmp.ge.s32.totalorder %v488, 0
        %vm491 = vcmp.ge.s32.totalorder %v489, 0
        %vm492 = vcmp.lt.s32.totalorder %v488, 16
        %vm493 = vcmp.lt.s32.totalorder %v489, 16
        %vm494 = vmand %vm490, %vm492
        %vm495 = vmand %vm491, %vm493
        %v496 = vsel %vm494, 1, 0
        %v497 = vsel %vm495, 1, 0
        %v498 = vcvt.s32.f32 %v496
        %v499 = vcvt.s32.f32 %v497
        %vm516 = vcmask 1041408
        %v517 = vrot.slane %v433, 6
        %v518 = vrot.slane %v434, 6
        %v519 = vsel %vm516, %v517, %v518
        %v520 = vrot.slane %v435, 6
        %v521 = vsel %vm516, %v518, %v520
        %v522 = vrot.slane %v436, 6
        %v523 = vsel %vm516, %v520, %v522
        %v524 = vrot.slane %v437, 6
        %v525 = vsel %vm516, %v522, %v524
        %v526 = vrot.slane %v438, 6
        %v527 = vsel %vm516, %v524, %v526
        %v528 = vrot.slane %v439, 6
        %v529 = vsel %vm516, %v526, %v528
        %v530 = vrot.slane %v440, 6
        %v531 = vsel %vm516, %v528, %v530
        %v532 = vrot.slane %v441, 6
        %v533 = vsel %vm516, %v530, %v532
        %v534 = vrot.slane %v442, 6
        %v535 = vsel %vm516, %v532, %v534
        %v536 = vrot.slane %v443, 6
        %v537 = vsel %vm516, %v534, %v536
        %v538 = vrot.slane %v444, 6
        %v539 = vsel %vm516, %v536, %v538
        %v540 = vrot.slane %v445, 6
        %v541 = vsel %vm516, %v538, %v540
        %v542 = vrot.slane %v446, 6
        %v543 = vsel %vm516, %v540, %v542
        %v544 = vrot.slane %v447, 6
        %v545 = vsel %vm516, %v542, %v544
        %v546 = vrot.slane %v448, 6
        %v547 = vsel %vm516, %v544, %v546
        %v565 = vsel %vm516, 0.0, %v517
        %v566 = vsel %vm516, %v546, 0.0
        %v567 = vmul.f32 %v565, %v462
        %v568 = vmul.f32 %v519, %v463
        %v569 = vmul.f32 %v521, %v462
        %v570 = vmul.f32 %v523, %v463
        %v571 = vmul.f32 %v525, %v462
        %v572 = vmul.f32 %v527, %v463
        %v573 = vmul.f32 %v529, %v462
        %v574 = vmul.f32 %v531, %v463
        %v575 = vmul.f32 %v533, %v462
        %v576 = vmul.f32 %v535, %v463
        %v577 = vmul.f32 %v537, %v462
        %v578 = vmul.f32 %v539, %v463
        %v579 = vmul.f32 %v541, %v462
        %v580 = vmul.f32 %v543, %v463
        %v581 = vmul.f32 %v545, %v462
        %v582 = vmul.f32 %v547, %v463
        %v583 = vld [vmem:[#allocation8] sm:$0xff]
        %v584 = vld [vmem:[#allocation8 + $0x8] sm:$0xff]
        %v585 = vld [vmem:[#allocation8 + $0x10] sm:$0xff]
        %v586 = vld [vmem:[#allocation8 + $0x18] sm:$0xff]
        %v587 = vld [vmem:[#allocation8 + $0x20] sm:$0xff]
        %v588 = vld [vmem:[#allocation8 + $0x28] sm:$0xff]
        %vm591 = vcmask 1040384
        %v592 = vrot.slane %v474, 7
        %v593 = vrot.slane %v475, 7
        %v594 = vsel %vm591, %v592, %v593
        %v595 = vsel %vm591, %v593, %v592
        %v600 = vmul.f32 %v565, %v592
        %v601 = vmul.f32 %v519, %v594
        %v602 = vmul.f32 %v521, %v595
        %v603 = vmul.f32 %v523, %v594
        %v604 = vmul.f32 %v525, %v595
        %v605 = vmul.f32 %v527, %v594
        %v606 = vmul.f32 %v529, %v595
        %v607 = vmul.f32 %v531, %v594
        %v608 = vmul.f32 %v533, %v595
        %v609 = vmul.f32 %v535, %v594
        %v610 = vmul.f32 %v537, %v595
        %v611 = vmul.f32 %v539, %v594
        %v612 = vmul.f32 %v541, %v595
        %v613 = vmul.f32 %v543, %v594
        %v614 = vmul.f32 %v545, %v595
        %v615 = vmul.f32 %v547, %v594
        %v616 = vmul.f32 %v566, %v593
        %s617 = scalar_lea.vmem [#allocation8], 48
        %v618 = vld [vmem:[%s617] sm:$0xff]
        %v619 = vld [vmem:[%s617 + $0x8] sm:$0xff]
        %v620 = vld [vmem:[%s617 + $0x10] sm:$0xff]
        %v621 = vld [vmem:[%s617 + $0x18] sm:$0xff]
        %v622 = vld [vmem:[%s617 + $0x20] sm:$0xff]
        %v623 = vld [vmem:[%s617 + $0x28] sm:$0xff]
        %vm641 = vcmask 1046528
        %v642 = vrot.slane %v600, 1
        %v643 = vrot.slane %v601, 1
        %v644 = vsel %vm641, %v642, %v643
        %v645 = vrot.slane %v602, 1
        %v646 = vsel %vm641, %v643, %v645
        %v647 = vrot.slane %v603, 1
        %v648 = vsel %vm641, %v645, %v647
        %v649 = vrot.slane %v604, 1
        %v650 = vsel %vm641, %v647, %v649
        %v651 = vrot.slane %v605, 1
        %v652 = vsel %vm641, %v649, %v651
        %v653 = vrot.slane %v606, 1
        %v654 = vsel %vm641, %v651, %v653
        %v655 = vrot.slane %v607, 1
        %v656 = vsel %vm641, %v653, %v655
        %v657 = vrot.slane %v608, 1
        %v658 = vsel %vm641, %v655, %v657
        %v659 = vrot.slane %v609, 1
        %v660 = vsel %vm641, %v657, %v659
        %v661 = vrot.slane %v610, 1
        %v662 = vsel %vm641, %v659, %v661
        %v663 = vrot.slane %v611, 1
        %v664 = vsel %vm641, %v661, %v663
        %v665 = vrot.slane %v612, 1
        %v666 = vsel %vm641, %v663, %v665
        %v667 = vrot.slane %v613, 1
        %v668 = vsel %vm641, %v665, %v667
        %v669 = vrot.slane %v614, 1
        %v670 = vsel %vm641, %v667, %v669
        %v671 = vrot.slane %v615, 1
        %v672 = vsel %vm641, %v669, %v671
        %v673 = vrot.slane %v616, 1
        %v674 = vsel %vm641, %v671, %v673
        %vm675 = vcmask 392192
        %v676 = vsel %vm675, %v644, 0
        %v678 = vsel %vm675, %v646, 0
        %v680 = vsel %vm675, %v648, 0
        %v682 = vsel %vm675, %v650, 0
        %v684 = vsel %vm675, %v652, 0
        %v686 = vsel %vm675, %v654, 0
        %v688 = vsel %vm675, %v656, 0
        %v690 = vsel %vm675, %v658, 0
        %v692 = vsel %vm675, %v660, 0
        %v694 = vsel %vm675, %v662, 0
        %v696 = vsel %vm675, %v664, 0
        %v698 = vsel %vm675, %v666, 0
        %v700 = vsel %vm675, %v668, 0
        %v702 = vsel %vm675, %v670, 0
        %v704 = vsel %vm675, %v672, 0
        %v706 = vsel %vm675, %v674, 0
        %708 = vmatpush.msra.mxu0 0.0
        %709 = vmatpush.msra.mxu0 0.0
        %710 = vmatpush.msra.mxu0 0.0
        %711 = vmatpush.msra.mxu0 0.0
        %712 = vmatpush.msra.mxu0 0.0
        %713 = vmatpush.msra.mxu0 0.0
        %714 = vmatpush.msra.mxu0 0.0
        %715 = vmatpush.msra.mxu0 0.0
        %716 = vmatpush.msra.mxu0 0.0
        %717 = vmatpush.msra.mxu0 0.0
        %718 = vmatpush.msra.mxu0 %v623
        %719 = vmatpush.msra.mxu0 %v622
        %720 = vmatpush.msra.mxu0 %v621
        %721 = vmatpush.msra.mxu0 %v620
        %722 = vmatpush.msra.mxu0 %v619
        %723 = vmatpush.msra.mxu0 %v618
        %724 = vmatmul.f32.gmra.mxu0 %v676
        %v725 = vpop.f32.mrf.mxu0
        %v726 = vadd.f32 0.0, %v725
        %727 = vmatmul.f32.gmra.mxu0 %v678
        %v728 = vpop.f32.mrf.mxu0
        %v729 = vadd.f32 0.0, %v728
        %730 = vmatmul.f32.gmra.mxu0 %v680
        %v731 = vpop.f32.mrf.mxu0
        %v732 = vadd.f32 0.0, %v731
        %733 = vmatmul.f32.gmra.mxu0 %v682
        %v734 = vpop.f32.mrf.mxu0
        %v735 = vadd.f32 0.0, %v734
        %736 = vmatmul.f32.gmra.mxu0 %v684
        %v737 = vpop.f32.mrf.mxu0
        %v738 = vadd.f32 0.0, %v737
        %739 = vmatmul.f32.gmra.mxu0 %v686
        %v740 = vpop.f32.mrf.mxu0
        %v741 = vadd.f32 0.0, %v740
        %742 = vmatmul.f32.gmra.mxu0 %v688
        %v743 = vpop.f32.mrf.mxu0
        %v744 = vadd.f32 0.0, %v743
        %745 = vmatmul.f32.gmra.mxu0 %v690
        %v746 = vpop.f32.mrf.mxu0
        %v747 = vadd.f32 0.0, %v746
        %748 = vmatmul.f32.gmra.mxu0 %v692
        %v749 = vpop.f32.mrf.mxu0
        %v750 = vadd.f32 0.0, %v749
        %751 = vmatmul.f32.gmra.mxu0 %v694
        %v752 = vpop.f32.mrf.mxu0
        %v753 = vadd.f32 0.0, %v752
        %754 = vmatmul.f32.gmra.mxu0 %v696
        %v755 = vpop.f32.mrf.mxu0
        %v756 = vadd.f32 0.0, %v755
        %757 = vmatmul.f32.gmra.mxu0 %v698
        %v758 = vpop.f32.mrf.mxu0
        %v759 = vadd.f32 0.0, %v758
        %760 = vmatmul.f32.gmra.mxu0 %v700
        %v761 = vpop.f32.mrf.mxu0
        %v762 = vadd.f32 0.0, %v761
        %763 = vmatmul.f32.gmra.mxu0 %v702
        %v764 = vpop.f32.mrf.mxu0
        %v765 = vadd.f32 0.0, %v764
        %766 = vmatmul.f32.gmra.mxu0 %v704
        %v767 = vpop.f32.mrf.mxu0
        %v768 = vadd.f32 0.0, %v767
        %769 = vmatmul.f32.gmra.mxu0 %v706
        %v770 = vpop.f32.mrf.mxu0
        %v771 = vadd.f32 0.0, %v770
        %772 = vdwg.mxu0
        %v774 = vsel %vm675, %v567, 0
        %v777 = vsel %vm675, %v568, 0
        %v780 = vsel %vm675, %v569, 0
        %v783 = vsel %vm675, %v570, 0
        %v786 = vsel %vm675, %v571, 0
        %v789 = vsel %vm675, %v572, 0
        %v792 = vsel %vm675, %v573, 0
        %v795 = vsel %vm675, %v574, 0
        %v798 = vsel %vm675, %v575, 0
        %v801 = vsel %vm675, %v576, 0
        %v804 = vsel %vm675, %v577, 0
        %v807 = vsel %vm675, %v578, 0
        %v810 = vsel %vm675, %v579, 0
        %v813 = vsel %vm675, %v580, 0
        %v816 = vsel %vm675, %v581, 0
        %v819 = vsel %vm675, %v582, 0
        %821 = vmatpush.msra.mxu0 0.0
        %822 = vmatpush.msra.mxu0 0.0
        %823 = vmatpush.msra.mxu0 0.0
        %824 = vmatpush.msra.mxu0 0.0
        %825 = vmatpush.msra.mxu0 0.0
        %826 = vmatpush.msra.mxu0 0.0
        %827 = vmatpush.msra.mxu0 0.0
        %828 = vmatpush.msra.mxu0 0.0
        %829 = vmatpush.msra.mxu0 0.0
        %830 = vmatpush.msra.mxu0 0.0
        %831 = vmatpush.msra.mxu0 %v588
        %832 = vmatpush.msra.mxu0 %v587
        %833 = vmatpush.msra.mxu0 %v586
        %834 = vmatpush.msra.mxu0 %v585
        %835 = vmatpush.msra.mxu0 %v584
        %836 = vmatpush.msra.mxu0 %v583
        %837 = vmatmul.f32.gmra.mxu0 %v774
        %v838 = vpop.f32.mrf.mxu0
        %v839 = vadd.f32 %v726, %v838
        %840 = vmatmul.f32.gmra.mxu0 %v777
        %v841 = vpop.f32.mrf.mxu0
        %v842 = vadd.f32 %v729, %v841
        %843 = vmatmul.f32.gmra.mxu0 %v780
        %v844 = vpop.f32.mrf.mxu0
        %v845 = vadd.f32 %v732, %v844
        %846 = vmatmul.f32.gmra.mxu0 %v783
        %v847 = vpop.f32.mrf.mxu0
        %v848 = vadd.f32 %v735, %v847
        %849 = vmatmul.f32.gmra.mxu0 %v786
        %v850 = vpop.f32.mrf.mxu0
        %v851 = vadd.f32 %v738, %v850
        %852 = vmatmul.f32.gmra.mxu0 %v789
        %v853 = vpop.f32.mrf.mxu0
        %v854 = vadd.f32 %v741, %v853
        %855 = vmatmul.f32.gmra.mxu0 %v792
        %v856 = vpop.f32.mrf.mxu0
        %v857 = vadd.f32 %v744, %v856
        %858 = vmatmul.f32.gmra.mxu0 %v795
        %v859 = vpop.f32.mrf.mxu0
        %v860 = vadd.f32 %v747, %v859
        %861 = vmatmul.f32.gmra.mxu0 %v798
        %v862 = vpop.f32.mrf.mxu0
        %v863 = vadd.f32 %v750, %v862
        %864 = vmatmul.f32.gmra.mxu0 %v801
        %v865 = vpop.f32.mrf.mxu0
        %v866 = vadd.f32 %v753, %v865
        %867 = vmatmul.f32.gmra.mxu0 %v804
        %v868 = vpop.f32.mrf.mxu0
        %v869 = vadd.f32 %v756, %v868
        %870 = vmatmul.f32.gmra.mxu0 %v807
        %v871 = vpop.f32.mrf.mxu0
        %v872 = vadd.f32 %v759, %v871
        %873 = vmatmul.f32.gmra.mxu0 %v810
        %v874 = vpop.f32.mrf.mxu0
        %v875 = vadd.f32 %v762, %v874
        %876 = vmatmul.f32.gmra.mxu0 %v813
        %v877 = vpop.f32.mrf.mxu0
        %v878 = vadd.f32 %v765, %v877
        %879 = vmatmul.f32.gmra.mxu0 %v816
        %v880 = vpop.f32.mrf.mxu0
        %v881 = vadd.f32 %v768, %v880
        %882 = vmatmul.f32.gmra.mxu0 %v819
        %v883 = vpop.f32.mrf.mxu0
        %v884 = vadd.f32 %v771, %v883
        %885 = vdwg.mxu0
        %s886 = scalar_lea.vmem [#allocation8], 96
        %v887 = vld [vmem:[%s886] sm:$0xff]
        %v888 = vld [vmem:[%s886 + $0x8] sm:$0xff]
        %v889 = vld [vmem:[%s886 + $0x10] sm:$0xff]
        %v890 = vld [vmem:[%s886 + $0x18] sm:$0xff]
        %v891 = vld [vmem:[%s886 + $0x20] sm:$0xff]
        %v892 = vld [vmem:[%s886 + $0x28] sm:$0xff]
        %vm895 = vcmask 1045504
        %v896 = vrot.slane %v565, 2
        %v897 = vrot.slane %v519, 2
        %v898 = vsel %vm895, %v896, %v897
        %v899 = vrot.slane %v521, 2
        %v900 = vsel %vm895, %v897, %v899
        %v901 = vrot.slane %v523, 2
        %v902 = vsel %vm895, %v899, %v901
        %v903 = vrot.slane %v525, 2
        %v904 = vsel %vm895, %v901, %v903
        %v905 = vrot.slane %v527, 2
        %v906 = vsel %vm895, %v903, %v905
        %v907 = vrot.slane %v529, 2
        %v908 = vsel %vm895, %v905, %v907
        %v909 = vrot.slane %v531, 2
        %v910 = vsel %vm895, %v907, %v909
        %v911 = vrot.slane %v533, 2
        %v912 = vsel %vm895, %v909, %v911
        %v913 = vrot.slane %v535, 2
        %v914 = vsel %vm895, %v911, %v913
        %v915 = vrot.slane %v537, 2
        %v916 = vsel %vm895, %v913, %v915
        %v917 = vrot.slane %v539, 2
        %v918 = vsel %vm895, %v915, %v917
        %v919 = vrot.slane %v541, 2
        %v920 = vsel %vm895, %v917, %v919
        %v921 = vrot.slane %v543, 2
        %v922 = vsel %vm895, %v919, %v921
        %v923 = vrot.slane %v545, 2
        %v924 = vsel %vm895, %v921, %v923
        %v925 = vrot.slane %v547, 2
        %v926 = vsel %vm895, %v923, %v925
        %v927 = vrot.slane %v566, 2
        %v928 = vsel %vm895, %v925, %v927
        %v929 = vsel %vm675, %v898, 0
        %v931 = vsel %vm675, %v900, 0
        %v933 = vsel %vm675, %v902, 0
        %v935 = vsel %vm675, %v904, 0
        %v937 = vsel %vm675, %v906, 0
        %v939 = vsel %vm675, %v908, 0
        %v941 = vsel %vm675, %v910, 0
        %v943 = vsel %vm675, %v912, 0
        %v945 = vsel %vm675, %v914, 0
        %v947 = vsel %vm675, %v916, 0
        %v949 = vsel %vm675, %v918, 0
        %v951 = vsel %vm675, %v920, 0
        %v953 = vsel %vm675, %v922, 0
        %v955 = vsel %vm675, %v924, 0
        %v957 = vsel %vm675, %v926, 0
        %v959 = vsel %vm675, %v928, 0
        %961 = vmatpush.msra.mxu0 0.0
        %962 = vmatpush.msra.mxu0 0.0
        %963 = vmatpush.msra.mxu0 0.0
        %964 = vmatpush.msra.mxu0 0.0
        %965 = vmatpush.msra.mxu0 0.0
        %966 = vmatpush.msra.mxu0 0.0
        %967 = vmatpush.msra.mxu0 0.0
        %968 = vmatpush.msra.mxu0 0.0
        %969 = vmatpush.msra.mxu0 0.0
        %970 = vmatpush.msra.mxu0 0.0
        %971 = vmatpush.msra.mxu0 %v892
        %972 = vmatpush.msra.mxu0 %v891
        %973 = vmatpush.msra.mxu0 %v890
        %974 = vmatpush.msra.mxu0 %v889
        %975 = vmatpush.msra.mxu0 %v888
        %976 = vmatpush.msra.mxu0 %v887
        %977 = vmatmul.f32.gmra.mxu0 %v929
        %v978 = vpop.f32.mrf.mxu0
        %v979 = vadd.f32 0.0, %v978
        %980 = vmatmul.f32.gmra.mxu0 %v931
        %v981 = vpop.f32.mrf.mxu0
        %v982 = vadd.f32 0.0, %v981
        %983 = vmatmul.f32.gmra.mxu0 %v933
        %v984 = vpop.f32.mrf.mxu0
        %v985 = vadd.f32 0.0, %v984
        %986 = vmatmul.f32.gmra.mxu0 %v935
        %v987 = vpop.f32.mrf.mxu0
        %v988 = vadd.f32 0.0, %v987
        %989 = vmatmul.f32.gmra.mxu0 %v937
        %v990 = vpop.f32.mrf.mxu0
        %v991 = vadd.f32 0.0, %v990
        %992 = vmatmul.f32.gmra.mxu0 %v939
        %v993 = vpop.f32.mrf.mxu0
        %v994 = vadd.f32 0.0, %v993
        %995 = vmatmul.f32.gmra.mxu0 %v941
        %v996 = vpop.f32.mrf.mxu0
        %v997 = vadd.f32 0.0, %v996
        %998 = vmatmul.f32.gmra.mxu0 %v943
        %v999 = vpop.f32.mrf.mxu0
        %v1000 = vadd.f32 0.0, %v999
        %1001 = vmatmul.f32.gmra.mxu0 %v945
        %v1002 = vpop.f32.mrf.mxu0
        %v1003 = vadd.f32 0.0, %v1002
        %1004 = vmatmul.f32.gmra.mxu0 %v947
        %v1005 = vpop.f32.mrf.mxu0
        %v1006 = vadd.f32 0.0, %v1005
        %1007 = vmatmul.f32.gmra.mxu0 %v949
        %v1008 = vpop.f32.mrf.mxu0
        %v1009 = vadd.f32 0.0, %v1008
        %1010 = vmatmul.f32.gmra.mxu0 %v951
        %v1011 = vpop.f32.mrf.mxu0
        %v1012 = vadd.f32 0.0, %v1011
        %1013 = vmatmul.f32.gmra.mxu0 %v953
        %v1014 = vpop.f32.mrf.mxu0
        %v1015 = vadd.f32 0.0, %v1014
        %1016 = vmatmul.f32.gmra.mxu0 %v955
        %v1017 = vpop.f32.mrf.mxu0
        %v1018 = vadd.f32 0.0, %v1017
        %1019 = vmatmul.f32.gmra.mxu0 %v957
        %v1020 = vpop.f32.mrf.mxu0
        %v1021 = vadd.f32 0.0, %v1020
        %1022 = vmatmul.f32.gmra.mxu0 %v959
        %v1023 = vpop.f32.mrf.mxu0
        %v1024 = vadd.f32 0.0, %v1023
        %1025 = vdwg.mxu0
        %v1026 = vadd.f32 %v839, %v979
        %v1027 = vadd.f32 %v842, %v982
        %v1028 = vadd.f32 %v845, %v985
        %v1029 = vadd.f32 %v848, %v988
        %v1030 = vadd.f32 %v851, %v991
        %v1031 = vadd.f32 %v854, %v994
        %v1032 = vadd.f32 %v857, %v997
        %v1033 = vadd.f32 %v860, %v1000
        %v1034 = vadd.f32 %v863, %v1003
        %v1035 = vadd.f32 %v866, %v1006
        %v1036 = vadd.f32 %v869, %v1009
        %v1037 = vadd.f32 %v872, %v1012
        %v1038 = vadd.f32 %v875, %v1015
        %v1039 = vadd.f32 %v878, %v1018
        %v1040 = vadd.f32 %v881, %v1021
        %v1041 = vadd.f32 %v884, %v1024
        %vm1044 = vcmask 1042432
        %v1045 = vrot.slane %v486, 5
        %v1046 = vrot.slane %v487, 5
        %v1047 = vsel %vm1044, %v1045, %v1046
        %v1048 = vsel %vm1044, %v1046, %v1045
        %v1053 = vmul.f32 %v565, %v1045
        %v1054 = vmul.f32 %v519, %v1047
        %v1055 = vmul.f32 %v521, %v1048
        %v1056 = vmul.f32 %v523, %v1047
        %v1057 = vmul.f32 %v525, %v1048
        %v1058 = vmul.f32 %v527, %v1047
        %v1059 = vmul.f32 %v529, %v1048
        %v1060 = vmul.f32 %v531, %v1047
        %v1061 = vmul.f32 %v533, %v1048
        %v1062 = vmul.f32 %v535, %v1047
        %v1063 = vmul.f32 %v537, %v1048
        %v1064 = vmul.f32 %v539, %v1047
        %v1065 = vmul.f32 %v541, %v1048
        %v1066 = vmul.f32 %v543, %v1047
        %v1067 = vmul.f32 %v545, %v1048
        %v1068 = vmul.f32 %v547, %v1047
        %v1069 = vmul.f32 %v566, %v1046
        %s1070 = scalar_lea.vmem [#allocation8], 144
        %v1071 = vld [vmem:[%s1070] sm:$0xff]
        %v1072 = vld [vmem:[%s1070 + $0x8] sm:$0xff]
        %v1073 = vld [vmem:[%s1070 + $0x10] sm:$0xff]
        %v1074 = vld [vmem:[%s1070 + $0x18] sm:$0xff]
        %v1075 = vld [vmem:[%s1070 + $0x20] sm:$0xff]
        %v1076 = vld [vmem:[%s1070 + $0x28] sm:$0xff]
        %vm1094 = vcmask 1044480
        %v1095 = vrot.slane %v1053, 3
        %v1096 = vrot.slane %v1054, 3
        %v1097 = vsel %vm1094, %v1095, %v1096
        %v1098 = vrot.slane %v1055, 3
        %v1099 = vsel %vm1094, %v1096, %v1098
        %v1100 = vrot.slane %v1056, 3
        %v1101 = vsel %vm1094, %v1098, %v1100
        %v1102 = vrot.slane %v1057, 3
        %v1103 = vsel %vm1094, %v1100, %v1102
        %v1104 = vrot.slane %v1058, 3
        %v1105 = vsel %vm1094, %v1102, %v1104
        %v1106 = vrot.slane %v1059, 3
        %v1107 = vsel %vm1094, %v1104, %v1106
        %v1108 = vrot.slane %v1060, 3
        %v1109 = vsel %vm1094, %v1106, %v1108
        %v1110 = vrot.slane %v1061, 3
        %v1111 = vsel %vm1094, %v1108, %v1110
        %v1112 = vrot.slane %v1062, 3
        %v1113 = vsel %vm1094, %v1110, %v1112
        %v1114 = vrot.slane %v1063, 3
        %v1115 = vsel %vm1094, %v1112, %v1114
        %v1116 = vrot.slane %v1064, 3
        %v1117 = vsel %vm1094, %v1114, %v1116
        %v1118 = vrot.slane %v1065, 3
        %v1119 = vsel %vm1094, %v1116, %v1118
        %v1120 = vrot.slane %v1066, 3
        %v1121 = vsel %vm1094, %v1118, %v1120
        %v1122 = vrot.slane %v1067, 3
        %v1123 = vsel %vm1094, %v1120, %v1122
        %v1124 = vrot.slane %v1068, 3
        %v1125 = vsel %vm1094, %v1122, %v1124
        %v1126 = vrot.slane %v1069, 3
        %v1127 = vsel %vm1094, %v1124, %v1126
        %v1128 = vsel %vm675, %v1097, 0
        %v1130 = vsel %vm675, %v1099, 0
        %v1132 = vsel %vm675, %v1101, 0
        %v1134 = vsel %vm675, %v1103, 0
        %v1136 = vsel %vm675, %v1105, 0
        %v1138 = vsel %vm675, %v1107, 0
        %v1140 = vsel %vm675, %v1109, 0
        %v1142 = vsel %vm675, %v1111, 0
        %v1144 = vsel %vm675, %v1113, 0
        %v1146 = vsel %vm675, %v1115, 0
        %v1148 = vsel %vm675, %v1117, 0
        %v1150 = vsel %vm675, %v1119, 0
        %v1152 = vsel %vm675, %v1121, 0
        %v1154 = vsel %vm675, %v1123, 0
        %v1156 = vsel %vm675, %v1125, 0
        %v1158 = vsel %vm675, %v1127, 0
        %1160 = vmatpush.msra.mxu0 0.0
        %1161 = vmatpush.msra.mxu0 0.0
        %1162 = vmatpush.msra.mxu0 0.0
        %1163 = vmatpush.msra.mxu0 0.0
        %1164 = vmatpush.msra.mxu0 0.0
        %1165 = vmatpush.msra.mxu0 0.0
        %1166 = vmatpush.msra.mxu0 0.0
        %1167 = vmatpush.msra.mxu0 0.0
        %1168 = vmatpush.msra.mxu0 0.0
        %1169 = vmatpush.msra.mxu0 0.0
        %1170 = vmatpush.msra.mxu0 %v1076
        %1171 = vmatpush.msra.mxu0 %v1075
        %1172 = vmatpush.msra.mxu0 %v1074
        %1173 = vmatpush.msra.mxu0 %v1073
        %1174 = vmatpush.msra.mxu0 %v1072
        %1175 = vmatpush.msra.mxu0 %v1071
        %1176 = vmatmul.f32.gmra.mxu0 %v1128
        %v1177 = vpop.f32.mrf.mxu0
        %v1178 = vadd.f32 0.0, %v1177
        %1179 = vmatmul.f32.gmra.mxu0 %v1130
        %v1180 = vpop.f32.mrf.mxu0
        %v1181 = vadd.f32 0.0, %v1180
        %1182 = vmatmul.f32.gmra.mxu0 %v1132
        %v1183 = vpop.f32.mrf.mxu0
        %v1184 = vadd.f32 0.0, %v1183
        %1185 = vmatmul.f32.gmra.mxu0 %v1134
        %v1186 = vpop.f32.mrf.mxu0
        %v1187 = vadd.f32 0.0, %v1186
        %1188 = vmatmul.f32.gmra.mxu0 %v1136
        %v1189 = vpop.f32.mrf.mxu0
        %v1190 = vadd.f32 0.0, %v1189
        %1191 = vmatmul.f32.gmra.mxu0 %v1138
        %v1192 = vpop.f32.mrf.mxu0
        %v1193 = vadd.f32 0.0, %v1192
        %1194 = vmatmul.f32.gmra.mxu0 %v1140
        %v1195 = vpop.f32.mrf.mxu0
        %v1196 = vadd.f32 0.0, %v1195
        %1197 = vmatmul.f32.gmra.mxu0 %v1142
        %v1198 = vpop.f32.mrf.mxu0
        %v1199 = vadd.f32 0.0, %v1198
        %1200 = vmatmul.f32.gmra.mxu0 %v1144
        %v1201 = vpop.f32.mrf.mxu0
        %v1202 = vadd.f32 0.0, %v1201
        %1203 = vmatmul.f32.gmra.mxu0 %v1146
        %v1204 = vpop.f32.mrf.mxu0
        %v1205 = vadd.f32 0.0, %v1204
        %1206 = vmatmul.f32.gmra.mxu0 %v1148
        %v1207 = vpop.f32.mrf.mxu0
        %v1208 = vadd.f32 0.0, %v1207
        %1209 = vmatmul.f32.gmra.mxu0 %v1150
        %v1210 = vpop.f32.mrf.mxu0
        %v1211 = vadd.f32 0.0, %v1210
        %1212 = vmatmul.f32.gmra.mxu0 %v1152
        %v1213 = vpop.f32.mrf.mxu0
        %v1214 = vadd.f32 0.0, %v1213
        %1215 = vmatmul.f32.gmra.mxu0 %v1154
        %v1216 = vpop.f32.mrf.mxu0
        %v1217 = vadd.f32 0.0, %v1216
        %1218 = vmatmul.f32.gmra.mxu0 %v1156
        %v1219 = vpop.f32.mrf.mxu0
        %v1220 = vadd.f32 0.0, %v1219
        %1221 = vmatmul.f32.gmra.mxu0 %v1158
        %v1222 = vpop.f32.mrf.mxu0
        %v1223 = vadd.f32 0.0, %v1222
        %1224 = vdwg.mxu0
        %v1225 = vadd.f32 %v1026, %v1178
        %v1226 = vadd.f32 %v1027, %v1181
        %v1227 = vadd.f32 %v1028, %v1184
        %v1228 = vadd.f32 %v1029, %v1187
        %v1229 = vadd.f32 %v1030, %v1190
        %v1230 = vadd.f32 %v1031, %v1193
        %v1231 = vadd.f32 %v1032, %v1196
        %v1232 = vadd.f32 %v1033, %v1199
        %v1233 = vadd.f32 %v1034, %v1202
        %v1234 = vadd.f32 %v1035, %v1205
        %v1235 = vadd.f32 %v1036, %v1208
        %v1236 = vadd.f32 %v1037, %v1211
        %v1237 = vadd.f32 %v1038, %v1214
        %v1238 = vadd.f32 %v1039, %v1217
        %v1239 = vadd.f32 %v1040, %v1220
        %v1240 = vadd.f32 %v1041, %v1223
        %vm1243 = vcmask 1043456
        %v1244 = vrot.slane %v498, 4
        %v1245 = vrot.slane %v499, 4
        %v1246 = vsel %vm1243, %v1244, %v1245
        %v1247 = vsel %vm1243, %v1245, %v1244
        %v1252 = vmul.f32 %v565, %v1244
        %v1253 = vmul.f32 %v519, %v1246
        %v1254 = vmul.f32 %v521, %v1247
        %v1255 = vmul.f32 %v523, %v1246
        %v1256 = vmul.f32 %v525, %v1247
        %v1257 = vmul.f32 %v527, %v1246
        %v1258 = vmul.f32 %v529, %v1247
        %v1259 = vmul.f32 %v531, %v1246
        %v1260 = vmul.f32 %v533, %v1247
        %v1261 = vmul.f32 %v535, %v1246
        %v1262 = vmul.f32 %v537, %v1247
        %v1263 = vmul.f32 %v539, %v1246
        %v1264 = vmul.f32 %v541, %v1247
        %v1265 = vmul.f32 %v543, %v1246
        %v1266 = vmul.f32 %v545, %v1247
        %v1267 = vmul.f32 %v547, %v1246
        %v1268 = vmul.f32 %v566, %v1245
        %s1269 = scalar_lea.vmem [#allocation8], 192
        %v1270 = vld [vmem:[%s1269] sm:$0xff]
        %v1271 = vld [vmem:[%s1269 + $0x8] sm:$0xff]
        %v1272 = vld [vmem:[%s1269 + $0x10] sm:$0xff]
        %v1273 = vld [vmem:[%s1269 + $0x18] sm:$0xff]
        %v1274 = vld [vmem:[%s1269 + $0x20] sm:$0xff]
        %v1275 = vld [vmem:[%s1269 + $0x28] sm:$0xff]
        %v1293 = vrot.slane %v1252, 4
        %v1294 = vrot.slane %v1253, 4
        %v1295 = vsel %vm1243, %v1293, %v1294
        %v1296 = vrot.slane %v1254, 4
        %v1297 = vsel %vm1243, %v1294, %v1296
        %v1298 = vrot.slane %v1255, 4
        %v1299 = vsel %vm1243, %v1296, %v1298
        %v1300 = vrot.slane %v1256, 4
        %v1301 = vsel %vm1243, %v1298, %v1300
        %v1302 = vrot.slane %v1257, 4
        %v1303 = vsel %vm1243, %v1300, %v1302
        %v1304 = vrot.slane %v1258, 4
        %v1305 = vsel %vm1243, %v1302, %v1304
        %v1306 = vrot.slane %v1259, 4
        %v1307 = vsel %vm1243, %v1304, %v1306
        %v1308 = vrot.slane %v1260, 4
        %v1309 = vsel %vm1243, %v1306, %v1308
        %v1310 = vrot.slane %v1261, 4
        %v1311 = vsel %vm1243, %v1308, %v1310
        %v1312 = vrot.slane %v1262, 4
        %v1313 = vsel %vm1243, %v1310, %v1312
        %v1314 = vrot.slane %v1263, 4
        %v1315 = vsel %vm1243, %v1312, %v1314
        %v1316 = vrot.slane %v1264, 4
        %v1317 = vsel %vm1243, %v1314, %v1316
        %v1318 = vrot.slane %v1265, 4
        %v1319 = vsel %vm1243, %v1316, %v1318
        %v1320 = vrot.slane %v1266, 4
        %v1321 = vsel %vm1243, %v1318, %v1320
        %v1322 = vrot.slane %v1267, 4
        %v1323 = vsel %vm1243, %v1320, %v1322
        %v1324 = vrot.slane %v1268, 4
        %v1325 = vsel %vm1243, %v1322, %v1324
        %v1326 = vsel %vm675, %v1295, 0
        %v1328 = vsel %vm675, %v1297, 0
        %v1330 = vsel %vm675, %v1299, 0
        %v1332 = vsel %vm675, %v1301, 0
        %v1334 = vsel %vm675, %v1303, 0
        %v1336 = vsel %vm675, %v1305, 0
        %v1338 = vsel %vm675, %v1307, 0
        %v1340 = vsel %vm675, %v1309, 0
        %v1342 = vsel %vm675, %v1311, 0
        %v1344 = vsel %vm675, %v1313, 0
        %v1346 = vsel %vm675, %v1315, 0
        %v1348 = vsel %vm675, %v1317, 0
        %v1350 = vsel %vm675, %v1319, 0
        %v1352 = vsel %vm675, %v1321, 0
        %v1354 = vsel %vm675, %v1323, 0
        %v1356 = vsel %vm675, %v1325, 0
        %1358 = vmatpush.msra.mxu0 0.0
        %1359 = vmatpush.msra.mxu0 0.0
        %1360 = vmatpush.msra.mxu0 0.0
        %1361 = vmatpush.msra.mxu0 0.0
        %1362 = vmatpush.msra.mxu0 0.0
        %1363 = vmatpush.msra.mxu0 0.0
        %1364 = vmatpush.msra.mxu0 0.0
        %1365 = vmatpush.msra.mxu0 0.0
        %1366 = vmatpush.msra.mxu0 0.0
        %1367 = vmatpush.msra.mxu0 0.0
        %1368 = vmatpush.msra.mxu0 %v1275
        %1369 = vmatpush.msra.mxu0 %v1274
        %1370 = vmatpush.msra.mxu0 %v1273
        %1371 = vmatpush.msra.mxu0 %v1272
        %1372 = vmatpush.msra.mxu0 %v1271
        %1373 = vmatpush.msra.mxu0 %v1270
        %1374 = vmatmul.f32.gmra.mxu0 %v1326
        %v1375 = vpop.f32.mrf.mxu0
        %v1376 = vadd.f32 0.0, %v1375
        %1377 = vmatmul.f32.gmra.mxu0 %v1328
        %v1378 = vpop.f32.mrf.mxu0
        %v1379 = vadd.f32 0.0, %v1378
        %1380 = vmatmul.f32.gmra.mxu0 %v1330
        %v1381 = vpop.f32.mrf.mxu0
        %v1382 = vadd.f32 0.0, %v1381
        %1383 = vmatmul.f32.gmra.mxu0 %v1332
        %v1384 = vpop.f32.mrf.mxu0
        %v1385 = vadd.f32 0.0, %v1384
        %1386 = vmatmul.f32.gmra.mxu0 %v1334
        %v1387 = vpop.f32.mrf.mxu0
        %v1388 = vadd.f32 0.0, %v1387
        %1389 = vmatmul.f32.gmra.mxu0 %v1336
        %v1390 = vpop.f32.mrf.mxu0
        %v1391 = vadd.f32 0.0, %v1390
        %1392 = vmatmul.f32.gmra.mxu0 %v1338
        %v1393 = vpop.f32.mrf.mxu0
        %v1394 = vadd.f32 0.0, %v1393
        %1395 = vmatmul.f32.gmra.mxu0 %v1340
        %v1396 = vpop.f32.mrf.mxu0
        %v1397 = vadd.f32 0.0, %v1396
        %1398 = vmatmul.f32.gmra.mxu0 %v1342
        %v1399 = vpop.f32.mrf.mxu0
        %v1400 = vadd.f32 0.0, %v1399
        %1401 = vmatmul.f32.gmra.mxu0 %v1344
        %v1402 = vpop.f32.mrf.mxu0
        %v1403 = vadd.f32 0.0, %v1402
        %1404 = vmatmul.f32.gmra.mxu0 %v1346
        %v1405 = vpop.f32.mrf.mxu0
        %v1406 = vadd.f32 0.0, %v1405
        %1407 = vmatmul.f32.gmra.mxu0 %v1348
        %v1408 = vpop.f32.mrf.mxu0
        %v1409 = vadd.f32 0.0, %v1408
        %1410 = vmatmul.f32.gmra.mxu0 %v1350
        %v1411 = vpop.f32.mrf.mxu0
        %v1412 = vadd.f32 0.0, %v1411
        %1413 = vmatmul.f32.gmra.mxu0 %v1352
        %v1414 = vpop.f32.mrf.mxu0
        %v1415 = vadd.f32 0.0, %v1414
        %1416 = vmatmul.f32.gmra.mxu0 %v1354
        %v1417 = vpop.f32.mrf.mxu0
        %v1418 = vadd.f32 0.0, %v1417
        %1419 = vmatmul.f32.gmra.mxu0 %v1356
        %v1420 = vpop.f32.mrf.mxu0
        %v1421 = vadd.f32 0.0, %v1420
        %1422 = vdwg.mxu0
        %v1423 = vadd.f32 %v1225, %v1376
        %v1424 = vadd.f32 %v1226, %v1379
        %v1425 = vadd.f32 %v1227, %v1382
        %v1426 = vadd.f32 %v1228, %v1385
        %v1427 = vadd.f32 %v1229, %v1388
        %v1428 = vadd.f32 %v1230, %v1391
        %v1429 = vadd.f32 %v1231, %v1394
        %v1430 = vadd.f32 %v1232, %v1397
        %v1431 = vadd.f32 %v1233, %v1400
        %v1432 = vadd.f32 %v1234, %v1403
        %v1433 = vadd.f32 %v1235, %v1406
        %v1434 = vadd.f32 %v1236, %v1409
        %v1435 = vadd.f32 %v1237, %v1412
        %v1436 = vadd.f32 %v1238, %v1415
        %v1437 = vadd.f32 %v1239, %v1418
        %v1438 = vadd.f32 %v1240, %v1421
        %v1455 = vrot.slane %v417, 6
        %v1456 = vrot.slane %v418, 6
        %v1457 = vsel %vm516, %v1455, %v1456
        %v1458 = vrot.slane %v419, 6
        %v1459 = vsel %vm516, %v1456, %v1458
        %v1460 = vrot.slane %v420, 6
        %v1461 = vsel %vm516, %v1458, %v1460
        %v1462 = vrot.slane %v421, 6
        %v1463 = vsel %vm516, %v1460, %v1462
        %v1464 = vrot.slane %v422, 6
        %v1465 = vsel %vm516, %v1462, %v1464
        %v1466 = vrot.slane %v423, 6
        %v1467 = vsel %vm516, %v1464, %v1466
        %v1468 = vrot.slane %v424, 6
        %v1469 = vsel %vm516, %v1466, %v1468
        %v1470 = vrot.slane %v425, 6
        %v1471 = vsel %vm516, %v1468, %v1470
        %v1472 = vrot.slane %v426, 6
        %v1473 = vsel %vm516, %v1470, %v1472
        %v1474 = vrot.slane %v427, 6
        %v1475 = vsel %vm516, %v1472, %v1474
        %v1476 = vrot.slane %v428, 6
        %v1477 = vsel %vm516, %v1474, %v1476
        %v1478 = vrot.slane %v429, 6
        %v1479 = vsel %vm516, %v1476, %v1478
        %v1480 = vrot.slane %v430, 6
        %v1481 = vsel %vm516, %v1478, %v1480
        %v1482 = vrot.slane %v431, 6
        %v1483 = vsel %vm516, %v1480, %v1482
        %v1484 = vrot.slane %v432, 6
        %v1485 = vsel %vm516, %v1482, %v1484
        %v1503 = vsel %vm516, 0.0, %v1455
        %v1504 = vsel %vm516, %v1484, 0.0
        %v1505 = vmul.f32 %v1503, %v462
        %v1506 = vmul.f32 %v1457, %v463
        %v1507 = vmul.f32 %v1459, %v462
        %v1508 = vmul.f32 %v1461, %v463
        %v1509 = vmul.f32 %v1463, %v462
        %v1510 = vmul.f32 %v1465, %v463
        %v1511 = vmul.f32 %v1467, %v462
        %v1512 = vmul.f32 %v1469, %v463
        %v1513 = vmul.f32 %v1471, %v462
        %v1514 = vmul.f32 %v1473, %v463
        %v1515 = vmul.f32 %v1475, %v462
        %v1516 = vmul.f32 %v1477, %v463
        %v1517 = vmul.f32 %v1479, %v462
        %v1518 = vmul.f32 %v1481, %v463
        %v1519 = vmul.f32 %v1483, %v462
        %v1520 = vmul.f32 %v1485, %v463
        %v1521 = vld [vmem:[#allocation7] sm:$0xff]
        %v1522 = vld [vmem:[#allocation7 + $0x8] sm:$0xff]
        %v1523 = vld [vmem:[#allocation7 + $0x10] sm:$0xff]
        %v1524 = vld [vmem:[#allocation7 + $0x18] sm:$0xff]
        %v1525 = vmul.f32 %v1503, %v592
        %v1526 = vmul.f32 %v1457, %v594
        %v1527 = vmul.f32 %v1459, %v595
        %v1528 = vmul.f32 %v1461, %v594
        %v1529 = vmul.f32 %v1463, %v595
        %v1530 = vmul.f32 %v1465, %v594
        %v1531 = vmul.f32 %v1467, %v595
        %v1532 = vmul.f32 %v1469, %v594
        %v1533 = vmul.f32 %v1471, %v595
        %v1534 = vmul.f32 %v1473, %v594
        %v1535 = vmul.f32 %v1475, %v595
        %v1536 = vmul.f32 %v1477, %v594
        %v1537 = vmul.f32 %v1479, %v595
        %v1538 = vmul.f32 %v1481, %v594
        %v1539 = vmul.f32 %v1483, %v595
        %v1540 = vmul.f32 %v1485, %v594
        %v1541 = vmul.f32 %v1504, %v593
        %s1542 = scalar_lea.vmem [#allocation7], 32
        %v1543 = vld [vmem:[%s1542] sm:$0xff]
        %v1544 = vld [vmem:[%s1542 + $0x8] sm:$0xff]
        %v1545 = vld [vmem:[%s1542 + $0x10] sm:$0xff]
        %v1546 = vld [vmem:[%s1542 + $0x18] sm:$0xff]
        %v1564 = vrot.slane %v1525, 1
        %v1565 = vrot.slane %v1526, 1
        %v1566 = vsel %vm641, %v1564, %v1565
        %v1567 = vrot.slane %v1527, 1
        %v1568 = vsel %vm641, %v1565, %v1567
        %v1569 = vrot.slane %v1528, 1
        %v1570 = vsel %vm641, %v1567, %v1569
        %v1571 = vrot.slane %v1529, 1
        %v1572 = vsel %vm641, %v1569, %v1571
        %v1573 = vrot.slane %v1530, 1
        %v1574 = vsel %vm641, %v1571, %v1573
        %v1575 = vrot.slane %v1531, 1
        %v1576 = vsel %vm641, %v1573, %v1575
        %v1577 = vrot.slane %v1532, 1
        %v1578 = vsel %vm641, %v1575, %v1577
        %v1579 = vrot.slane %v1533, 1
        %v1580 = vsel %vm641, %v1577, %v1579
        %v1581 = vrot.slane %v1534, 1
        %v1582 = vsel %vm641, %v1579, %v1581
        %v1583 = vrot.slane %v1535, 1
        %v1584 = vsel %vm641, %v1581, %v1583
        %v1585 = vrot.slane %v1536, 1
        %v1586 = vsel %vm641, %v1583, %v1585
        %v1587 = vrot.slane %v1537, 1
        %v1588 = vsel %vm641, %v1585, %v1587
        %v1589 = vrot.slane %v1538, 1
        %v1590 = vsel %vm641, %v1587, %v1589
        %v1591 = vrot.slane %v1539, 1
        %v1592 = vsel %vm641, %v1589, %v1591
        %v1593 = vrot.slane %v1540, 1
        %v1594 = vsel %vm641, %v1591, %v1593
        %v1595 = vrot.slane %v1541, 1
        %v1596 = vsel %vm641, %v1593, %v1595
        %vm1597 = vcmask 261120
        %v1598 = vsel %vm1597, %v1566, 0
        %v1600 = vsel %vm1597, %v1568, 0
        %v1602 = vsel %vm1597, %v1570, 0
        %v1604 = vsel %vm1597, %v1572, 0
        %v1606 = vsel %vm1597, %v1574, 0
        %v1608 = vsel %vm1597, %v1576, 0
        %v1610 = vsel %vm1597, %v1578, 0
        %v1612 = vsel %vm1597, %v1580, 0
        %v1614 = vsel %vm1597, %v1582, 0
        %v1616 = vsel %vm1597, %v1584, 0
        %v1618 = vsel %vm1597, %v1586, 0
        %v1620 = vsel %vm1597, %v1588, 0
        %v1622 = vsel %vm1597, %v1590, 0
        %v1624 = vsel %vm1597, %v1592, 0
        %v1626 = vsel %vm1597, %v1594, 0
        %v1628 = vsel %vm1597, %v1596, 0
        %1630 = vmatpush.msra.mxu0 0.0
        %1631 = vmatpush.msra.mxu0 0.0
        %1632 = vmatpush.msra.mxu0 0.0
        %1633 = vmatpush.msra.mxu0 0.0
        %1634 = vmatpush.msra.mxu0 0.0
        %1635 = vmatpush.msra.mxu0 0.0
        %1636 = vmatpush.msra.mxu0 0.0
        %1637 = vmatpush.msra.mxu0 0.0
        %1638 = vmatpush.msra.mxu0 0.0
        %1639 = vmatpush.msra.mxu0 0.0
        %1640 = vmatpush.msra.mxu0 0.0
        %1641 = vmatpush.msra.mxu0 0.0
        %1642 = vmatpush.msra.mxu0 %v1546
        %1643 = vmatpush.msra.mxu0 %v1545
        %1644 = vmatpush.msra.mxu0 %v1544
        %1645 = vmatpush.msra.mxu0 %v1543
        %1646 = vmatmul.f32.gmra.mxu0 %v1598
        %v1647 = vpop.f32.mrf.mxu0
        %v1648 = vadd.f32 0.0, %v1647
        %1649 = vmatmul.f32.gmra.mxu0 %v1600
        %v1650 = vpop.f32.mrf.mxu0
        %v1651 = vadd.f32 0.0, %v1650
        %1652 = vmatmul.f32.gmra.mxu0 %v1602
        %v1653 = vpop.f32.mrf.mxu0
        %v1654 = vadd.f32 0.0, %v1653
        %1655 = vmatmul.f32.gmra.mxu0 %v1604
        %v1656 = vpop.f32.mrf.mxu0
        %v1657 = vadd.f32 0.0, %v1656
        %1658 = vmatmul.f32.gmra.mxu0 %v1606
        %v1659 = vpop.f32.mrf.mxu0
        %v1660 = vadd.f32 0.0, %v1659
        %1661 = vmatmul.f32.gmra.mxu0 %v1608
        %v1662 = vpop.f32.mrf.mxu0
        %v1663 = vadd.f32 0.0, %v1662
        %1664 = vmatmul.f32.gmra.mxu0 %v1610
        %v1665 = vpop.f32.mrf.mxu0
        %v1666 = vadd.f32 0.0, %v1665
        %1667 = vmatmul.f32.gmra.mxu0 %v1612
        %v1668 = vpop.f32.mrf.mxu0
        %v1669 = vadd.f32 0.0, %v1668
        %1670 = vmatmul.f32.gmra.mxu0 %v1614
        %v1671 = vpop.f32.mrf.mxu0
        %v1672 = vadd.f32 0.0, %v1671
        %1673 = vmatmul.f32.gmra.mxu0 %v1616
        %v1674 = vpop.f32.mrf.mxu0
        %v1675 = vadd.f32 0.0, %v1674
        %1676 = vmatmul.f32.gmra.mxu0 %v1618
        %v1677 = vpop.f32.mrf.mxu0
        %v1678 = vadd.f32 0.0, %v1677
        %1679 = vmatmul.f32.gmra.mxu0 %v1620
        %v1680 = vpop.f32.mrf.mxu0
        %v1681 = vadd.f32 0.0, %v1680
        %1682 = vmatmul.f32.gmra.mxu0 %v1622
        %v1683 = vpop.f32.mrf.mxu0
        %v1684 = vadd.f32 0.0, %v1683
        %1685 = vmatmul.f32.gmra.mxu0 %v1624
        %v1686 = vpop.f32.mrf.mxu0
        %v1687 = vadd.f32 0.0, %v1686
        %1688 = vmatmul.f32.gmra.mxu0 %v1626
        %v1689 = vpop.f32.mrf.mxu0
        %v1690 = vadd.f32 0.0, %v1689
        %1691 = vmatmul.f32.gmra.mxu0 %v1628
        %v1692 = vpop.f32.mrf.mxu0
        %v1693 = vadd.f32 0.0, %v1692
        %1694 = vdwg.mxu0
        %v1696 = vsel %vm1597, %v1505, 0
        %v1699 = vsel %vm1597, %v1506, 0
        %v1702 = vsel %vm1597, %v1507, 0
        %v1705 = vsel %vm1597, %v1508, 0
        %v1708 = vsel %vm1597, %v1509, 0
        %v1711 = vsel %vm1597, %v1510, 0
        %v1714 = vsel %vm1597, %v1511, 0
        %v1717 = vsel %vm1597, %v1512, 0
        %v1720 = vsel %vm1597, %v1513, 0
        %v1723 = vsel %vm1597, %v1514, 0
        %v1726 = vsel %vm1597, %v1515, 0
        %v1729 = vsel %vm1597, %v1516, 0
        %v1732 = vsel %vm1597, %v1517, 0
        %v1735 = vsel %vm1597, %v1518, 0
        %v1738 = vsel %vm1597, %v1519, 0
        %v1741 = vsel %vm1597, %v1520, 0
        %1743 = vmatpush.msra.mxu0 0.0
        %1744 = vmatpush.msra.mxu0 0.0
        %1745 = vmatpush.msra.mxu0 0.0
        %1746 = vmatpush.msra.mxu0 0.0
        %1747 = vmatpush.msra.mxu0 0.0
        %1748 = vmatpush.msra.mxu0 0.0
        %1749 = vmatpush.msra.mxu0 0.0
        %1750 = vmatpush.msra.mxu0 0.0
        %1751 = vmatpush.msra.mxu0 0.0
        %1752 = vmatpush.msra.mxu0 0.0
        %1753 = vmatpush.msra.mxu0 0.0
        %1754 = vmatpush.msra.mxu0 0.0
        %1755 = vmatpush.msra.mxu0 %v1524
        %1756 = vmatpush.msra.mxu0 %v1523
        %1757 = vmatpush.msra.mxu0 %v1522
        %1758 = vmatpush.msra.mxu0 %v1521
        %1759 = vmatmul.f32.gmra.mxu0 %v1696
        %v1760 = vpop.f32.mrf.mxu0
        %v1761 = vadd.f32 %v1648, %v1760
        %1762 = vmatmul.f32.gmra.mxu0 %v1699
        %v1763 = vpop.f32.mrf.mxu0
        %v1764 = vadd.f32 %v1651, %v1763
        %1765 = vmatmul.f32.gmra.mxu0 %v1702
        %v1766 = vpop.f32.mrf.mxu0
        %v1767 = vadd.f32 %v1654, %v1766
        %1768 = vmatmul.f32.gmra.mxu0 %v1705
        %v1769 = vpop.f32.mrf.mxu0
        %v1770 = vadd.f32 %v1657, %v1769
        %1771 = vmatmul.f32.gmra.mxu0 %v1708
        %v1772 = vpop.f32.mrf.mxu0
        %v1773 = vadd.f32 %v1660, %v1772
        %1774 = vmatmul.f32.gmra.mxu0 %v1711
        %v1775 = vpop.f32.mrf.mxu0
        %v1776 = vadd.f32 %v1663, %v1775
        %1777 = vmatmul.f32.gmra.mxu0 %v1714
        %v1778 = vpop.f32.mrf.mxu0
        %v1779 = vadd.f32 %v1666, %v1778
        %1780 = vmatmul.f32.gmra.mxu0 %v1717
        %v1781 = vpop.f32.mrf.mxu0
        %v1782 = vadd.f32 %v1669, %v1781
        %1783 = vmatmul.f32.gmra.mxu0 %v1720
        %v1784 = vpop.f32.mrf.mxu0
        %v1785 = vadd.f32 %v1672, %v1784
        %1786 = vmatmul.f32.gmra.mxu0 %v1723
        %v1787 = vpop.f32.mrf.mxu0
        %v1788 = vadd.f32 %v1675, %v1787
        %1789 = vmatmul.f32.gmra.mxu0 %v1726
        %v1790 = vpop.f32.mrf.mxu0
        %v1791 = vadd.f32 %v1678, %v1790
        %1792 = vmatmul.f32.gmra.mxu0 %v1729
        %v1793 = vpop.f32.mrf.mxu0
        %v1794 = vadd.f32 %v1681, %v1793
        %1795 = vmatmul.f32.gmra.mxu0 %v1732
        %v1796 = vpop.f32.mrf.mxu0
        %v1797 = vadd.f32 %v1684, %v1796
        %1798 = vmatmul.f32.gmra.mxu0 %v1735
        %v1799 = vpop.f32.mrf.mxu0
        %v1800 = vadd.f32 %v1687, %v1799
        %1801 = vmatmul.f32.gmra.mxu0 %v1738
        %v1802 = vpop.f32.mrf.mxu0
        %v1803 = vadd.f32 %v1690, %v1802
        %1804 = vmatmul.f32.gmra.mxu0 %v1741
        %v1805 = vpop.f32.mrf.mxu0
        %v1806 = vadd.f32 %v1693, %v1805
        %1807 = vdwg.mxu0
        %s1808 = scalar_lea.vmem [#allocation7], 64
        %v1809 = vld [vmem:[%s1808] sm:$0xff]
        %v1810 = vld [vmem:[%s1808 + $0x8] sm:$0xff]
        %v1811 = vld [vmem:[%s1808 + $0x10] sm:$0xff]
        %v1812 = vld [vmem:[%s1808 + $0x18] sm:$0xff]
        %v1815 = vrot.slane %v1503, 2
        %v1816 = vrot.slane %v1457, 2
        %v1817 = vsel %vm895, %v1815, %v1816
        %v1818 = vrot.slane %v1459, 2
        %v1819 = vsel %vm895, %v1816, %v1818
        %v1820 = vrot.slane %v1461, 2
        %v1821 = vsel %vm895, %v1818, %v1820
        %v1822 = vrot.slane %v1463, 2
        %v1823 = vsel %vm895, %v1820, %v1822
        %v1824 = vrot.slane %v1465, 2
        %v1825 = vsel %vm895, %v1822, %v1824
        %v1826 = vrot.slane %v1467, 2
        %v1827 = vsel %vm895, %v1824, %v1826
        %v1828 = vrot.slane %v1469, 2
        %v1829 = vsel %vm895, %v1826, %v1828
        %v1830 = vrot.slane %v1471, 2
        %v1831 = vsel %vm895, %v1828, %v1830
        %v1832 = vrot.slane %v1473, 2
        %v1833 = vsel %vm895, %v1830, %v1832
        %v1834 = vrot.slane %v1475, 2
        %v1835 = vsel %vm895, %v1832, %v1834
        %v1836 = vrot.slane %v1477, 2
        %v1837 = vsel %vm895, %v1834, %v1836
        %v1838 = vrot.slane %v1479, 2
        %v1839 = vsel %vm895, %v1836, %v1838
        %v1840 = vrot.slane %v1481, 2
        %v1841 = vsel %vm895, %v1838, %v1840
        %v1842 = vrot.slane %v1483, 2
        %v1843 = vsel %vm895, %v1840, %v1842
        %v1844 = vrot.slane %v1485, 2
        %v1845 = vsel %vm895, %v1842, %v1844
        %v1846 = vrot.slane %v1504, 2
        %v1847 = vsel %vm895, %v1844, %v1846
        %v1848 = vsel %vm1597, %v1817, 0
        %v1850 = vsel %vm1597, %v1819, 0
        %v1852 = vsel %vm1597, %v1821, 0
        %v1854 = vsel %vm1597, %v1823, 0
        %v1856 = vsel %vm1597, %v1825, 0
        %v1858 = vsel %vm1597, %v1827, 0
        %v1860 = vsel %vm1597, %v1829, 0
        %v1862 = vsel %vm1597, %v1831, 0
        %v1864 = vsel %vm1597, %v1833, 0
        %v1866 = vsel %vm1597, %v1835, 0
        %v1868 = vsel %vm1597, %v1837, 0
        %v1870 = vsel %vm1597, %v1839, 0
        %v1872 = vsel %vm1597, %v1841, 0
        %v1874 = vsel %vm1597, %v1843, 0
        %v1876 = vsel %vm1597, %v1845, 0
        %v1878 = vsel %vm1597, %v1847, 0
        %1880 = vmatpush.msra.mxu0 0.0
        %1881 = vmatpush.msra.mxu0 0.0
        %1882 = vmatpush.msra.mxu0 0.0
        %1883 = vmatpush.msra.mxu0 0.0
        %1884 = vmatpush.msra.mxu0 0.0
        %1885 = vmatpush.msra.mxu0 0.0
        %1886 = vmatpush.msra.mxu0 0.0
        %1887 = vmatpush.msra.mxu0 0.0
        %1888 = vmatpush.msra.mxu0 0.0
        %1889 = vmatpush.msra.mxu0 0.0
        %1890 = vmatpush.msra.mxu0 0.0
        %1891 = vmatpush.msra.mxu0 0.0
        %1892 = vmatpush.msra.mxu0 %v1812
        %1893 = vmatpush.msra.mxu0 %v1811
        %1894 = vmatpush.msra.mxu0 %v1810
        %1895 = vmatpush.msra.mxu0 %v1809
        %1896 = vmatmul.f32.gmra.mxu0 %v1848
        %v1897 = vpop.f32.mrf.mxu0
        %v1898 = vadd.f32 0.0, %v1897
        %1899 = vmatmul.f32.gmra.mxu0 %v1850
        %v1900 = vpop.f32.mrf.mxu0
        %v1901 = vadd.f32 0.0, %v1900
        %1902 = vmatmul.f32.gmra.mxu0 %v1852
        %v1903 = vpop.f32.mrf.mxu0
        %v1904 = vadd.f32 0.0, %v1903
        %1905 = vmatmul.f32.gmra.mxu0 %v1854
        %v1906 = vpop.f32.mrf.mxu0
        %v1907 = vadd.f32 0.0, %v1906
        %1908 = vmatmul.f32.gmra.mxu0 %v1856
        %v1909 = vpop.f32.mrf.mxu0
        %v1910 = vadd.f32 0.0, %v1909
        %1911 = vmatmul.f32.gmra.mxu0 %v1858
        %v1912 = vpop.f32.mrf.mxu0
        %v1913 = vadd.f32 0.0, %v1912
        %1914 = vmatmul.f32.gmra.mxu0 %v1860
        %v1915 = vpop.f32.mrf.mxu0
        %v1916 = vadd.f32 0.0, %v1915
        %1917 = vmatmul.f32.gmra.mxu0 %v1862
        %v1918 = vpop.f32.mrf.mxu0
        %v1919 = vadd.f32 0.0, %v1918
        %1920 = vmatmul.f32.gmra.mxu0 %v1864
        %v1921 = vpop.f32.mrf.mxu0
        %v1922 = vadd.f32 0.0, %v1921
        %1923 = vmatmul.f32.gmra.mxu0 %v1866
        %v1924 = vpop.f32.mrf.mxu0
        %v1925 = vadd.f32 0.0, %v1924
        %1926 = vmatmul.f32.gmra.mxu0 %v1868
        %v1927 = vpop.f32.mrf.mxu0
        %v1928 = vadd.f32 0.0, %v1927
        %1929 = vmatmul.f32.gmra.mxu0 %v1870
        %v1930 = vpop.f32.mrf.mxu0
        %v1931 = vadd.f32 0.0, %v1930
        %1932 = vmatmul.f32.gmra.mxu0 %v1872
        %v1933 = vpop.f32.mrf.mxu0
        %v1934 = vadd.f32 0.0, %v1933
        %1935 = vmatmul.f32.gmra.mxu0 %v1874
        %v1936 = vpop.f32.mrf.mxu0
        %v1937 = vadd.f32 0.0, %v1936
        %1938 = vmatmul.f32.gmra.mxu0 %v1876
        %v1939 = vpop.f32.mrf.mxu0
        %v1940 = vadd.f32 0.0, %v1939
        %1941 = vmatmul.f32.gmra.mxu0 %v1878
        %v1942 = vpop.f32.mrf.mxu0
        %v1943 = vadd.f32 0.0, %v1942
        %1944 = vdwg.mxu0
        %v1945 = vadd.f32 %v1761, %v1898
        %v1946 = vadd.f32 %v1764, %v1901
        %v1947 = vadd.f32 %v1767, %v1904
        %v1948 = vadd.f32 %v1770, %v1907
        %v1949 = vadd.f32 %v1773, %v1910
        %v1950 = vadd.f32 %v1776, %v1913
        %v1951 = vadd.f32 %v1779, %v1916
        %v1952 = vadd.f32 %v1782, %v1919
        %v1953 = vadd.f32 %v1785, %v1922
        %v1954 = vadd.f32 %v1788, %v1925
        %v1955 = vadd.f32 %v1791, %v1928
        %v1956 = vadd.f32 %v1794, %v1931
        %v1957 = vadd.f32 %v1797, %v1934
        %v1958 = vadd.f32 %v1800, %v1937
        %v1959 = vadd.f32 %v1803, %v1940
        %v1960 = vadd.f32 %v1806, %v1943
        %v1961 = vmul.f32 %v1503, %v1045
        %v1962 = vmul.f32 %v1457, %v1047
        %v1963 = vmul.f32 %v1459, %v1048
        %v1964 = vmul.f32 %v1461, %v1047
        %v1965 = vmul.f32 %v1463, %v1048
        %v1966 = vmul.f32 %v1465, %v1047
        %v1967 = vmul.f32 %v1467, %v1048
        %v1968 = vmul.f32 %v1469, %v1047
        %v1969 = vmul.f32 %v1471, %v1048
        %v1970 = vmul.f32 %v1473, %v1047
        %v1971 = vmul.f32 %v1475, %v1048
        %v1972 = vmul.f32 %v1477, %v1047
        %v1973 = vmul.f32 %v1479, %v1048
        %v1974 = vmul.f32 %v1481, %v1047
        %v1975 = vmul.f32 %v1483, %v1048
        %v1976 = vmul.f32 %v1485, %v1047
        %v1977 = vmul.f32 %v1504, %v1046
        %s1978 = scalar_lea.vmem [#allocation7], 96
        %v1979 = vld [vmem:[%s1978] sm:$0xff]
        %v1980 = vld [vmem:[%s1978 + $0x8] sm:$0xff]
        %v1981 = vld [vmem:[%s1978 + $0x10] sm:$0xff]
        %v1982 = vld [vmem:[%s1978 + $0x18] sm:$0xff]
        %v2000 = vrot.slane %v1961, 3
        %v2001 = vrot.slane %v1962, 3
        %v2002 = vsel %vm1094, %v2000, %v2001
        %v2003 = vrot.slane %v1963, 3
        %v2004 = vsel %vm1094, %v2001, %v2003
        %v2005 = vrot.slane %v1964, 3
        %v2006 = vsel %vm1094, %v2003, %v2005
        %v2007 = vrot.slane %v1965, 3
        %v2008 = vsel %vm1094, %v2005, %v2007
        %v2009 = vrot.slane %v1966, 3
        %v2010 = vsel %vm1094, %v2007, %v2009
        %v2011 = vrot.slane %v1967, 3
        %v2012 = vsel %vm1094, %v2009, %v2011
        %v2013 = vrot.slane %v1968, 3
        %v2014 = vsel %vm1094, %v2011, %v2013
        %v2015 = vrot.slane %v1969, 3
        %v2016 = vsel %vm1094, %v2013, %v2015
        %v2017 = vrot.slane %v1970, 3
        %v2018 = vsel %vm1094, %v2015, %v2017
        %v2019 = vrot.slane %v1971, 3
        %v2020 = vsel %vm1094, %v2017, %v2019
        %v2021 = vrot.slane %v1972, 3
        %v2022 = vsel %vm1094, %v2019, %v2021
        %v2023 = vrot.slane %v1973, 3
        %v2024 = vsel %vm1094, %v2021, %v2023
        %v2025 = vrot.slane %v1974, 3
        %v2026 = vsel %vm1094, %v2023, %v2025
        %v2027 = vrot.slane %v1975, 3
        %v2028 = vsel %vm1094, %v2025, %v2027
        %v2029 = vrot.slane %v1976, 3
        %v2030 = vsel %vm1094, %v2027, %v2029
        %v2031 = vrot.slane %v1977, 3
        %v2032 = vsel %vm1094, %v2029, %v2031
        %v2033 = vsel %vm1597, %v2002, 0
        %v2035 = vsel %vm1597, %v2004, 0
        %v2037 = vsel %vm1597, %v2006, 0
        %v2039 = vsel %vm1597, %v2008, 0
        %v2041 = vsel %vm1597, %v2010, 0
        %v2043 = vsel %vm1597, %v2012, 0
        %v2045 = vsel %vm1597, %v2014, 0
        %v2047 = vsel %vm1597, %v2016, 0
        %v2049 = vsel %vm1597, %v2018, 0
        %v2051 = vsel %vm1597, %v2020, 0
        %v2053 = vsel %vm1597, %v2022, 0
        %v2055 = vsel %vm1597, %v2024, 0
        %v2057 = vsel %vm1597, %v2026, 0
        %v2059 = vsel %vm1597, %v2028, 0
        %v2061 = vsel %vm1597, %v2030, 0
        %v2063 = vsel %vm1597, %v2032, 0
        %2065 = vmatpush.msra.mxu0 0.0
        %2066 = vmatpush.msra.mxu0 0.0
        %2067 = vmatpush.msra.mxu0 0.0
        %2068 = vmatpush.msra.mxu0 0.0
        %2069 = vmatpush.msra.mxu0 0.0
        %2070 = vmatpush.msra.mxu0 0.0
        %2071 = vmatpush.msra.mxu0 0.0
        %2072 = vmatpush.msra.mxu0 0.0
        %2073 = vmatpush.msra.mxu0 0.0
        %2074 = vmatpush.msra.mxu0 0.0
        %2075 = vmatpush.msra.mxu0 0.0
        %2076 = vmatpush.msra.mxu0 0.0
        %2077 = vmatpush.msra.mxu0 %v1982
        %2078 = vmatpush.msra.mxu0 %v1981
        %2079 = vmatpush.msra.mxu0 %v1980
        %2080 = vmatpush.msra.mxu0 %v1979
        %2081 = vmatmul.f32.gmra.mxu0 %v2033
        %v2082 = vpop.f32.mrf.mxu0
        %v2083 = vadd.f32 0.0, %v2082
        %2084 = vmatmul.f32.gmra.mxu0 %v2035
        %v2085 = vpop.f32.mrf.mxu0
        %v2086 = vadd.f32 0.0, %v2085
        %2087 = vmatmul.f32.gmra.mxu0 %v2037
        %v2088 = vpop.f32.mrf.mxu0
        %v2089 = vadd.f32 0.0, %v2088
        %2090 = vmatmul.f32.gmra.mxu0 %v2039
        %v2091 = vpop.f32.mrf.mxu0
        %v2092 = vadd.f32 0.0, %v2091
        %2093 = vmatmul.f32.gmra.mxu0 %v2041
        %v2094 = vpop.f32.mrf.mxu0
        %v2095 = vadd.f32 0.0, %v2094
        %2096 = vmatmul.f32.gmra.mxu0 %v2043
        %v2097 = vpop.f32.mrf.mxu0
        %v2098 = vadd.f32 0.0, %v2097
        %2099 = vmatmul.f32.gmra.mxu0 %v2045
        %v2100 = vpop.f32.mrf.mxu0
        %v2101 = vadd.f32 0.0, %v2100
        %2102 = vmatmul.f32.gmra.mxu0 %v2047
        %v2103 = vpop.f32.mrf.mxu0
        %v2104 = vadd.f32 0.0, %v2103
        %2105 = vmatmul.f32.gmra.mxu0 %v2049
        %v2106 = vpop.f32.mrf.mxu0
        %v2107 = vadd.f32 0.0, %v2106
        %2108 = vmatmul.f32.gmra.mxu0 %v2051
        %v2109 = vpop.f32.mrf.mxu0
        %v2110 = vadd.f32 0.0, %v2109
        %2111 = vmatmul.f32.gmra.mxu0 %v2053
        %v2112 = vpop.f32.mrf.mxu0
        %v2113 = vadd.f32 0.0, %v2112
        %2114 = vmatmul.f32.gmra.mxu0 %v2055
        %v2115 = vpop.f32.mrf.mxu0
        %v2116 = vadd.f32 0.0, %v2115
        %2117 = vmatmul.f32.gmra.mxu0 %v2057
        %v2118 = vpop.f32.mrf.mxu0
        %v2119 = vadd.f32 0.0, %v2118
        %2120 = vmatmul.f32.gmra.mxu0 %v2059
        %v2121 = vpop.f32.mrf.mxu0
        %v2122 = vadd.f32 0.0, %v2121
        %2123 = vmatmul.f32.gmra.mxu0 %v2061
        %v2124 = vpop.f32.mrf.mxu0
        %v2125 = vadd.f32 0.0, %v2124
        %2126 = vmatmul.f32.gmra.mxu0 %v2063
        %v2127 = vpop.f32.mrf.mxu0
        %v2128 = vadd.f32 0.0, %v2127
        %2129 = vdwg.mxu0
        %v2130 = vadd.f32 %v1945, %v2083
        %v2131 = vadd.f32 %v1946, %v2086
        %v2132 = vadd.f32 %v1947, %v2089
        %v2133 = vadd.f32 %v1948, %v2092
        %v2134 = vadd.f32 %v1949, %v2095
        %v2135 = vadd.f32 %v1950, %v2098
        %v2136 = vadd.f32 %v1951, %v2101
        %v2137 = vadd.f32 %v1952, %v2104
        %v2138 = vadd.f32 %v1953, %v2107
        %v2139 = vadd.f32 %v1954, %v2110
        %v2140 = vadd.f32 %v1955, %v2113
        %v2141 = vadd.f32 %v1956, %v2116
        %v2142 = vadd.f32 %v1957, %v2119
        %v2143 = vadd.f32 %v1958, %v2122
        %v2144 = vadd.f32 %v1959, %v2125
        %v2145 = vadd.f32 %v1960, %v2128
        %v2146 = vmul.f32 %v1503, %v1244
        %v2147 = vmul.f32 %v1457, %v1246
        %v2148 = vmul.f32 %v1459, %v1247
        %v2149 = vmul.f32 %v1461, %v1246
        %v2150 = vmul.f32 %v1463, %v1247
        %v2151 = vmul.f32 %v1465, %v1246
        %v2152 = vmul.f32 %v1467, %v1247
        %v2153 = vmul.f32 %v1469, %v1246
        %v2154 = vmul.f32 %v1471, %v1247
        %v2155 = vmul.f32 %v1473, %v1246
        %v2156 = vmul.f32 %v1475, %v1247
        %v2157 = vmul.f32 %v1477, %v1246
        %v2158 = vmul.f32 %v1479, %v1247
        %v2159 = vmul.f32 %v1481, %v1246
        %v2160 = vmul.f32 %v1483, %v1247
        %v2161 = vmul.f32 %v1485, %v1246
        %v2162 = vmul.f32 %v1504, %v1245
        %s2163 = scalar_lea.vmem [#allocation7], 128
        %v2164 = vld [vmem:[%s2163] sm:$0xff]
        %v2165 = vld [vmem:[%s2163 + $0x8] sm:$0xff]
        %v2166 = vld [vmem:[%s2163 + $0x10] sm:$0xff]
        %v2167 = vld [vmem:[%s2163 + $0x18] sm:$0xff]
        %v2185 = vrot.slane %v2146, 4
        %v2186 = vrot.slane %v2147, 4
        %v2187 = vsel %vm1243, %v2185, %v2186
        %v2188 = vrot.slane %v2148, 4
        %v2189 = vsel %vm1243, %v2186, %v2188
        %v2190 = vrot.slane %v2149, 4
        %v2191 = vsel %vm1243, %v2188, %v2190
        %v2192 = vrot.slane %v2150, 4
        %v2193 = vsel %vm1243, %v2190, %v2192
        %v2194 = vrot.slane %v2151, 4
        %v2195 = vsel %vm1243, %v2192, %v2194
        %v2196 = vrot.slane %v2152, 4
        %v2197 = vsel %vm1243, %v2194, %v2196
        %v2198 = vrot.slane %v2153, 4
        %v2199 = vsel %vm1243, %v2196, %v2198
        %v2200 = vrot.slane %v2154, 4
        %v2201 = vsel %vm1243, %v2198, %v2200
        %v2202 = vrot.slane %v2155, 4
        %v2203 = vsel %vm1243, %v2200, %v2202
        %v2204 = vrot.slane %v2156, 4
        %v2205 = vsel %vm1243, %v2202, %v2204
        %v2206 = vrot.slane %v2157, 4
        %v2207 = vsel %vm1243, %v2204, %v2206
        %v2208 = vrot.slane %v2158, 4
        %v2209 = vsel %vm1243, %v2206, %v2208
        %v2210 = vrot.slane %v2159, 4
        %v2211 = vsel %vm1243, %v2208, %v2210
        %v2212 = vrot.slane %v2160, 4
        %v2213 = vsel %vm1243, %v2210, %v2212
        %v2214 = vrot.slane %v2161, 4
        %v2215 = vsel %vm1243, %v2212, %v2214
        %v2216 = vrot.slane %v2162, 4
        %v2217 = vsel %vm1243, %v2214, %v2216
        %v2218 = vsel %vm1597, %v2187, 0
        %v2220 = vsel %vm1597, %v2189, 0
        %v2222 = vsel %vm1597, %v2191, 0
        %v2224 = vsel %vm1597, %v2193, 0
        %v2226 = vsel %vm1597, %v2195, 0
        %v2228 = vsel %vm1597, %v2197, 0
        %v2230 = vsel %vm1597, %v2199, 0
        %v2232 = vsel %vm1597, %v2201, 0
        %v2234 = vsel %vm1597, %v2203, 0
        %v2236 = vsel %vm1597, %v2205, 0
        %v2238 = vsel %vm1597, %v2207, 0
        %v2240 = vsel %vm1597, %v2209, 0
        %v2242 = vsel %vm1597, %v2211, 0
        %v2244 = vsel %vm1597, %v2213, 0
        %v2246 = vsel %vm1597, %v2215, 0
        %v2248 = vsel %vm1597, %v2217, 0
        %2250 = vmatpush.msra.mxu0 0.0
        %2251 = vmatpush.msra.mxu0 0.0
        %2252 = vmatpush.msra.mxu0 0.0
        %2253 = vmatpush.msra.mxu0 0.0
        %2254 = vmatpush.msra.mxu0 0.0
        %2255 = vmatpush.msra.mxu0 0.0
        %2256 = vmatpush.msra.mxu0 0.0
        %2257 = vmatpush.msra.mxu0 0.0
        %2258 = vmatpush.msra.mxu0 0.0
        %2259 = vmatpush.msra.mxu0 0.0
        %2260 = vmatpush.msra.mxu0 0.0
        %2261 = vmatpush.msra.mxu0 0.0
        %2262 = vmatpush.msra.mxu0 %v2167
        %2263 = vmatpush.msra.mxu0 %v2166
        %2264 = vmatpush.msra.mxu0 %v2165
        %2265 = vmatpush.msra.mxu0 %v2164
        %2266 = vmatmul.f32.gmra.mxu0 %v2218
        %v2267 = vpop.f32.mrf.mxu0
        %v2268 = vadd.f32 0.0, %v2267
        %2269 = vmatmul.f32.gmra.mxu0 %v2220
        %v2270 = vpop.f32.mrf.mxu0
        %v2271 = vadd.f32 0.0, %v2270
        %2272 = vmatmul.f32.gmra.mxu0 %v2222
        %v2273 = vpop.f32.mrf.mxu0
        %v2274 = vadd.f32 0.0, %v2273
        %2275 = vmatmul.f32.gmra.mxu0 %v2224
        %v2276 = vpop.f32.mrf.mxu0
        %v2277 = vadd.f32 0.0, %v2276
        %2278 = vmatmul.f32.gmra.mxu0 %v2226
        %v2279 = vpop.f32.mrf.mxu0
        %v2280 = vadd.f32 0.0, %v2279
        %2281 = vmatmul.f32.gmra.mxu0 %v2228
        %v2282 = vpop.f32.mrf.mxu0
        %v2283 = vadd.f32 0.0, %v2282
        %2284 = vmatmul.f32.gmra.mxu0 %v2230
        %v2285 = vpop.f32.mrf.mxu0
        %v2286 = vadd.f32 0.0, %v2285
        %2287 = vmatmul.f32.gmra.mxu0 %v2232
        %v2288 = vpop.f32.mrf.mxu0
        %v2289 = vadd.f32 0.0, %v2288
        %2290 = vmatmul.f32.gmra.mxu0 %v2234
        %v2291 = vpop.f32.mrf.mxu0
        %v2292 = vadd.f32 0.0, %v2291
        %2293 = vmatmul.f32.gmra.mxu0 %v2236
        %v2294 = vpop.f32.mrf.mxu0
        %v2295 = vadd.f32 0.0, %v2294
        %2296 = vmatmul.f32.gmra.mxu0 %v2238
        %v2297 = vpop.f32.mrf.mxu0
        %v2298 = vadd.f32 0.0, %v2297
        %2299 = vmatmul.f32.gmra.mxu0 %v2240
        %v2300 = vpop.f32.mrf.mxu0
        %v2301 = vadd.f32 0.0, %v2300
        %2302 = vmatmul.f32.gmra.mxu0 %v2242
        %v2303 = vpop.f32.mrf.mxu0
        %v2304 = vadd.f32 0.0, %v2303
        %2305 = vmatmul.f32.gmra.mxu0 %v2244
        %v2306 = vpop.f32.mrf.mxu0
        %v2307 = vadd.f32 0.0, %v2306
        %2308 = vmatmul.f32.gmra.mxu0 %v2246
        %v2309 = vpop.f32.mrf.mxu0
        %v2310 = vadd.f32 0.0, %v2309
        %2311 = vmatmul.f32.gmra.mxu0 %v2248
        %v2312 = vpop.f32.mrf.mxu0
        %v2313 = vadd.f32 0.0, %v2312
        %2314 = vdwg.mxu0
        %v2315 = vadd.f32 %v2130, %v2268
        %v2316 = vadd.f32 %v2131, %v2271
        %v2317 = vadd.f32 %v2132, %v2274
        %v2318 = vadd.f32 %v2133, %v2277
        %v2319 = vadd.f32 %v2134, %v2280
        %v2320 = vadd.f32 %v2135, %v2283
        %v2321 = vadd.f32 %v2136, %v2286
        %v2322 = vadd.f32 %v2137, %v2289
        %v2323 = vadd.f32 %v2138, %v2292
        %v2324 = vadd.f32 %v2139, %v2295
        %v2325 = vadd.f32 %v2140, %v2298
        %v2326 = vadd.f32 %v2141, %v2301
        %v2327 = vadd.f32 %v2142, %v2304
        %v2328 = vadd.f32 %v2143, %v2307
        %v2329 = vadd.f32 %v2144, %v2310
        %v2330 = vadd.f32 %v2145, %v2313
        %v2331 = vadd.f32 %v2315, %v1423
        %v2332 = vadd.f32 %v2316, %v1424
        %v2333 = vadd.f32 %v2317, %v1425
        %v2334 = vadd.f32 %v2318, %v1426
        %v2335 = vadd.f32 %v2319, %v1427
        %v2336 = vadd.f32 %v2320, %v1428
        %v2337 = vadd.f32 %v2321, %v1429
        %v2338 = vadd.f32 %v2322, %v1430
        %v2339 = vadd.f32 %v2323, %v1431
        %v2340 = vadd.f32 %v2324, %v1432
        %v2341 = vadd.f32 %v2325, %v1433
        %v2342 = vadd.f32 %v2326, %v1434
        %v2343 = vadd.f32 %v2327, %v1435
        %v2344 = vadd.f32 %v2328, %v1436
        %v2345 = vadd.f32 %v2329, %v1437
        %v2346 = vadd.f32 %v2330, %v1438
        %v2347 = vld [vmem:[%s5] sm:$0x1]
        %v2349 = vperm.slane %v2347, 0
        %v2351 = vadd.f32 %v2331, %v2349
        %v2352 = vadd.f32 %v2332, %v2349
        %v2353 = vadd.f32 %v2333, %v2349
        %v2354 = vadd.f32 %v2334, %v2349
        %v2355 = vadd.f32 %v2335, %v2349
        %v2356 = vadd.f32 %v2336, %v2349
        %v2357 = vadd.f32 %v2337, %v2349
        %v2358 = vadd.f32 %v2338, %v2349
        %v2359 = vadd.f32 %v2339, %v2349
        %v2360 = vadd.f32 %v2340, %v2349
        %v2361 = vadd.f32 %v2341, %v2349
        %v2362 = vadd.f32 %v2342, %v2349
        %v2363 = vadd.f32 %v2343, %v2349
        %v2364 = vadd.f32 %v2344, %v2349
        %v2365 = vadd.f32 %v2345, %v2349
        %v2366 = vadd.f32 %v2346, %v2349
        %v2367 = vxor.u32 %v2351, 2147483648
        %v2368 = vxor.u32 %v2352, 2147483648
        %v2369 = vxor.u32 %v2353, 2147483648
        %v2370 = vxor.u32 %v2354, 2147483648
        %v2371 = vxor.u32 %v2355, 2147483648
        %v2372 = vxor.u32 %v2356, 2147483648
        %v2373 = vxor.u32 %v2357, 2147483648
        %v2374 = vxor.u32 %v2358, 2147483648
        %v2375 = vxor.u32 %v2359, 2147483648
        %v2376 = vxor.u32 %v2360, 2147483648
        %v2377 = vxor.u32 %v2361, 2147483648
        %v2378 = vxor.u32 %v2362, 2147483648
        %v2379 = vxor.u32 %v2363, 2147483648
        %v2380 = vxor.u32 %v2364, 2147483648
        %v2381 = vxor.u32 %v2365, 2147483648
        %v2382 = vxor.u32 %v2366, 2147483648
        %v2383 = vmul.f32 %v2367, 1.442695
        %v2384 = vpow.pop %v2383
        %v2385 = vmul.f32 %v2368, 1.442695
        %v2386 = vpow.pop %v2385
        %v2387 = vmul.f32 %v2369, 1.442695
        %v2388 = vpow.pop %v2387
        %v2389 = vmul.f32 %v2370, 1.442695
        %v2390 = vpow.pop %v2389
        %v2391 = vmul.f32 %v2371, 1.442695
        %v2392 = vpow.pop %v2391
        %v2393 = vmul.f32 %v2372, 1.442695
        %v2394 = vpow.pop %v2393
        %v2395 = vmul.f32 %v2373, 1.442695
        %v2396 = vpow.pop %v2395
        %v2397 = vmul.f32 %v2374, 1.442695
        %v2398 = vpow.pop %v2397
        %v2399 = vmul.f32 %v2375, 1.442695
        %v2400 = vpow.pop %v2399
        %v2401 = vmul.f32 %v2376, 1.442695
        %v2402 = vpow.pop %v2401
        %v2403 = vmul.f32 %v2377, 1.442695
        %v2404 = vpow.pop %v2403
        %v2405 = vmul.f32 %v2378, 1.442695
        %v2406 = vpow.pop %v2405
        %v2407 = vmul.f32 %v2379, 1.442695
        %v2408 = vpow.pop %v2407
        %v2409 = vmul.f32 %v2380, 1.442695
        %v2410 = vpow.pop %v2409
        %v2411 = vmul.f32 %v2381, 1.442695
        %v2412 = vpow.pop %v2411
        %v2413 = vmul.f32 %v2382, 1.442695
        %v2414 = vpow.pop %v2413
        %v2415 = vadd.f32 %v2384, 1.0
        %v2416 = vadd.f32 %v2386, 1.0
        %v2417 = vadd.f32 %v2388, 1.0
        %v2418 = vadd.f32 %v2390, 1.0
        %v2419 = vadd.f32 %v2392, 1.0
        %v2420 = vadd.f32 %v2394, 1.0
        %v2421 = vadd.f32 %v2396, 1.0
        %v2422 = vadd.f32 %v2398, 1.0
        %v2423 = vadd.f32 %v2400, 1.0
        %v2424 = vadd.f32 %v2402, 1.0
        %v2425 = vadd.f32 %v2404, 1.0
        %v2426 = vadd.f32 %v2406, 1.0
        %v2427 = vadd.f32 %v2408, 1.0
        %v2428 = vadd.f32 %v2410, 1.0
        %v2429 = vadd.f32 %v2412, 1.0
        %v2430 = vadd.f32 %v2414, 1.0
        %v2431 = vrcp.pop %v2415
        %v2432 = vmul.f32 %v2415, %v2431
        %v2433 = vsub.f32 1.0, %v2432
        %v2434 = vmul.f32 %v2431, %v2433
        %v2435 = vadd.f32 %v2431, %v2434
        %vm2436 = vweird.f32 %v2415
        %vm2437 = vweird.f32 %v2431
        %vm2438 = vmor %vm2436, %vm2437
        %v2439 = vsel %vm2438, %v2431, %v2435
        %v2440 = vand.u32 2147483647, %v2415
        %vm2441 = vcmp.eq.f32.partialorder %v2440, 8.507059e+37
        %v2442 = vand.u32 %v2415, 2147483648
        %v2443 = vor.u32 1.1754944e-38, %v2442
        %v2444 = vsel %vm2441, %v2443, %v2439
        %v2445 = vmul.f32 1.0, %v2444
        %v2446 = vrcp.pop %v2416
        %v2447 = vmul.f32 %v2416, %v2446
        %v2448 = vsub.f32 1.0, %v2447
        %v2449 = vmul.f32 %v2446, %v2448
        %v2450 = vadd.f32 %v2446, %v2449
        %vm2451 = vweird.f32 %v2416
        %vm2452 = vweird.f32 %v2446
        %vm2453 = vmor %vm2451, %vm2452
        %v2454 = vsel %vm2453, %v2446, %v2450
        %v2455 = vand.u32 2147483647, %v2416
        %vm2456 = vcmp.eq.f32.partialorder %v2455, 8.507059e+37
        %v2457 = vand.u32 %v2416, 2147483648
        %v2458 = vor.u32 1.1754944e-38, %v2457
        %v2459 = vsel %vm2456, %v2458, %v2454
        %v2460 = vmul.f32 1.0, %v2459
        %v2461 = vrcp.pop %v2417
        %v2462 = vmul.f32 %v2417, %v2461
        %v2463 = vsub.f32 1.0, %v2462
        %v2464 = vmul.f32 %v2461, %v2463
        %v2465 = vadd.f32 %v2461, %v2464
        %vm2466 = vweird.f32 %v2417
        %vm2467 = vweird.f32 %v2461
        %vm2468 = vmor %vm2466, %vm2467
        %v2469 = vsel %vm2468, %v2461, %v2465
        %v2470 = vand.u32 2147483647, %v2417
        %vm2471 = vcmp.eq.f32.partialorder %v2470, 8.507059e+37
        %v2472 = vand.u32 %v2417, 2147483648
        %v2473 = vor.u32 1.1754944e-38, %v2472
        %v2474 = vsel %vm2471, %v2473, %v2469
        %v2475 = vmul.f32 1.0, %v2474
        %v2476 = vrcp.pop %v2418
        %v2477 = vmul.f32 %v2418, %v2476
        %v2478 = vsub.f32 1.0, %v2477
        %v2479 = vmul.f32 %v2476, %v2478
        %v2480 = vadd.f32 %v2476, %v2479
        %vm2481 = vweird.f32 %v2418
        %vm2482 = vweird.f32 %v2476
        %vm2483 = vmor %vm2481, %vm2482
        %v2484 = vsel %vm2483, %v2476, %v2480
        %v2485 = vand.u32 2147483647, %v2418
        %vm2486 = vcmp.eq.f32.partialorder %v2485, 8.507059e+37
        %v2487 = vand.u32 %v2418, 2147483648
        %v2488 = vor.u32 1.1754944e-38, %v2487
        %v2489 = vsel %vm2486, %v2488, %v2484
        %v2490 = vmul.f32 1.0, %v2489
        %v2491 = vrcp.pop %v2419
        %v2492 = vmul.f32 %v2419, %v2491
        %v2493 = vsub.f32 1.0, %v2492
        %v2494 = vmul.f32 %v2491, %v2493
        %v2495 = vadd.f32 %v2491, %v2494
        %vm2496 = vweird.f32 %v2419
        %vm2497 = vweird.f32 %v2491
        %vm2498 = vmor %vm2496, %vm2497
        %v2499 = vsel %vm2498, %v2491, %v2495
        %v2500 = vand.u32 2147483647, %v2419
        %vm2501 = vcmp.eq.f32.partialorder %v2500, 8.507059e+37
        %v2502 = vand.u32 %v2419, 2147483648
        %v2503 = vor.u32 1.1754944e-38, %v2502
        %v2504 = vsel %vm2501, %v2503, %v2499
        %v2505 = vmul.f32 1.0, %v2504
        %v2506 = vrcp.pop %v2420
        %v2507 = vmul.f32 %v2420, %v2506
        %v2508 = vsub.f32 1.0, %v2507
        %v2509 = vmul.f32 %v2506, %v2508
        %v2510 = vadd.f32 %v2506, %v2509
        %vm2511 = vweird.f32 %v2420
        %vm2512 = vweird.f32 %v2506
        %vm2513 = vmor %vm2511, %vm2512
        %v2514 = vsel %vm2513, %v2506, %v2510
        %v2515 = vand.u32 2147483647, %v2420
        %vm2516 = vcmp.eq.f32.partialorder %v2515, 8.507059e+37
        %v2517 = vand.u32 %v2420, 2147483648
        %v2518 = vor.u32 1.1754944e-38, %v2517
        %v2519 = vsel %vm2516, %v2518, %v2514
        %v2520 = vmul.f32 1.0, %v2519
        %v2521 = vrcp.pop %v2421
        %v2522 = vmul.f32 %v2421, %v2521
        %v2523 = vsub.f32 1.0, %v2522
        %v2524 = vmul.f32 %v2521, %v2523
        %v2525 = vadd.f32 %v2521, %v2524
        %vm2526 = vweird.f32 %v2421
        %vm2527 = vweird.f32 %v2521
        %vm2528 = vmor %vm2526, %vm2527
        %v2529 = vsel %vm2528, %v2521, %v2525
        %v2530 = vand.u32 2147483647, %v2421
        %vm2531 = vcmp.eq.f32.partialorder %v2530, 8.507059e+37
        %v2532 = vand.u32 %v2421, 2147483648
        %v2533 = vor.u32 1.1754944e-38, %v2532
        %v2534 = vsel %vm2531, %v2533, %v2529
        %v2535 = vmul.f32 1.0, %v2534
        %v2536 = vrcp.pop %v2422
        %v2537 = vmul.f32 %v2422, %v2536
        %v2538 = vsub.f32 1.0, %v2537
        %v2539 = vmul.f32 %v2536, %v2538
        %v2540 = vadd.f32 %v2536, %v2539
        %vm2541 = vweird.f32 %v2422
        %vm2542 = vweird.f32 %v2536
        %vm2543 = vmor %vm2541, %vm2542
        %v2544 = vsel %vm2543, %v2536, %v2540
        %v2545 = vand.u32 2147483647, %v2422
        %vm2546 = vcmp.eq.f32.partialorder %v2545, 8.507059e+37
        %v2547 = vand.u32 %v2422, 2147483648
        %v2548 = vor.u32 1.1754944e-38, %v2547
        %v2549 = vsel %vm2546, %v2548, %v2544
        %v2550 = vmul.f32 1.0, %v2549
        %v2551 = vrcp.pop %v2423
        %v2552 = vmul.f32 %v2423, %v2551
        %v2553 = vsub.f32 1.0, %v2552
        %v2554 = vmul.f32 %v2551, %v2553
        %v2555 = vadd.f32 %v2551, %v2554
        %vm2556 = vweird.f32 %v2423
        %vm2557 = vweird.f32 %v2551
        %vm2558 = vmor %vm2556, %vm2557
        %v2559 = vsel %vm2558, %v2551, %v2555
        %v2560 = vand.u32 2147483647, %v2423
        %vm2561 = vcmp.eq.f32.partialorder %v2560, 8.507059e+37
        %v2562 = vand.u32 %v2423, 2147483648
        %v2563 = vor.u32 1.1754944e-38, %v2562
        %v2564 = vsel %vm2561, %v2563, %v2559
        %v2565 = vmul.f32 1.0, %v2564
        %v2566 = vrcp.pop %v2424
        %v2567 = vmul.f32 %v2424, %v2566
        %v2568 = vsub.f32 1.0, %v2567
        %v2569 = vmul.f32 %v2566, %v2568
        %v2570 = vadd.f32 %v2566, %v2569
        %vm2571 = vweird.f32 %v2424
        %vm2572 = vweird.f32 %v2566
        %vm2573 = vmor %vm2571, %vm2572
        %v2574 = vsel %vm2573, %v2566, %v2570
        %v2575 = vand.u32 2147483647, %v2424
        %vm2576 = vcmp.eq.f32.partialorder %v2575, 8.507059e+37
        %v2577 = vand.u32 %v2424, 2147483648
        %v2578 = vor.u32 1.1754944e-38, %v2577
        %v2579 = vsel %vm2576, %v2578, %v2574
        %v2580 = vmul.f32 1.0, %v2579
        %v2581 = vrcp.pop %v2425
        %v2582 = vmul.f32 %v2425, %v2581
        %v2583 = vsub.f32 1.0, %v2582
        %v2584 = vmul.f32 %v2581, %v2583
        %v2585 = vadd.f32 %v2581, %v2584
        %vm2586 = vweird.f32 %v2425
        %vm2587 = vweird.f32 %v2581
        %vm2588 = vmor %vm2586, %vm2587
        %v2589 = vsel %vm2588, %v2581, %v2585
        %v2590 = vand.u32 2147483647, %v2425
        %vm2591 = vcmp.eq.f32.partialorder %v2590, 8.507059e+37
        %v2592 = vand.u32 %v2425, 2147483648
        %v2593 = vor.u32 1.1754944e-38, %v2592
        %v2594 = vsel %vm2591, %v2593, %v2589
        %v2595 = vmul.f32 1.0, %v2594
        %v2596 = vrcp.pop %v2426
        %v2597 = vmul.f32 %v2426, %v2596
        %v2598 = vsub.f32 1.0, %v2597
        %v2599 = vmul.f32 %v2596, %v2598
        %v2600 = vadd.f32 %v2596, %v2599
        %vm2601 = vweird.f32 %v2426
        %vm2602 = vweird.f32 %v2596
        %vm2603 = vmor %vm2601, %vm2602
        %v2604 = vsel %vm2603, %v2596, %v2600
        %v2605 = vand.u32 2147483647, %v2426
        %vm2606 = vcmp.eq.f32.partialorder %v2605, 8.507059e+37
        %v2607 = vand.u32 %v2426, 2147483648
        %v2608 = vor.u32 1.1754944e-38, %v2607
        %v2609 = vsel %vm2606, %v2608, %v2604
        %v2610 = vmul.f32 1.0, %v2609
        %v2611 = vrcp.pop %v2427
        %v2612 = vmul.f32 %v2427, %v2611
        %v2613 = vsub.f32 1.0, %v2612
        %v2614 = vmul.f32 %v2611, %v2613
        %v2615 = vadd.f32 %v2611, %v2614
        %vm2616 = vweird.f32 %v2427
        %vm2617 = vweird.f32 %v2611
        %vm2618 = vmor %vm2616, %vm2617
        %v2619 = vsel %vm2618, %v2611, %v2615
        %v2620 = vand.u32 2147483647, %v2427
        %vm2621 = vcmp.eq.f32.partialorder %v2620, 8.507059e+37
        %v2622 = vand.u32 %v2427, 2147483648
        %v2623 = vor.u32 1.1754944e-38, %v2622
        %v2624 = vsel %vm2621, %v2623, %v2619
        %v2625 = vmul.f32 1.0, %v2624
        %v2626 = vrcp.pop %v2428
        %v2627 = vmul.f32 %v2428, %v2626
        %v2628 = vsub.f32 1.0, %v2627
        %v2629 = vmul.f32 %v2626, %v2628
        %v2630 = vadd.f32 %v2626, %v2629
        %vm2631 = vweird.f32 %v2428
        %vm2632 = vweird.f32 %v2626
        %vm2633 = vmor %vm2631, %vm2632
        %v2634 = vsel %vm2633, %v2626, %v2630
        %v2635 = vand.u32 2147483647, %v2428
        %vm2636 = vcmp.eq.f32.partialorder %v2635, 8.507059e+37
        %v2637 = vand.u32 %v2428, 2147483648
        %v2638 = vor.u32 1.1754944e-38, %v2637
        %v2639 = vsel %vm2636, %v2638, %v2634
        %v2640 = vmul.f32 1.0, %v2639
        %v2641 = vrcp.pop %v2429
        %v2642 = vmul.f32 %v2429, %v2641
        %v2643 = vsub.f32 1.0, %v2642
        %v2644 = vmul.f32 %v2641, %v2643
        %v2645 = vadd.f32 %v2641, %v2644
        %vm2646 = vweird.f32 %v2429
        %vm2647 = vweird.f32 %v2641
        %vm2648 = vmor %vm2646, %vm2647
        %v2649 = vsel %vm2648, %v2641, %v2645
        %v2650 = vand.u32 2147483647, %v2429
        %vm2651 = vcmp.eq.f32.partialorder %v2650, 8.507059e+37
        %v2652 = vand.u32 %v2429, 2147483648
        %v2653 = vor.u32 1.1754944e-38, %v2652
        %v2654 = vsel %vm2651, %v2653, %v2649
        %v2655 = vmul.f32 1.0, %v2654
        %v2656 = vrcp.pop %v2430
        %v2657 = vmul.f32 %v2430, %v2656
        %v2658 = vsub.f32 1.0, %v2657
        %v2659 = vmul.f32 %v2656, %v2658
        %v2660 = vadd.f32 %v2656, %v2659
        %vm2661 = vweird.f32 %v2430
        %vm2662 = vweird.f32 %v2656
        %vm2663 = vmor %vm2661, %vm2662
        %v2664 = vsel %vm2663, %v2656, %v2660
        %v2665 = vand.u32 2147483647, %v2430
        %vm2666 = vcmp.eq.f32.partialorder %v2665, 8.507059e+37
        %v2667 = vand.u32 %v2430, 2147483648
        %v2668 = vor.u32 1.1754944e-38, %v2667
        %v2669 = vsel %vm2666, %v2668, %v2664
        %v2670 = vmul.f32 1.0, %v2669
        %2671 = vrot.lane.b32.xlu0 %v417, 32
        %v2672 = vpop.permute.xlu0 %2671
        %2673 = vrot.lane.b32.xlu0 %v418, 32
        %v2674 = vpop.permute.xlu0 %2673
        %2675 = vrot.lane.b32.xlu0 %v419, 32
        %v2676 = vpop.permute.xlu0 %2675
        %2677 = vrot.lane.b32.xlu0 %v420, 32
        %v2678 = vpop.permute.xlu0 %2677
        %2679 = vrot.lane.b32.xlu0 %v421, 32
        %v2680 = vpop.permute.xlu0 %2679
        %2681 = vrot.lane.b32.xlu0 %v422, 32
        %v2682 = vpop.permute.xlu0 %2681
        %2683 = vrot.lane.b32.xlu0 %v423, 32
        %v2684 = vpop.permute.xlu0 %2683
        %2685 = vrot.lane.b32.xlu0 %v424, 32
        %v2686 = vpop.permute.xlu0 %2685
        %2687 = vrot.lane.b32.xlu0 %v425, 32
        %v2688 = vpop.permute.xlu0 %2687
        %2689 = vrot.lane.b32.xlu0 %v426, 32
        %v2690 = vpop.permute.xlu0 %2689
        %2691 = vrot.lane.b32.xlu0 %v427, 32
        %v2692 = vpop.permute.xlu0 %2691
        %2693 = vrot.lane.b32.xlu0 %v428, 32
        %v2694 = vpop.permute.xlu0 %2693
        %2695 = vrot.lane.b32.xlu0 %v429, 32
        %v2696 = vpop.permute.xlu0 %2695
        %2697 = vrot.lane.b32.xlu0 %v430, 32
        %v2698 = vpop.permute.xlu0 %2697
        %2699 = vrot.lane.b32.xlu0 %v431, 32
        %v2700 = vpop.permute.xlu0 %2699
        %2701 = vrot.lane.b32.xlu0 %v432, 32
        %v2702 = vpop.permute.xlu0 %2701
        %v2719 = vmul.f32 %v2445, %v2672
        %v2720 = vmul.f32 %v2460, %v2674
        %v2721 = vmul.f32 %v2475, %v2676
        %v2722 = vmul.f32 %v2490, %v2678
        %v2723 = vmul.f32 %v2505, %v2680
        %v2724 = vmul.f32 %v2520, %v2682
        %v2725 = vmul.f32 %v2535, %v2684
        %v2726 = vmul.f32 %v2550, %v2686
        %v2727 = vmul.f32 %v2565, %v2688
        %v2728 = vmul.f32 %v2580, %v2690
        %v2729 = vmul.f32 %v2595, %v2692
        %v2730 = vmul.f32 %v2610, %v2694
        %v2731 = vmul.f32 %v2625, %v2696
        %v2732 = vmul.f32 %v2640, %v2698
        %v2733 = vmul.f32 %v2655, %v2700
        %v2734 = vmul.f32 %v2670, %v2702
        %v2751 = vrot.slane %v2719, 6
        %v2752 = vrot.slane %v2720, 6
        %v2753 = vsel %vm516, %v2751, %v2752
        %v2754 = vrot.slane %v2721, 6
        %v2755 = vsel %vm516, %v2752, %v2754
        %v2756 = vrot.slane %v2722, 6
        %v2757 = vsel %vm516, %v2754, %v2756
        %v2758 = vrot.slane %v2723, 6
        %v2759 = vsel %vm516, %v2756, %v2758
        %v2760 = vrot.slane %v2724, 6
        %v2761 = vsel %vm516, %v2758, %v2760
        %v2762 = vrot.slane %v2725, 6
        %v2763 = vsel %vm516, %v2760, %v2762
        %v2764 = vrot.slane %v2726, 6
        %v2765 = vsel %vm516, %v2762, %v2764
        %v2766 = vrot.slane %v2727, 6
        %v2767 = vsel %vm516, %v2764, %v2766
        %v2768 = vrot.slane %v2728, 6
        %v2769 = vsel %vm516, %v2766, %v2768
        %v2770 = vrot.slane %v2729, 6
        %v2771 = vsel %vm516, %v2768, %v2770
        %v2772 = vrot.slane %v2730, 6
        %v2773 = vsel %vm516, %v2770, %v2772
        %v2774 = vrot.slane %v2731, 6
        %v2775 = vsel %vm516, %v2772, %v2774
        %v2776 = vrot.slane %v2732, 6
        %v2777 = vsel %vm516, %v2774, %v2776
        %v2778 = vrot.slane %v2733, 6
        %v2779 = vsel %vm516, %v2776, %v2778
        %v2780 = vrot.slane %v2734, 6
        %v2781 = vsel %vm516, %v2778, %v2780
        %2782 = vrot.lane.b32.xlu0 %v2751, 96
        %v2783 = vpop.permute.xlu0 %2782
        %2784 = vrot.lane.b32.xlu0 %v2753, 96
        %v2785 = vpop.permute.xlu0 %2784
        %2786 = vrot.lane.b32.xlu0 %v2755, 96
        %v2787 = vpop.permute.xlu0 %2786
        %2788 = vrot.lane.b32.xlu0 %v2757, 96
        %v2789 = vpop.permute.xlu0 %2788
        %2790 = vrot.lane.b32.xlu0 %v2759, 96
        %v2791 = vpop.permute.xlu0 %2790
        %2792 = vrot.lane.b32.xlu0 %v2761, 96
        %v2793 = vpop.permute.xlu0 %2792
        %2794 = vrot.lane.b32.xlu0 %v2763, 96
        %v2795 = vpop.permute.xlu0 %2794
        %2796 = vrot.lane.b32.xlu0 %v2765, 96
        %v2797 = vpop.permute.xlu0 %2796
        %2798 = vrot.lane.b32.xlu0 %v2767, 96
        %v2799 = vpop.permute.xlu0 %2798
        %2800 = vrot.lane.b32.xlu0 %v2769, 96
        %v2801 = vpop.permute.xlu0 %2800
        %2802 = vrot.lane.b32.xlu0 %v2771, 96
        %v2803 = vpop.permute.xlu0 %2802
        %2804 = vrot.lane.b32.xlu0 %v2773, 96
        %v2805 = vpop.permute.xlu0 %2804
        %2806 = vrot.lane.b32.xlu0 %v2775, 96
        %v2807 = vpop.permute.xlu0 %2806
        %2808 = vrot.lane.b32.xlu0 %v2777, 96
        %v2809 = vpop.permute.xlu0 %2808
        %2810 = vrot.lane.b32.xlu0 %v2779, 96
        %v2811 = vpop.permute.xlu0 %2810
        %2812 = vrot.lane.b32.xlu0 %v2781, 96
        %v2813 = vpop.permute.xlu0 %2812
        %2814 = vrot.lane.b32.xlu0 %v2780, 96
        %v2815 = vpop.permute.xlu0 %2814
        %v2833 = vsel %vm516, 0.0, %v2783
        %v2834 = vsel %vm516, %v2815, 0.0
        %v2835 = vmul.f32 %v2833, %v462
        %v2836 = vmul.f32 %v2785, %v463
        %v2837 = vmul.f32 %v2787, %v462
        %v2838 = vmul.f32 %v2789, %v463
        %v2839 = vmul.f32 %v2791, %v462
        %v2840 = vmul.f32 %v2793, %v463
        %v2841 = vmul.f32 %v2795, %v462
        %v2842 = vmul.f32 %v2797, %v463
        %v2843 = vmul.f32 %v2799, %v462
        %v2844 = vmul.f32 %v2801, %v463
        %v2845 = vmul.f32 %v2803, %v462
        %v2846 = vmul.f32 %v2805, %v463
        %v2847 = vmul.f32 %v2807, %v462
        %v2848 = vmul.f32 %v2809, %v463
        %v2849 = vmul.f32 %v2811, %v462
        %v2850 = vmul.f32 %v2813, %v463
        %v2851 = vld [vmem:[#allocation10] sm:$0xff]
        %v2852 = vld [vmem:[#allocation10 + $0x8] sm:$0xff]
        %v2853 = vld [vmem:[#allocation10 + $0x10] sm:$0xff]
        %v2854 = vld [vmem:[#allocation10 + $0x18] sm:$0xff]
        %v2855 = vmul.f32 %v2833, %v592
        %v2856 = vmul.f32 %v2785, %v594
        %v2857 = vmul.f32 %v2787, %v595
        %v2858 = vmul.f32 %v2789, %v594
        %v2859 = vmul.f32 %v2791, %v595
        %v2860 = vmul.f32 %v2793, %v594
        %v2861 = vmul.f32 %v2795, %v595
        %v2862 = vmul.f32 %v2797, %v594
        %v2863 = vmul.f32 %v2799, %v595
        %v2864 = vmul.f32 %v2801, %v594
        %v2865 = vmul.f32 %v2803, %v595
        %v2866 = vmul.f32 %v2805, %v594
        %v2867 = vmul.f32 %v2807, %v595
        %v2868 = vmul.f32 %v2809, %v594
        %v2869 = vmul.f32 %v2811, %v595
        %v2870 = vmul.f32 %v2813, %v594
        %v2871 = vmul.f32 %v2834, %v593
        %s2872 = scalar_lea.vmem [#allocation10], 32
        %v2873 = vld [vmem:[%s2872] sm:$0xff]
        %v2874 = vld [vmem:[%s2872 + $0x8] sm:$0xff]
        %v2875 = vld [vmem:[%s2872 + $0x10] sm:$0xff]
        %v2876 = vld [vmem:[%s2872 + $0x18] sm:$0xff]
        %v2894 = vrot.slane %v2855, 1
        %v2895 = vrot.slane %v2856, 1
        %v2896 = vsel %vm641, %v2894, %v2895
        %v2897 = vrot.slane %v2857, 1
        %v2898 = vsel %vm641, %v2895, %v2897
        %v2899 = vrot.slane %v2858, 1
        %v2900 = vsel %vm641, %v2897, %v2899
        %v2901 = vrot.slane %v2859, 1
        %v2902 = vsel %vm641, %v2899, %v2901
        %v2903 = vrot.slane %v2860, 1
        %v2904 = vsel %vm641, %v2901, %v2903
        %v2905 = vrot.slane %v2861, 1
        %v2906 = vsel %vm641, %v2903, %v2905
        %v2907 = vrot.slane %v2862, 1
        %v2908 = vsel %vm641, %v2905, %v2907
        %v2909 = vrot.slane %v2863, 1
        %v2910 = vsel %vm641, %v2907, %v2909
        %v2911 = vrot.slane %v2864, 1
        %v2912 = vsel %vm641, %v2909, %v2911
        %v2913 = vrot.slane %v2865, 1
        %v2914 = vsel %vm641, %v2911, %v2913
        %v2915 = vrot.slane %v2866, 1
        %v2916 = vsel %vm641, %v2913, %v2915
        %v2917 = vrot.slane %v2867, 1
        %v2918 = vsel %vm641, %v2915, %v2917
        %v2919 = vrot.slane %v2868, 1
        %v2920 = vsel %vm641, %v2917, %v2919
        %v2921 = vrot.slane %v2869, 1
        %v2922 = vsel %vm641, %v2919, %v2921
        %v2923 = vrot.slane %v2870, 1
        %v2924 = vsel %vm641, %v2921, %v2923
        %v2925 = vrot.slane %v2871, 1
        %v2926 = vsel %vm641, %v2923, %v2925
        %v2927 = vsel %vm1597, %v2896, 0
        %v2929 = vsel %vm1597, %v2898, 0
        %v2931 = vsel %vm1597, %v2900, 0
        %v2933 = vsel %vm1597, %v2902, 0
        %v2935 = vsel %vm1597, %v2904, 0
        %v2937 = vsel %vm1597, %v2906, 0
        %v2939 = vsel %vm1597, %v2908, 0
        %v2941 = vsel %vm1597, %v2910, 0
        %v2943 = vsel %vm1597, %v2912, 0
        %v2945 = vsel %vm1597, %v2914, 0
        %v2947 = vsel %vm1597, %v2916, 0
        %v2949 = vsel %vm1597, %v2918, 0
        %v2951 = vsel %vm1597, %v2920, 0
        %v2953 = vsel %vm1597, %v2922, 0
        %v2955 = vsel %vm1597, %v2924, 0
        %v2957 = vsel %vm1597, %v2926, 0
        %2959 = vmatpush.msra.mxu0 0.0
        %2960 = vmatpush.msra.mxu0 0.0
        %2961 = vmatpush.msra.mxu0 0.0
        %2962 = vmatpush.msra.mxu0 0.0
        %2963 = vmatpush.msra.mxu0 0.0
        %2964 = vmatpush.msra.mxu0 0.0
        %2965 = vmatpush.msra.mxu0 0.0
        %2966 = vmatpush.msra.mxu0 0.0
        %2967 = vmatpush.msra.mxu0 0.0
        %2968 = vmatpush.msra.mxu0 0.0
        %2969 = vmatpush.msra.mxu0 0.0
        %2970 = vmatpush.msra.mxu0 0.0
        %2971 = vmatpush.msra.mxu0 %v2876
        %2972 = vmatpush.msra.mxu0 %v2875
        %2973 = vmatpush.msra.mxu0 %v2874
        %2974 = vmatpush.msra.mxu0 %v2873
        %2975 = vmatmul.f32.gmra.mxu0 %v2927
        %v2976 = vpop.f32.mrf.mxu0
        %v2977 = vadd.f32 0.0, %v2976
        %2978 = vmatmul.f32.gmra.mxu0 %v2929
        %v2979 = vpop.f32.mrf.mxu0
        %v2980 = vadd.f32 0.0, %v2979
        %2981 = vmatmul.f32.gmra.mxu0 %v2931
        %v2982 = vpop.f32.mrf.mxu0
        %v2983 = vadd.f32 0.0, %v2982
        %2984 = vmatmul.f32.gmra.mxu0 %v2933
        %v2985 = vpop.f32.mrf.mxu0
        %v2986 = vadd.f32 0.0, %v2985
        %2987 = vmatmul.f32.gmra.mxu0 %v2935
        %v2988 = vpop.f32.mrf.mxu0
        %v2989 = vadd.f32 0.0, %v2988
        %2990 = vmatmul.f32.gmra.mxu0 %v2937
        %v2991 = vpop.f32.mrf.mxu0
        %v2992 = vadd.f32 0.0, %v2991
        %2993 = vmatmul.f32.gmra.mxu0 %v2939
        %v2994 = vpop.f32.mrf.mxu0
        %v2995 = vadd.f32 0.0, %v2994
        %2996 = vmatmul.f32.gmra.mxu0 %v2941
        %v2997 = vpop.f32.mrf.mxu0
        %v2998 = vadd.f32 0.0, %v2997
        %2999 = vmatmul.f32.gmra.mxu0 %v2943
        %v3000 = vpop.f32.mrf.mxu0
        %v3001 = vadd.f32 0.0, %v3000
        %3002 = vmatmul.f32.gmra.mxu0 %v2945
        %v3003 = vpop.f32.mrf.mxu0
        %v3004 = vadd.f32 0.0, %v3003
        %3005 = vmatmul.f32.gmra.mxu0 %v2947
        %v3006 = vpop.f32.mrf.mxu0
        %v3007 = vadd.f32 0.0, %v3006
        %3008 = vmatmul.f32.gmra.mxu0 %v2949
        %v3009 = vpop.f32.mrf.mxu0
        %v3010 = vadd.f32 0.0, %v3009
        %3011 = vmatmul.f32.gmra.mxu0 %v2951
        %v3012 = vpop.f32.mrf.mxu0
        %v3013 = vadd.f32 0.0, %v3012
        %3014 = vmatmul.f32.gmra.mxu0 %v2953
        %v3015 = vpop.f32.mrf.mxu0
        %v3016 = vadd.f32 0.0, %v3015
        %3017 = vmatmul.f32.gmra.mxu0 %v2955
        %v3018 = vpop.f32.mrf.mxu0
        %v3019 = vadd.f32 0.0, %v3018
        %3020 = vmatmul.f32.gmra.mxu0 %v2957
        %v3021 = vpop.f32.mrf.mxu0
        %v3022 = vadd.f32 0.0, %v3021
        %3023 = vdwg.mxu0
        %v3025 = vsel %vm1597, %v2835, 0
        %v3028 = vsel %vm1597, %v2836, 0
        %v3031 = vsel %vm1597, %v2837, 0
        %v3034 = vsel %vm1597, %v2838, 0
        %v3037 = vsel %vm1597, %v2839, 0
        %v3040 = vsel %vm1597, %v2840, 0
        %v3043 = vsel %vm1597, %v2841, 0
        %v3046 = vsel %vm1597, %v2842, 0
        %v3049 = vsel %vm1597, %v2843, 0
        %v3052 = vsel %vm1597, %v2844, 0
        %v3055 = vsel %vm1597, %v2845, 0
        %v3058 = vsel %vm1597, %v2846, 0
        %v3061 = vsel %vm1597, %v2847, 0
        %v3064 = vsel %vm1597, %v2848, 0
        %v3067 = vsel %vm1597, %v2849, 0
        %v3070 = vsel %vm1597, %v2850, 0
        %3072 = vmatpush.msra.mxu0 0.0
        %3073 = vmatpush.msra.mxu0 0.0
        %3074 = vmatpush.msra.mxu0 0.0
        %3075 = vmatpush.msra.mxu0 0.0
        %3076 = vmatpush.msra.mxu0 0.0
        %3077 = vmatpush.msra.mxu0 0.0
        %3078 = vmatpush.msra.mxu0 0.0
        %3079 = vmatpush.msra.mxu0 0.0
        %3080 = vmatpush.msra.mxu0 0.0
        %3081 = vmatpush.msra.mxu0 0.0
        %3082 = vmatpush.msra.mxu0 0.0
        %3083 = vmatpush.msra.mxu0 0.0
        %3084 = vmatpush.msra.mxu0 %v2854
        %3085 = vmatpush.msra.mxu0 %v2853
        %3086 = vmatpush.msra.mxu0 %v2852
        %3087 = vmatpush.msra.mxu0 %v2851
        %3088 = vmatmul.f32.gmra.mxu0 %v3025
        %v3089 = vpop.f32.mrf.mxu0
        %v3090 = vadd.f32 %v2977, %v3089
        %3091 = vmatmul.f32.gmra.mxu0 %v3028
        %v3092 = vpop.f32.mrf.mxu0
        %v3093 = vadd.f32 %v2980, %v3092
        %3094 = vmatmul.f32.gmra.mxu0 %v3031
        %v3095 = vpop.f32.mrf.mxu0
        %v3096 = vadd.f32 %v2983, %v3095
        %3097 = vmatmul.f32.gmra.mxu0 %v3034
        %v3098 = vpop.f32.mrf.mxu0
        %v3099 = vadd.f32 %v2986, %v3098
        %3100 = vmatmul.f32.gmra.mxu0 %v3037
        %v3101 = vpop.f32.mrf.mxu0
        %v3102 = vadd.f32 %v2989, %v3101
        %3103 = vmatmul.f32.gmra.mxu0 %v3040
        %v3104 = vpop.f32.mrf.mxu0
        %v3105 = vadd.f32 %v2992, %v3104
        %3106 = vmatmul.f32.gmra.mxu0 %v3043
        %v3107 = vpop.f32.mrf.mxu0
        %v3108 = vadd.f32 %v2995, %v3107
        %3109 = vmatmul.f32.gmra.mxu0 %v3046
        %v3110 = vpop.f32.mrf.mxu0
        %v3111 = vadd.f32 %v2998, %v3110
        %3112 = vmatmul.f32.gmra.mxu0 %v3049
        %v3113 = vpop.f32.mrf.mxu0
        %v3114 = vadd.f32 %v3001, %v3113
        %3115 = vmatmul.f32.gmra.mxu0 %v3052
        %v3116 = vpop.f32.mrf.mxu0
        %v3117 = vadd.f32 %v3004, %v3116
        %3118 = vmatmul.f32.gmra.mxu0 %v3055
        %v3119 = vpop.f32.mrf.mxu0
        %v3120 = vadd.f32 %v3007, %v3119
        %3121 = vmatmul.f32.gmra.mxu0 %v3058
        %v3122 = vpop.f32.mrf.mxu0
        %v3123 = vadd.f32 %v3010, %v3122
        %3124 = vmatmul.f32.gmra.mxu0 %v3061
        %v3125 = vpop.f32.mrf.mxu0
        %v3126 = vadd.f32 %v3013, %v3125
        %3127 = vmatmul.f32.gmra.mxu0 %v3064
        %v3128 = vpop.f32.mrf.mxu0
        %v3129 = vadd.f32 %v3016, %v3128
        %3130 = vmatmul.f32.gmra.mxu0 %v3067
        %v3131 = vpop.f32.mrf.mxu0
        %v3132 = vadd.f32 %v3019, %v3131
        %3133 = vmatmul.f32.gmra.mxu0 %v3070
        %v3134 = vpop.f32.mrf.mxu0
        %v3135 = vadd.f32 %v3022, %v3134
        %3136 = vdwg.mxu0
        %s3137 = scalar_lea.vmem [#allocation10], 64
        %v3138 = vld [vmem:[%s3137] sm:$0xff]
        %v3139 = vld [vmem:[%s3137 + $0x8] sm:$0xff]
        %v3140 = vld [vmem:[%s3137 + $0x10] sm:$0xff]
        %v3141 = vld [vmem:[%s3137 + $0x18] sm:$0xff]
        %v3144 = vrot.slane %v2833, 2
        %v3145 = vrot.slane %v2785, 2
        %v3146 = vsel %vm895, %v3144, %v3145
        %v3147 = vrot.slane %v2787, 2
        %v3148 = vsel %vm895, %v3145, %v3147
        %v3149 = vrot.slane %v2789, 2
        %v3150 = vsel %vm895, %v3147, %v3149
        %v3151 = vrot.slane %v2791, 2
        %v3152 = vsel %vm895, %v3149, %v3151
        %v3153 = vrot.slane %v2793, 2
        %v3154 = vsel %vm895, %v3151, %v3153
        %v3155 = vrot.slane %v2795, 2
        %v3156 = vsel %vm895, %v3153, %v3155
        %v3157 = vrot.slane %v2797, 2
        %v3158 = vsel %vm895, %v3155, %v3157
        %v3159 = vrot.slane %v2799, 2
        %v3160 = vsel %vm895, %v3157, %v3159
        %v3161 = vrot.slane %v2801, 2
        %v3162 = vsel %vm895, %v3159, %v3161
        %v3163 = vrot.slane %v2803, 2
        %v3164 = vsel %vm895, %v3161, %v3163
        %v3165 = vrot.slane %v2805, 2
        %v3166 = vsel %vm895, %v3163, %v3165
        %v3167 = vrot.slane %v2807, 2
        %v3168 = vsel %vm895, %v3165, %v3167
        %v3169 = vrot.slane %v2809, 2
        %v3170 = vsel %vm895, %v3167, %v3169
        %v3171 = vrot.slane %v2811, 2
        %v3172 = vsel %vm895, %v3169, %v3171
        %v3173 = vrot.slane %v2813, 2
        %v3174 = vsel %vm895, %v3171, %v3173
        %v3175 = vrot.slane %v2834, 2
        %v3176 = vsel %vm895, %v3173, %v3175
        %v3177 = vsel %vm1597, %v3146, 0
        %v3179 = vsel %vm1597, %v3148, 0
        %v3181 = vsel %vm1597, %v3150, 0
        %v3183 = vsel %vm1597, %v3152, 0
        %v3185 = vsel %vm1597, %v3154, 0
        %v3187 = vsel %vm1597, %v3156, 0
        %v3189 = vsel %vm1597, %v3158, 0
        %v3191 = vsel %vm1597, %v3160, 0
        %v3193 = vsel %vm1597, %v3162, 0
        %v3195 = vsel %vm1597, %v3164, 0
        %v3197 = vsel %vm1597, %v3166, 0
        %v3199 = vsel %vm1597, %v3168, 0
        %v3201 = vsel %vm1597, %v3170, 0
        %v3203 = vsel %vm1597, %v3172, 0
        %v3205 = vsel %vm1597, %v3174, 0
        %v3207 = vsel %vm1597, %v3176, 0
        %3209 = vmatpush.msra.mxu0 0.0
        %3210 = vmatpush.msra.mxu0 0.0
        %3211 = vmatpush.msra.mxu0 0.0
        %3212 = vmatpush.msra.mxu0 0.0
        %3213 = vmatpush.msra.mxu0 0.0
        %3214 = vmatpush.msra.mxu0 0.0
        %3215 = vmatpush.msra.mxu0 0.0
        %3216 = vmatpush.msra.mxu0 0.0
        %3217 = vmatpush.msra.mxu0 0.0
        %3218 = vmatpush.msra.mxu0 0.0
        %3219 = vmatpush.msra.mxu0 0.0
        %3220 = vmatpush.msra.mxu0 0.0
        %3221 = vmatpush.msra.mxu0 %v3141
        %3222 = vmatpush.msra.mxu0 %v3140
        %3223 = vmatpush.msra.mxu0 %v3139
        %3224 = vmatpush.msra.mxu0 %v3138
        %3225 = vmatmul.f32.gmra.mxu0 %v3177
        %v3226 = vpop.f32.mrf.mxu0
        %v3227 = vadd.f32 0.0, %v3226
        %3228 = vmatmul.f32.gmra.mxu0 %v3179
        %v3229 = vpop.f32.mrf.mxu0
        %v3230 = vadd.f32 0.0, %v3229
        %3231 = vmatmul.f32.gmra.mxu0 %v3181
        %v3232 = vpop.f32.mrf.mxu0
        %v3233 = vadd.f32 0.0, %v3232
        %3234 = vmatmul.f32.gmra.mxu0 %v3183
        %v3235 = vpop.f32.mrf.mxu0
        %v3236 = vadd.f32 0.0, %v3235
        %3237 = vmatmul.f32.gmra.mxu0 %v3185
        %v3238 = vpop.f32.mrf.mxu0
        %v3239 = vadd.f32 0.0, %v3238
        %3240 = vmatmul.f32.gmra.mxu0 %v3187
        %v3241 = vpop.f32.mrf.mxu0
        %v3242 = vadd.f32 0.0, %v3241
        %3243 = vmatmul.f32.gmra.mxu0 %v3189
        %v3244 = vpop.f32.mrf.mxu0
        %v3245 = vadd.f32 0.0, %v3244
        %3246 = vmatmul.f32.gmra.mxu0 %v3191
        %v3247 = vpop.f32.mrf.mxu0
        %v3248 = vadd.f32 0.0, %v3247
        %3249 = vmatmul.f32.gmra.mxu0 %v3193
        %v3250 = vpop.f32.mrf.mxu0
        %v3251 = vadd.f32 0.0, %v3250
        %3252 = vmatmul.f32.gmra.mxu0 %v3195
        %v3253 = vpop.f32.mrf.mxu0
        %v3254 = vadd.f32 0.0, %v3253
        %3255 = vmatmul.f32.gmra.mxu0 %v3197
        %v3256 = vpop.f32.mrf.mxu0
        %v3257 = vadd.f32 0.0, %v3256
        %3258 = vmatmul.f32.gmra.mxu0 %v3199
        %v3259 = vpop.f32.mrf.mxu0
        %v3260 = vadd.f32 0.0, %v3259
        %3261 = vmatmul.f32.gmra.mxu0 %v3201
        %v3262 = vpop.f32.mrf.mxu0
        %v3263 = vadd.f32 0.0, %v3262
        %3264 = vmatmul.f32.gmra.mxu0 %v3203
        %v3265 = vpop.f32.mrf.mxu0
        %v3266 = vadd.f32 0.0, %v3265
        %3267 = vmatmul.f32.gmra.mxu0 %v3205
        %v3268 = vpop.f32.mrf.mxu0
        %v3269 = vadd.f32 0.0, %v3268
        %3270 = vmatmul.f32.gmra.mxu0 %v3207
        %v3271 = vpop.f32.mrf.mxu0
        %v3272 = vadd.f32 0.0, %v3271
        %3273 = vdwg.mxu0
        %v3274 = vadd.f32 %v3090, %v3227
        %v3275 = vadd.f32 %v3093, %v3230
        %v3276 = vadd.f32 %v3096, %v3233
        %v3277 = vadd.f32 %v3099, %v3236
        %v3278 = vadd.f32 %v3102, %v3239
        %v3279 = vadd.f32 %v3105, %v3242
        %v3280 = vadd.f32 %v3108, %v3245
        %v3281 = vadd.f32 %v3111, %v3248
        %v3282 = vadd.f32 %v3114, %v3251
        %v3283 = vadd.f32 %v3117, %v3254
        %v3284 = vadd.f32 %v3120, %v3257
        %v3285 = vadd.f32 %v3123, %v3260
        %v3286 = vadd.f32 %v3126, %v3263
        %v3287 = vadd.f32 %v3129, %v3266
        %v3288 = vadd.f32 %v3132, %v3269
        %v3289 = vadd.f32 %v3135, %v3272
        %v3290 = vmul.f32 %v2833, %v1045
        %v3291 = vmul.f32 %v2785, %v1047
        %v3292 = vmul.f32 %v2787, %v1048
        %v3293 = vmul.f32 %v2789, %v1047
        %v3294 = vmul.f32 %v2791, %v1048
        %v3295 = vmul.f32 %v2793, %v1047
        %v3296 = vmul.f32 %v2795, %v1048
        %v3297 = vmul.f32 %v2797, %v1047
        %v3298 = vmul.f32 %v2799, %v1048
        %v3299 = vmul.f32 %v2801, %v1047
        %v3300 = vmul.f32 %v2803, %v1048
        %v3301 = vmul.f32 %v2805, %v1047
        %v3302 = vmul.f32 %v2807, %v1048
        %v3303 = vmul.f32 %v2809, %v1047
        %v3304 = vmul.f32 %v2811, %v1048
        %v3305 = vmul.f32 %v2813, %v1047
        %v3306 = vmul.f32 %v2834, %v1046
        %s3307 = scalar_lea.vmem [#allocation10], 96
        %v3308 = vld [vmem:[%s3307] sm:$0xff]
        %v3309 = vld [vmem:[%s3307 + $0x8] sm:$0xff]
        %v3310 = vld [vmem:[%s3307 + $0x10] sm:$0xff]
        %v3311 = vld [vmem:[%s3307 + $0x18] sm:$0xff]
        %v3329 = vrot.slane %v3290, 3
        %v3330 = vrot.slane %v3291, 3
        %v3331 = vsel %vm1094, %v3329, %v3330
        %v3332 = vrot.slane %v3292, 3
        %v3333 = vsel %vm1094, %v3330, %v3332
        %v3334 = vrot.slane %v3293, 3
        %v3335 = vsel %vm1094, %v3332, %v3334
        %v3336 = vrot.slane %v3294, 3
        %v3337 = vsel %vm1094, %v3334, %v3336
        %v3338 = vrot.slane %v3295, 3
        %v3339 = vsel %vm1094, %v3336, %v3338
        %v3340 = vrot.slane %v3296, 3
        %v3341 = vsel %vm1094, %v3338, %v3340
        %v3342 = vrot.slane %v3297, 3
        %v3343 = vsel %vm1094, %v3340, %v3342
        %v3344 = vrot.slane %v3298, 3
        %v3345 = vsel %vm1094, %v3342, %v3344
        %v3346 = vrot.slane %v3299, 3
        %v3347 = vsel %vm1094, %v3344, %v3346
        %v3348 = vrot.slane %v3300, 3
        %v3349 = vsel %vm1094, %v3346, %v3348
        %v3350 = vrot.slane %v3301, 3
        %v3351 = vsel %vm1094, %v3348, %v3350
        %v3352 = vrot.slane %v3302, 3
        %v3353 = vsel %vm1094, %v3350, %v3352
        %v3354 = vrot.slane %v3303, 3
        %v3355 = vsel %vm1094, %v3352, %v3354
        %v3356 = vrot.slane %v3304, 3
        %v3357 = vsel %vm1094, %v3354, %v3356
        %v3358 = vrot.slane %v3305, 3
        %v3359 = vsel %vm1094, %v3356, %v3358
        %v3360 = vrot.slane %v3306, 3
        %v3361 = vsel %vm1094, %v3358, %v3360
        %v3362 = vsel %vm1597, %v3331, 0
        %v3364 = vsel %vm1597, %v3333, 0
        %v3366 = vsel %vm1597, %v3335, 0
        %v3368 = vsel %vm1597, %v3337, 0
        %v3370 = vsel %vm1597, %v3339, 0
        %v3372 = vsel %vm1597, %v3341, 0
        %v3374 = vsel %vm1597, %v3343, 0
        %v3376 = vsel %vm1597, %v3345, 0
        %v3378 = vsel %vm1597, %v3347, 0
        %v3380 = vsel %vm1597, %v3349, 0
        %v3382 = vsel %vm1597, %v3351, 0
        %v3384 = vsel %vm1597, %v3353, 0
        %v3386 = vsel %vm1597, %v3355, 0
        %v3388 = vsel %vm1597, %v3357, 0
        %v3390 = vsel %vm1597, %v3359, 0
        %v3392 = vsel %vm1597, %v3361, 0
        %3394 = vmatpush.msra.mxu0 0.0
        %3395 = vmatpush.msra.mxu0 0.0
        %3396 = vmatpush.msra.mxu0 0.0
        %3397 = vmatpush.msra.mxu0 0.0
        %3398 = vmatpush.msra.mxu0 0.0
        %3399 = vmatpush.msra.mxu0 0.0
        %3400 = vmatpush.msra.mxu0 0.0
        %3401 = vmatpush.msra.mxu0 0.0
        %3402 = vmatpush.msra.mxu0 0.0
        %3403 = vmatpush.msra.mxu0 0.0
        %3404 = vmatpush.msra.mxu0 0.0
        %3405 = vmatpush.msra.mxu0 0.0
        %3406 = vmatpush.msra.mxu0 %v3311
        %3407 = vmatpush.msra.mxu0 %v3310
        %3408 = vmatpush.msra.mxu0 %v3309
        %3409 = vmatpush.msra.mxu0 %v3308
        %3410 = vmatmul.f32.gmra.mxu0 %v3362
        %v3411 = vpop.f32.mrf.mxu0
        %v3412 = vadd.f32 0.0, %v3411
        %3413 = vmatmul.f32.gmra.mxu0 %v3364
        %v3414 = vpop.f32.mrf.mxu0
        %v3415 = vadd.f32 0.0, %v3414
        %3416 = vmatmul.f32.gmra.mxu0 %v3366
        %v3417 = vpop.f32.mrf.mxu0
        %v3418 = vadd.f32 0.0, %v3417
        %3419 = vmatmul.f32.gmra.mxu0 %v3368
        %v3420 = vpop.f32.mrf.mxu0
        %v3421 = vadd.f32 0.0, %v3420
        %3422 = vmatmul.f32.gmra.mxu0 %v3370
        %v3423 = vpop.f32.mrf.mxu0
        %v3424 = vadd.f32 0.0, %v3423
        %3425 = vmatmul.f32.gmra.mxu0 %v3372
        %v3426 = vpop.f32.mrf.mxu0
        %v3427 = vadd.f32 0.0, %v3426
        %3428 = vmatmul.f32.gmra.mxu0 %v3374
        %v3429 = vpop.f32.mrf.mxu0
        %v3430 = vadd.f32 0.0, %v3429
        %3431 = vmatmul.f32.gmra.mxu0 %v3376
        %v3432 = vpop.f32.mrf.mxu0
        %v3433 = vadd.f32 0.0, %v3432
        %3434 = vmatmul.f32.gmra.mxu0 %v3378
        %v3435 = vpop.f32.mrf.mxu0
        %v3436 = vadd.f32 0.0, %v3435
        %3437 = vmatmul.f32.gmra.mxu0 %v3380
        %v3438 = vpop.f32.mrf.mxu0
        %v3439 = vadd.f32 0.0, %v3438
        %3440 = vmatmul.f32.gmra.mxu0 %v3382
        %v3441 = vpop.f32.mrf.mxu0
        %v3442 = vadd.f32 0.0, %v3441
        %3443 = vmatmul.f32.gmra.mxu0 %v3384
        %v3444 = vpop.f32.mrf.mxu0
        %v3445 = vadd.f32 0.0, %v3444
        %3446 = vmatmul.f32.gmra.mxu0 %v3386
        %v3447 = vpop.f32.mrf.mxu0
        %v3448 = vadd.f32 0.0, %v3447
        %3449 = vmatmul.f32.gmra.mxu0 %v3388
        %v3450 = vpop.f32.mrf.mxu0
        %v3451 = vadd.f32 0.0, %v3450
        %3452 = vmatmul.f32.gmra.mxu0 %v3390
        %v3453 = vpop.f32.mrf.mxu0
        %v3454 = vadd.f32 0.0, %v3453
        %3455 = vmatmul.f32.gmra.mxu0 %v3392
        %v3456 = vpop.f32.mrf.mxu0
        %v3457 = vadd.f32 0.0, %v3456
        %3458 = vdwg.mxu0
        %v3459 = vadd.f32 %v3274, %v3412
        %v3460 = vadd.f32 %v3275, %v3415
        %v3461 = vadd.f32 %v3276, %v3418
        %v3462 = vadd.f32 %v3277, %v3421
        %v3463 = vadd.f32 %v3278, %v3424
        %v3464 = vadd.f32 %v3279, %v3427
        %v3465 = vadd.f32 %v3280, %v3430
        %v3466 = vadd.f32 %v3281, %v3433
        %v3467 = vadd.f32 %v3282, %v3436
        %v3468 = vadd.f32 %v3283, %v3439
        %v3469 = vadd.f32 %v3284, %v3442
        %v3470 = vadd.f32 %v3285, %v3445
        %v3471 = vadd.f32 %v3286, %v3448
        %v3472 = vadd.f32 %v3287, %v3451
        %v3473 = vadd.f32 %v3288, %v3454
        %v3474 = vadd.f32 %v3289, %v3457
        %v3475 = vmul.f32 %v2833, %v1244
        %v3476 = vmul.f32 %v2785, %v1246
        %v3477 = vmul.f32 %v2787, %v1247
        %v3478 = vmul.f32 %v2789, %v1246
        %v3479 = vmul.f32 %v2791, %v1247
        %v3480 = vmul.f32 %v2793, %v1246
        %v3481 = vmul.f32 %v2795, %v1247
        %v3482 = vmul.f32 %v2797, %v1246
        %v3483 = vmul.f32 %v2799, %v1247
        %v3484 = vmul.f32 %v2801, %v1246
        %v3485 = vmul.f32 %v2803, %v1247
        %v3486 = vmul.f32 %v2805, %v1246
        %v3487 = vmul.f32 %v2807, %v1247
        %v3488 = vmul.f32 %v2809, %v1246
        %v3489 = vmul.f32 %v2811, %v1247
        %v3490 = vmul.f32 %v2813, %v1246
        %v3491 = vmul.f32 %v2834, %v1245
        %s3492 = scalar_lea.vmem [#allocation10], 128
        %v3493 = vld [vmem:[%s3492] sm:$0xff]
        %v3494 = vld [vmem:[%s3492 + $0x8] sm:$0xff]
        %v3495 = vld [vmem:[%s3492 + $0x10] sm:$0xff]
        %v3496 = vld [vmem:[%s3492 + $0x18] sm:$0xff]
        %v3514 = vrot.slane %v3475, 4
        %v3515 = vrot.slane %v3476, 4
        %v3516 = vsel %vm1243, %v3514, %v3515
        %v3517 = vrot.slane %v3477, 4
        %v3518 = vsel %vm1243, %v3515, %v3517
        %v3519 = vrot.slane %v3478, 4
        %v3520 = vsel %vm1243, %v3517, %v3519
        %v3521 = vrot.slane %v3479, 4
        %v3522 = vsel %vm1243, %v3519, %v3521
        %v3523 = vrot.slane %v3480, 4
        %v3524 = vsel %vm1243, %v3521, %v3523
        %v3525 = vrot.slane %v3481, 4
        %v3526 = vsel %vm1243, %v3523, %v3525
        %v3527 = vrot.slane %v3482, 4
        %v3528 = vsel %vm1243, %v3525, %v3527
        %v3529 = vrot.slane %v3483, 4
        %v3530 = vsel %vm1243, %v3527, %v3529
        %v3531 = vrot.slane %v3484, 4
        %v3532 = vsel %vm1243, %v3529, %v3531
        %v3533 = vrot.slane %v3485, 4
        %v3534 = vsel %vm1243, %v3531, %v3533
        %v3535 = vrot.slane %v3486, 4
        %v3536 = vsel %vm1243, %v3533, %v3535
        %v3537 = vrot.slane %v3487, 4
        %v3538 = vsel %vm1243, %v3535, %v3537
        %v3539 = vrot.slane %v3488, 4
        %v3540 = vsel %vm1243, %v3537, %v3539
        %v3541 = vrot.slane %v3489, 4
        %v3542 = vsel %vm1243, %v3539, %v3541
        %v3543 = vrot.slane %v3490, 4
        %v3544 = vsel %vm1243, %v3541, %v3543
        %v3545 = vrot.slane %v3491, 4
        %v3546 = vsel %vm1243, %v3543, %v3545
        %v3547 = vsel %vm1597, %v3516, 0
        %v3549 = vsel %vm1597, %v3518, 0
        %v3551 = vsel %vm1597, %v3520, 0
        %v3553 = vsel %vm1597, %v3522, 0
        %v3555 = vsel %vm1597, %v3524, 0
        %v3557 = vsel %vm1597, %v3526, 0
        %v3559 = vsel %vm1597, %v3528, 0
        %v3561 = vsel %vm1597, %v3530, 0
        %v3563 = vsel %vm1597, %v3532, 0
        %v3565 = vsel %vm1597, %v3534, 0
        %v3567 = vsel %vm1597, %v3536, 0
        %v3569 = vsel %vm1597, %v3538, 0
        %v3571 = vsel %vm1597, %v3540, 0
        %v3573 = vsel %vm1597, %v3542, 0
        %v3575 = vsel %vm1597, %v3544, 0
        %v3577 = vsel %vm1597, %v3546, 0
        %3579 = vmatpush.msra.mxu0 0.0
        %3580 = vmatpush.msra.mxu0 0.0
        %3581 = vmatpush.msra.mxu0 0.0
        %3582 = vmatpush.msra.mxu0 0.0
        %3583 = vmatpush.msra.mxu0 0.0
        %3584 = vmatpush.msra.mxu0 0.0
        %3585 = vmatpush.msra.mxu0 0.0
        %3586 = vmatpush.msra.mxu0 0.0
        %3587 = vmatpush.msra.mxu0 0.0
        %3588 = vmatpush.msra.mxu0 0.0
        %3589 = vmatpush.msra.mxu0 0.0
        %3590 = vmatpush.msra.mxu0 0.0
        %3591 = vmatpush.msra.mxu0 %v3496
        %3592 = vmatpush.msra.mxu0 %v3495
        %3593 = vmatpush.msra.mxu0 %v3494
        %3594 = vmatpush.msra.mxu0 %v3493
        %3595 = vmatmul.f32.gmra.mxu0 %v3547
        %v3596 = vpop.f32.mrf.mxu0
        %v3597 = vadd.f32 0.0, %v3596
        %3598 = vmatmul.f32.gmra.mxu0 %v3549
        %v3599 = vpop.f32.mrf.mxu0
        %v3600 = vadd.f32 0.0, %v3599
        %3601 = vmatmul.f32.gmra.mxu0 %v3551
        %v3602 = vpop.f32.mrf.mxu0
        %v3603 = vadd.f32 0.0, %v3602
        %3604 = vmatmul.f32.gmra.mxu0 %v3553
        %v3605 = vpop.f32.mrf.mxu0
        %v3606 = vadd.f32 0.0, %v3605
        %3607 = vmatmul.f32.gmra.mxu0 %v3555
        %v3608 = vpop.f32.mrf.mxu0
        %v3609 = vadd.f32 0.0, %v3608
        %3610 = vmatmul.f32.gmra.mxu0 %v3557
        %v3611 = vpop.f32.mrf.mxu0
        %v3612 = vadd.f32 0.0, %v3611
        %3613 = vmatmul.f32.gmra.mxu0 %v3559
        %v3614 = vpop.f32.mrf.mxu0
        %v3615 = vadd.f32 0.0, %v3614
        %3616 = vmatmul.f32.gmra.mxu0 %v3561
        %v3617 = vpop.f32.mrf.mxu0
        %v3618 = vadd.f32 0.0, %v3617
        %3619 = vmatmul.f32.gmra.mxu0 %v3563
        %v3620 = vpop.f32.mrf.mxu0
        %v3621 = vadd.f32 0.0, %v3620
        %3622 = vmatmul.f32.gmra.mxu0 %v3565
        %v3623 = vpop.f32.mrf.mxu0
        %v3624 = vadd.f32 0.0, %v3623
        %3625 = vmatmul.f32.gmra.mxu0 %v3567
        %v3626 = vpop.f32.mrf.mxu0
        %v3627 = vadd.f32 0.0, %v3626
        %3628 = vmatmul.f32.gmra.mxu0 %v3569
        %v3629 = vpop.f32.mrf.mxu0
        %v3630 = vadd.f32 0.0, %v3629
        %3631 = vmatmul.f32.gmra.mxu0 %v3571
        %v3632 = vpop.f32.mrf.mxu0
        %v3633 = vadd.f32 0.0, %v3632
        %3634 = vmatmul.f32.gmra.mxu0 %v3573
        %v3635 = vpop.f32.mrf.mxu0
        %v3636 = vadd.f32 0.0, %v3635
        %3637 = vmatmul.f32.gmra.mxu0 %v3575
        %v3638 = vpop.f32.mrf.mxu0
        %v3639 = vadd.f32 0.0, %v3638
        %3640 = vmatmul.f32.gmra.mxu0 %v3577
        %v3641 = vpop.f32.mrf.mxu0
        %v3642 = vadd.f32 0.0, %v3641
        %3643 = vdwg.mxu0
        %v3644 = vadd.f32 %v3459, %v3597
        %v3645 = vadd.f32 %v3460, %v3600
        %v3646 = vadd.f32 %v3461, %v3603
        %v3647 = vadd.f32 %v3462, %v3606
        %v3648 = vadd.f32 %v3463, %v3609
        %v3649 = vadd.f32 %v3464, %v3612
        %v3650 = vadd.f32 %v3465, %v3615
        %v3651 = vadd.f32 %v3466, %v3618
        %v3652 = vadd.f32 %v3467, %v3621
        %v3653 = vadd.f32 %v3468, %v3624
        %v3654 = vadd.f32 %v3469, %v3627
        %v3655 = vadd.f32 %v3470, %v3630
        %v3656 = vadd.f32 %v3471, %v3633
        %v3657 = vadd.f32 %v3472, %v3636
        %v3658 = vadd.f32 %v3473, %v3639
        %v3659 = vadd.f32 %v3474, %v3642
        %3676 = vrot.lane.b32.xlu0 %v1423, 64
        %v3677 = vpop.permute.xlu0 %3676
        %3678 = vrot.lane.b32.xlu0 %v1424, 64
        %v3679 = vpop.permute.xlu0 %3678
        %3680 = vrot.lane.b32.xlu0 %v1425, 64
        %v3681 = vpop.permute.xlu0 %3680
        %3682 = vrot.lane.b32.xlu0 %v1426, 64
        %v3683 = vpop.permute.xlu0 %3682
        %3684 = vrot.lane.b32.xlu0 %v1427, 64
        %v3685 = vpop.permute.xlu0 %3684
        %3686 = vrot.lane.b32.xlu0 %v1428, 64
        %v3687 = vpop.permute.xlu0 %3686
        %3688 = vrot.lane.b32.xlu0 %v1429, 64
        %v3689 = vpop.permute.xlu0 %3688
        %3690 = vrot.lane.b32.xlu0 %v1430, 64
        %v3691 = vpop.permute.xlu0 %3690
        %3692 = vrot.lane.b32.xlu0 %v1431, 64
        %v3693 = vpop.permute.xlu0 %3692
        %3694 = vrot.lane.b32.xlu0 %v1432, 64
        %v3695 = vpop.permute.xlu0 %3694
        %3696 = vrot.lane.b32.xlu0 %v1433, 64
        %v3697 = vpop.permute.xlu0 %3696
        %3698 = vrot.lane.b32.xlu0 %v1434, 64
        %v3699 = vpop.permute.xlu0 %3698
        %3700 = vrot.lane.b32.xlu0 %v1435, 64
        %v3701 = vpop.permute.xlu0 %3700
        %3702 = vrot.lane.b32.xlu0 %v1436, 64
        %v3703 = vpop.permute.xlu0 %3702
        %3704 = vrot.lane.b32.xlu0 %v1437, 64
        %v3705 = vpop.permute.xlu0 %3704
        %3706 = vrot.lane.b32.xlu0 %v1438, 64
        %v3707 = vpop.permute.xlu0 %3706
        %v3724 = vadd.f32 %v3644, %v3677
        %v3725 = vadd.f32 %v3645, %v3679
        %v3726 = vadd.f32 %v3646, %v3681
        %v3727 = vadd.f32 %v3647, %v3683
        %v3728 = vadd.f32 %v3648, %v3685
        %v3729 = vadd.f32 %v3649, %v3687
        %v3730 = vadd.f32 %v3650, %v3689
        %v3731 = vadd.f32 %v3651, %v3691
        %v3732 = vadd.f32 %v3652, %v3693
        %v3733 = vadd.f32 %v3653, %v3695
        %v3734 = vadd.f32 %v3654, %v3697
        %v3735 = vadd.f32 %v3655, %v3699
        %v3736 = vadd.f32 %v3656, %v3701
        %v3737 = vadd.f32 %v3657, %v3703
        %v3738 = vadd.f32 %v3658, %v3705
        %v3739 = vadd.f32 %v3659, %v3707
        %v3740 = vld [vmem:[%s6] sm:$0x1]
        %v3742 = vperm.slane %v3740, 0
        %v3744 = vadd.f32 %v3724, %v3742
        %v3745 = vadd.f32 %v3725, %v3742
        %v3746 = vadd.f32 %v3726, %v3742
        %v3747 = vadd.f32 %v3727, %v3742
        %v3748 = vadd.f32 %v3728, %v3742
        %v3749 = vadd.f32 %v3729, %v3742
        %v3750 = vadd.f32 %v3730, %v3742
        %v3751 = vadd.f32 %v3731, %v3742
        %v3752 = vadd.f32 %v3732, %v3742
        %v3753 = vadd.f32 %v3733, %v3742
        %v3754 = vadd.f32 %v3734, %v3742
        %v3755 = vadd.f32 %v3735, %v3742
        %v3756 = vadd.f32 %v3736, %v3742
        %v3757 = vadd.f32 %v3737, %v3742
        %v3758 = vadd.f32 %v3738, %v3742
        %v3759 = vadd.f32 %v3739, %v3742
        %v3760 = vtanh.pop %v3744
        %v3761 = vtanh.pop %v3745
        %v3762 = vtanh.pop %v3746
        %v3763 = vtanh.pop %v3747
        %v3764 = vtanh.pop %v3748
        %v3765 = vtanh.pop %v3749
        %v3766 = vtanh.pop %v3750
        %v3767 = vtanh.pop %v3751
        %v3768 = vtanh.pop %v3752
        %v3769 = vtanh.pop %v3753
        %v3770 = vtanh.pop %v3754
        %v3771 = vtanh.pop %v3755
        %v3772 = vtanh.pop %v3756
        %v3773 = vtanh.pop %v3757
        %v3774 = vtanh.pop %v3758
        %v3775 = vtanh.pop %v3759
        %v3776 = vsub.f32 %v3760, %v417
        %v3777 = vsub.f32 %v3761, %v418
        %v3778 = vsub.f32 %v3762, %v419
        %v3779 = vsub.f32 %v3763, %v420
        %v3780 = vsub.f32 %v3764, %v421
        %v3781 = vsub.f32 %v3765, %v422
        %v3782 = vsub.f32 %v3766, %v423
        %v3783 = vsub.f32 %v3767, %v424
        %v3784 = vsub.f32 %v3768, %v425
        %v3785 = vsub.f32 %v3769, %v426
        %v3786 = vsub.f32 %v3770, %v427
        %v3787 = vsub.f32 %v3771, %v428
        %v3788 = vsub.f32 %v3772, %v429
        %v3789 = vsub.f32 %v3773, %v430
        %v3790 = vsub.f32 %v3774, %v431
        %v3791 = vsub.f32 %v3775, %v432
        %v3792 = vmul.f32 %v2445, %v3776
        %v3793 = vmul.f32 %v2460, %v3777
        %v3794 = vmul.f32 %v2475, %v3778
        %v3795 = vmul.f32 %v2490, %v3779
        %v3796 = vmul.f32 %v2505, %v3780
        %v3797 = vmul.f32 %v2520, %v3781
        %v3798 = vmul.f32 %v2535, %v3782
        %v3799 = vmul.f32 %v2550, %v3783
        %v3800 = vmul.f32 %v2565, %v3784
        %v3801 = vmul.f32 %v2580, %v3785
        %v3802 = vmul.f32 %v2595, %v3786
        %v3803 = vmul.f32 %v2610, %v3787
        %v3804 = vmul.f32 %v2625, %v3788
        %v3805 = vmul.f32 %v2640, %v3789
        %v3806 = vmul.f32 %v2655, %v3790
        %v3807 = vmul.f32 %v2670, %v3791
        %v3808 = vadd.f32 %v417, %v3792
        %v3809 = vadd.f32 %v418, %v3793
        %v3810 = vadd.f32 %v419, %v3794
        %v3811 = vadd.f32 %v420, %v3795
        %v3812 = vadd.f32 %v421, %v3796
        %v3813 = vadd.f32 %v422, %v3797
        %v3814 = vadd.f32 %v423, %v3798
        %v3815 = vadd.f32 %v424, %v3799
        %v3816 = vadd.f32 %v425, %v3800
        %v3817 = vadd.f32 %v426, %v3801
        %v3818 = vadd.f32 %v427, %v3802
        %v3819 = vadd.f32 %v428, %v3803
        %v3820 = vadd.f32 %v429, %v3804
        %v3821 = vadd.f32 %v430, %v3805
        %v3822 = vadd.f32 %v431, %v3806
        %v3823 = vadd.f32 %v432, %v3807
        %3824 = vst.msk [vmem:[%s413] sm:$0xff] %vm1597, %v3808
        %3825 = vst.msk [vmem:[%s413 + $0x8] sm:$0xff] %vm1597, %v3809
        %3826 = vst.msk [vmem:[%s413 + $0x10] sm:$0xff] %vm1597, %v3810
        %3827 = vst.msk [vmem:[%s413 + $0x18] sm:$0xff] %vm1597, %v3811
        %3828 = vst.msk [vmem:[%s413 + $0x20] sm:$0xff] %vm1597, %v3812
        %3829 = vst.msk [vmem:[%s413 + $0x28] sm:$0xff] %vm1597, %v3813
        %3830 = vst.msk [vmem:[%s413 + $0x30] sm:$0xff] %vm1597, %v3814
        %3831 = vst.msk [vmem:[%s413 + $0x38] sm:$0xff] %vm1597, %v3815
        %3832 = vst.msk [vmem:[%s413 + $0x40] sm:$0xff] %vm1597, %v3816
        %3833 = vst.msk [vmem:[%s413 + $0x48] sm:$0xff] %vm1597, %v3817
        %3834 = vst.msk [vmem:[%s413 + $0x50] sm:$0xff] %vm1597, %v3818
        %3835 = vst.msk [vmem:[%s413 + $0x58] sm:$0xff] %vm1597, %v3819
        %3836 = vst.msk [vmem:[%s413 + $0x60] sm:$0xff] %vm1597, %v3820
        %3837 = vst.msk [vmem:[%s413 + $0x68] sm:$0xff] %vm1597, %v3821
        %3838 = vst.msk [vmem:[%s413 + $0x70] sm:$0xff] %vm1597, %v3822
        %3839 = vst.msk [vmem:[%s413 + $0x78] sm:$0xff] %vm1597, %v3823
        %s3840 = sand.u32 %s211, 1
        %s3841 = scalar_lea.sflag [#allocation4], %s3840
        %s3842 = sand.u32 %s211, 1
        %s3843 = smul.addr %s3842, 128
        %s3844 = scalar_lea.vmem [#allocation11], %s3843
        // Predicated region
        $region69: #{tpu_custom_call.1} parent=47 // pred_check
          %p3845 = pneg %p221
        $region70: #{tpu_custom_call.1} parent=47 // pred_check_branch
          %3847 = sbr.rel (%p3845) target = $region72
        $region71: #{tpu_custom_call.1} parent=47 // pred_region
          %s3848 = smul.u32 8, %s33
          %3850 = vsyncadd %s3841, 0
          %s3851 = smul.addr %s3848, 2
          %s3852 = smul.addr %s32, 32
          %s3853 = sadd.s32 %s3851, %s3852
          %s3854 = smul.addr %s3853, 8
          %s3855 = scalar_lea.hbm %s7, %s3854
          %s3856 = sshll.u32 %s3844, 4
          %s3857 = int_to_ptr.vmem [resolvable:$true] %s3856
          %s3858 = sshll.u32 %s3855, 4
          %s3859 = int_to_ptr.hbm [resolvable:$true] %s3858
          %3864 = dma.vmem_to_hbm [thread:$0]  %s3857, 2048, %s3859, %s3841, 128, 128, 8
        $region72: #{tpu_custom_call.1} parent=47 // pred_fallthru
          _
      $region48: #{tpu_custom_call.1} parent=5 // pred_fallthru
        _
      %p3865 = scmp.le.s32.totalorder 2, %s23
      // Predicated region
      $region73: #{tpu_custom_call.1} parent=5 // pred_check
        %p3866 = pneg %p3865
      $region74: #{tpu_custom_call.1} parent=5 // pred_check_branch
        %3868 = sbr.rel (%p3866) target = $region76
      $region75: #{tpu_custom_call.1} parent=5 // pred_region
        %s3869 = ssub.s32 %s23, 2
        // Predicated region
        $region77: #{tpu_custom_call.1} parent=75 // pred_check
          %p3870 = pneg %p227
        $region78: #{tpu_custom_call.1} parent=75 // pred_check_branch
          %3872 = sbr.rel (%p3870) target = $region80
        $region79: #{tpu_custom_call.1} parent=75 // pred_region
          %s3873 = sand.u32 %s212, 1
          %s3874 = scalar_lea.sflag [#allocation4], %s3873
          %s3875 = sand.u32 %s212, 1
          %s3876 = smul.addr %s3875, 128
          %s3877 = scalar_lea.vmem [#allocation11], %s3876
          %3879 = dma.done %s3874, 2048
        $region80: #{tpu_custom_call.1} parent=75 // pred_fallthru
          _
      $region76: #{tpu_custom_call.1} parent=5 // pred_fallthru
        _
    $region6: #{tpu_custom_call.1} parent=1 // loop_footer
      %s27 = sadd.s32 1, %s23
    $region7: #{tpu_custom_call.1} parent=1 // loop_footer_branch
      %22 = sbr.rel target = $region3
    $region8: #{tpu_custom_call.1} parent=1 // loop_exit
      _
    %3880 = vsyncpa [#allocation3], 1
    %s3881 = scalar_lea.sflag [#allocation3], 1
    %3882 = vsyncpa %s3881, 1
    %3883 = vsyncpa [#allocation6], 1
    %s3884 = scalar_lea.sflag [#allocation6], 1
    %3885 = vsyncpa %s3884, 1
    %3886 = vsyncpa [#allocation9], 1
    %3887 = vsyncpa [#allocation4], 1
    %s3888 = scalar_lea.sflag [#allocation4], 1
    %3889 = vsyncpa %s3888, 1

</llo_original>
